<compile_context>
chip_gen: v6e
topology: v6e:2x2x1
jax: 0.10.0
libtpu: 0.0.40
codegen_flags: <defaults>
</compile_context>

<pallas_src>
import functools
import numpy as np
import jax
import jax.numpy as jnp
from jax import lax
from jax.experimental import pallas as pl
from jax.experimental.pallas import tpu as pltpu


# ------------------------------ small helpers -------------------------------

def _round_up(x, m):
    return ((x + m - 1) // m) * m


def _largest_tile(total, target, quantum):
    # largest divisor of `total` that is a multiple of `quantum` and <= target
    best = quantum
    t = quantum
    while t <= min(total, target):
        if total % t == 0:
            best = t
        t += quantum
    return min(best, total)


# ----------------------------- Pallas kernels ------------------------------

def _mm_bias_kernel(x_ref, w_ref, b_ref, o_ref, *, relu):
    # One M-tile of (M, K) @ (K, C) + bias, optional ReLU.  bf16 MXU operands,
    # f32 accumulate, f32 epilogue.
    x = x_ref[...].astype(jnp.bfloat16)
    w = w_ref[...].astype(jnp.bfloat16)
    y = jnp.dot(x, w, preferred_element_type=jnp.float32) + b_ref[...]
    if relu:
        y = jnp.maximum(y, 0.0)
    o_ref[...] = y


def _pool_proj_kernel(x_ref, w_ref, b_ref, o_ref, acc_ref, *, inv_s):
    # AdaptiveAvgPool2d(1) + final 1x1 conv (32 -> 64) of guide_net as a
    # gridded spatial reduction (P3: init / accumulate / finalize).
    t = pl.program_id(1)

    @pl.when(t == 0)
    def _():
        acc_ref[...] = jnp.zeros_like(acc_ref)

    acc_ref[...] += jnp.sum(x_ref[0], axis=0, keepdims=True)        # (1, 32)

    @pl.when(t == pl.num_programs(1) - 1)
    def _():
        m = acc_ref[...] * inv_s                                    # (1, 32) f32
        o_ref[0] = (jnp.dot(m.astype(jnp.bfloat16),
                            w_ref[...].astype(jnp.bfloat16),
                            preferred_element_type=jnp.float32)
                    + b_ref[...])                                   # (1, 64)


def _align_kernel(dem_ref, coord_ref, guide_ref,
                  wh_ref, bh_ref, w1_ref, b1_ref, w2_ref, b2_ref,
                  w3_ref, b3_ref, wt_ref, bt_ref, o_ref):
    # Fused hot path, channels-first:
    #   align_head (1x1 conv + ReLU) -> guide*out + out ->
    #   align_base (3 x [1x1 conv + ReLU]) -> align_tail (1x1 conv) + residual.
    f32 = jnp.float32
    bf16 = jnp.bfloat16

    dem = dem_ref[0]                                   # (3, TM)  f32
    coord = coord_ref[0]                               # (2, TM)  f32

    # align_head (5 -> 64): K is tiny, so do broadcast-FMA on the VPU in f32
    # instead of wasting MXU passes on a K=3/K=2 contraction.
    wh = wh_ref[...]                                   # (64, 5)
    h = bh_ref[...]                                    # (64, 1) -> broadcasts
    for c in range(3):
        h = h + wh[:, c:c + 1] * dem[c:c + 1, :]
    for c in range(2):
        h = h + wh[:, 3 + c:4 + c] * coord[c:c + 1, :]
    h = jnp.maximum(h, 0.0)                            # (64, TM)

    g = guide_ref[0]                                   # (64, 1) per-batch guide
    h = g * h + h

    # align_base 'CRCRCR': three 64x64 1x1 convs on the MXU, bf16 operands /
    # f32 accumulate; elementwise stays f32.
    for w_r, b_r in ((w1_ref, b1_ref), (w2_ref, b2_ref), (w3_ref, b3_ref)):
        h = jnp.dot(w_r[...].astype(bf16), h.astype(bf16),
                    preferred_element_type=f32) + b_r[...]
        h = jnp.maximum(h, 0.0)

    # align_tail (64 -> 3) + demosaic residual.  Output block is (3, TM):
    # lane-dense store (TM multiple of 128).
    y = jnp.dot(wt_ref[...].astype(bf16), h.astype(bf16),
                preferred_element_type=f32) + bt_ref[...]
    o_ref[0] = y + dem


# ------------------------------ JAX wrappers --------------------------------

def _matmul_bias(x, w, b, relu, tile_m=512):
    # Grid-tiled (M, K) @ (K, C) + bias; M padded to the tile and sliced back.
    M, K = x.shape
    C = w.shape[1]
    TM = min(tile_m, _round_up(M, 8))
    Mp = _round_up(M, TM)
    if Mp != M:
        x = jnp.pad(x, ((0, Mp - M), (0, 0)))
    out = pl.pallas_call(
        functools.partial(_mm_bias_kernel, relu=relu),
        out_shape=jax.ShapeDtypeStruct((Mp, C), jnp.float32),
        grid_spec=pltpu.PrefetchScalarGridSpec(
            num_scalar_prefetch=0,
            grid=(Mp // TM,),
            in_specs=[pl.BlockSpec((TM, K), lambda i: (i, 0)),
                      pl.BlockSpec((K, C), lambda i: (0, 0)),
                      pl.BlockSpec((1, C), lambda i: (0, 0))],
            out_specs=pl.BlockSpec((TM, C), lambda i: (i, 0)),
        ),
        compiler_params=pltpu.CompilerParams(
            dimension_semantics=("parallel",),
            vmem_limit_bytes=32 * 1024 * 1024),
    )(x, w, b.reshape(1, C))
    return out[:M]


def _pool_proj(x, w, b, tile_s=2048):
    # x: (N, S, 32) -> mean over S -> @ (32, 64) + b, as a gridded reduction.
    N, S, C = x.shape
    TS = min(tile_s, _round_up(S, 8))
    Sp = _round_up(S, TS)
    if Sp != S:
        x = jnp.pad(x, ((0, 0), (0, Sp - S), (0, 0)))   # zero rows: no-op in sum
    out = pl.pallas_call(
        functools.partial(_pool_proj_kernel, inv_s=1.0 / S),
        out_shape=jax.ShapeDtypeStruct((N, 1, 64), jnp.float32),
        grid_spec=pltpu.PrefetchScalarGridSpec(
            num_scalar_prefetch=0,
            grid=(N, Sp // TS),
            in_specs=[pl.BlockSpec((1, TS, C), lambda bb, t: (bb, t, 0)),
                      pl.BlockSpec((C, 64), lambda bb, t: (0, 0)),
                      pl.BlockSpec((1, 64), lambda bb, t: (0, 0))],
            out_specs=pl.BlockSpec((1, 1, 64), lambda bb, t: (bb, 0, 0)),
            scratch_shapes=[pltpu.VMEM((1, C), jnp.float32)],
        ),
        compiler_params=pltpu.CompilerParams(
            dimension_semantics=("parallel", "arbitrary"),
            vmem_limit_bytes=32 * 1024 * 1024),
    )(x, w, b.reshape(1, 64))
    return out[:, 0, :]                                  # (N, 64)


def _im2col(x, k, stride, pad):
    # Glue: extract conv patches (NHWC).  Feature ordering is (kh, kw, Cin),
    # matching weights stored as (kh, kw, Cin, Cout).
    if pad:
        x = jnp.pad(x, ((0, 0), (pad, pad), (pad, pad), (0, 0)))
    N, H, W, C = x.shape
    Ho = (H - k) // stride + 1
    Wo = (W - k) // stride + 1
    cols = []
    for i in range(k):
        for j in range(k):
            cols.append(x[:, i:i + stride * Ho:stride, j:j + stride * Wo:stride, :])
    p = jnp.stack(cols, axis=3)                          # (N, Ho, Wo, k*k, C)
    return p.reshape(N * Ho * Wo, k * k * C), (N, Ho, Wo)


def gcm_forward(params, demosaic, dslr, coord, *,
                tile_m=2048, guide_tile_m=512, pool_tile=2048):
    # demosaic: (N,3,H,W), dslr: (N,3,H,W), coord: (N,2,H,W)  -- NCHW, f32.
    N, _, H, W = demosaic.shape

    # ---------------- guide_net (im2col glue + tiled Pallas matmuls) ---------
    guide_in = jnp.transpose(jnp.concatenate([demosaic, dslr, coord], axis=1),
                             (0, 2, 3, 1))               # (N, H, W, 8)
    p1, (n, h1, w1) = _im2col(guide_in, 7, 2, 0)
    g = _matmul_bias(p1, params['gw1'].reshape(7 * 7 * 8, 32), params['gb1'],
                     relu=True, tile_m=guide_tile_m)
    g = g.reshape(n, h1, w1, 32)
    p2, _ = _im2col(g, 3, 1, 1)
    g = _matmul_bias(p2, params['gw2'].reshape(3 * 3 * 32, 32), params['gb2'],
                     relu=True, tile_m=guide_tile_m)
    g = g.reshape(n, h1, w1, 32)
    p3, _ = _im2col(g, 3, 1, 1)
    g = _matmul_bias(p3, params['gw3'].reshape(3 * 3 * 32, 32), params['gb3'],
                     relu=False, tile_m=guide_tile_m)
    g = g.reshape(n, h1 * w1, 32)
    guide = _pool_proj(g, params['gw4'], params['gb4'], tile_s=pool_tile)
    guide = guide[:, :, None]                            # (N, 64, 1)

    # ---------------- fused align path (hot path) ----------------------------
    HW = H * W
    HWp = _round_up(HW, 128)
    TM = _largest_tile(HWp, tile_m, 128)                 # multiple of 128
    dem_flat = demosaic.reshape(N, 3, HW)
    coord_flat = coord.reshape(N, 2, HW)
    if HWp != HW:
        dem_flat = jnp.pad(dem_flat, ((0, 0), (0, 0), (0, HWp - HW)))
        coord_flat = jnp.pad(coord_flat, ((0, 0), (0, 0), (0, HWp - HW)))
    num_tiles = HWp // TM

    def wspec(shape):
        return pl.BlockSpec(shape, lambda t, b, _s=shape: (0,) * len(_s))

    out = pl.pallas_call(
        _align_kernel,
        out_shape=jax.ShapeDtypeStruct((N, 3, HWp), jnp.float32),
        grid_spec=pltpu.PrefetchScalarGridSpec(
            num_scalar_prefetch=0,
            grid=(num_tiles, N),                         # big axis first: even
            in_specs=[                                   # split across 2 TCs
                pl.BlockSpec((1, 3, TM), lambda t, b: (b, 0, t)),   # demosaic
                pl.BlockSpec((1, 2, TM), lambda t, b: (b, 0, t)),   # coord
                pl.BlockSpec((1, 64, 1), lambda t, b: (b, 0, 0)),   # guide
                wspec((64, 5)), wspec((64, 1)),                     # align_head
                wspec((64, 64)), wspec((64, 1)),                    # align_base 1
                wspec((64, 64)), wspec((64, 1)),                    # align_base 2
                wspec((64, 64)), wspec((64, 1)),                    # align_base 3
                wspec((3, 64)), wspec((3, 1)),                      # align_tail
            ],
            out_specs=pl.BlockSpec((1, 3, TM), lambda t, b: (b, 0, t)),
        ),
        compiler_params=pltpu.CompilerParams(
            dimension_semantics=("parallel", "parallel"),
            vmem_limit_bytes=32 * 1024 * 1024),
    )(dem_flat, coord_flat, guide,
      params['wh'], params['bh'].reshape(64, 1),
      params['w1'], params['b1'].reshape(64, 1),
      params['w2'], params['b2'].reshape(64, 1),
      params['w3'], params['b3'].reshape(64, 1),
      params['wt'], params['bt'].reshape(3, 1))
    return out[:, :, :HW].reshape(N, 3, H, W)


# ------------------------------ params & reference ---------------------------

def init_params(key):
    def w(k, shape, fan_in):
        return (jax.random.normal(k, shape, jnp.float32)
                / np.sqrt(fan_in)).astype(jnp.float32)

    def b(k, shape):
        return 0.01 * jax.random.normal(k, shape, jnp.float32)

    ks = jax.random.split(key, 18)
    return {
        # guide_net weights in HWIO; align 1x1 weights in PyTorch (Cout, Cin).
        'gw1': w(ks[0], (7, 7, 8, 32), 7 * 7 * 8), 'gb1': b(ks[1], (32,)),
        'gw2': w(ks[2], (3, 3, 32, 32), 3 * 3 * 32), 'gb2': b(ks[3], (32,)),
        'gw3': w(ks[4], (3, 3, 32, 32), 3 * 3 * 32), 'gb3': b(ks[5], (32,)),
        'gw4': w(ks[6], (32, 64), 32), 'gb4': b(ks[7], (64,)),
        'wh': w(ks[8], (64, 5), 5), 'bh': b(ks[9], (64,)),
        'w1': w(ks[10], (64, 64), 64), 'b1': b(ks[11], (64,)),
        'w2': w(ks[12], (64, 64), 64), 'b2': b(ks[13], (64,)),
        'w3': w(ks[14], (64, 64), 64), 'b3': b(ks[15], (64,)),
        'wt': w(ks[16], (3, 64), 64), 'bt': b(ks[17], (3,)),
    }


def ref_forward(params, demosaic, dslr, coord, emulate_bf16=False):
    # Plain-JAX reference (NCHW).  emulate_bf16=True mirrors the kernel's
    # numerics exactly: bf16 MXU operands / f32 accumulate everywhere except
    # the f32 VPU align_head; elementwise math f32.
    f32 = jnp.float32

    def cast(a):
        return a.astype(jnp.bfloat16) if emulate_bf16 else a

    guide_in = jnp.transpose(jnp.concatenate([demosaic, dslr, coord], axis=1),
                             (0, 2, 3, 1))               # NHWC

    def conv(x, w, bias, stride, pad):
        y = lax.conv_general_dilated(
            cast(x), cast(w), (stride, stride), [(pad, pad), (pad, pad)],
            dimension_numbers=('NHWC', 'HWIO', 'NHWC'),
            preferred_element_type=f32,
            precision=lax.Precision.HIGHEST)
        return y + bias

    g = jax.nn.relu(conv(guide_in, params['gw1'], params['gb1'], 2, 0))
    g = jax.nn.relu(conv(g, params['gw2'], params['gb2'], 1, 1))
    g = conv(g, params['gw3'], params['gb3'], 1, 1)
    m = jnp.mean(g, axis=(1, 2))                          # AdaptiveAvgPool2d(1)
    guide = jnp.dot(cast(m), cast(params['gw4']),
                    preferred_element_type=f32,
                    precision=lax.Precision.HIGHEST) + params['gb4']
    guide = guide[:, :, None, None]                       # (N, 64, 1, 1)

    def conv1x1(x, w, bias, use_bf16):
        wc, xc = (cast(w), cast(x)) if use_bf16 else (w, x)
        y = jnp.einsum('oc,nchw->nohw', wc, xc,
                       preferred_element_type=f32,
                       precision=lax.Precision.HIGHEST)
        return y + bias[None, :, None, None]

    base = jnp.concatenate([demosaic, coord], axis=1)     # (N, 5, H, W)
    out = jax.nn.relu(conv1x1(base, params['wh'], params['bh'], use_bf16=False))
    out = guide * out + out
    for wk, bk in (('w1', 'b1'), ('w2', 'b2'), ('w3', 'b3')):
        out = jax.nn.relu(conv1x1(out, params[wk], params[bk],
                                  use_bf16=emulate_bf16))
    out = conv1x1(out, params['wt'], params['bt'], use_bf16=emulate_bf16) + demosaic
    return out


if __name__ == "__main__":
    key = jax.random.PRNGKey(0)
    kp, kd, ks_, kc = jax.random.split(key, 4)
    N, H, W = 2, 16, 16
    params = init_params(kp)
    demosaic = jax.random.normal(kd, (N, 3, H, W), jnp.float32)
    dslr = jax.random.normal(ks_, (N, 3, H, W), jnp.float32)
    coord = jax.random.uniform(kc, (N, 2, H, W), jnp.float32,
                               minval=-1.0, maxval=1.0)

    fwd = jax.jit(gcm_forward)
    out = jax.block_until_ready(fwd(params, demosaic, dslr, coord))

    # (1) exactness vs a reference that emulates the kernel's bf16 numerics
    ref_emu = ref_forward(params, demosaic, dslr, coord, emulate_bf16=True)
    err_emu = float(jnp.max(jnp.abs(out - ref_emu)))
    # (2) fidelity vs the full-f32 HIGHEST-precision model (bf16 truncation band)
    ref_f32 = ref_forward(params, demosaic, dslr, coord, emulate_bf16=False)
    err_f32 = float(jnp.max(jnp.abs(out - ref_f32)))

    if not np.isfinite(err_emu) or err_emu > 1e-2:
        raise AssertionError(
            f"Pallas output mismatch vs bf16-emulating reference: {err_emu}")
    if not np.isfinite(err_f32) or err_f32 > 1.5e-1:
        raise AssertionError(
            f"Pallas output outside bf16 tolerance vs f32 reference: {err_f32}")
    print("KERNEL_OK")
</pallas_src>

<mosaic_0001>
module attributes {stable_mosaic.version = 11 : i64} {
  func.func @_mm_bias_kernel(%arg0: i32, %arg1: memref<56x392xf32, #tpu.memory_space<vmem>>, %arg2: memref<392x32xf32, #tpu.memory_space<vmem>>, %arg3: memref<1x32xf32, #tpu.memory_space<vmem>>, %arg4: memref<56x32xf32, #tpu.memory_space<vmem>>) attributes {dimension_semantics = [#tpu.dimension_semantics<parallel>], iteration_bounds = array<i64: 1>, scalar_prefetch = 0 : i64, scratch_operands = 0 : i64, tpu.core_type = #tpu.core_type<tc>, window_params = [{transform_indices = @transform_0, window_bounds = array<i64: 56, 392>}, {pipeline_mode = #tpu.pipeline_mode<synchronous>, transform_indices = @transform_1, window_bounds = array<i64: 392, 32>}, {pipeline_mode = #tpu.pipeline_mode<synchronous>, transform_indices = @transform_2, window_bounds = array<i64: 1, 32>}, {transform_indices = @transform_3, window_bounds = array<i64: 56, 32>}]} {
    %c0 = arith.constant 0 : index
    %c0_0 = arith.constant 0 : index
    %0 = vector.load %arg1[%c0, %c0_0] : memref<56x392xf32, #tpu.memory_space<vmem>>, vector<56x392xf32>
    %1 = arith.truncf %0 : vector<56x392xf32> to vector<56x392xbf16>
    %c0_1 = arith.constant 0 : index
    %c0_2 = arith.constant 0 : index
    %2 = vector.load %arg2[%c0_1, %c0_2] : memref<392x32xf32, #tpu.memory_space<vmem>>, vector<392x32xf32>
    %3 = arith.truncf %2 : vector<392x32xf32> to vector<392x32xbf16>
    %cst = arith.constant dense<0.000000e+00> : vector<56x32xf32>
    %4 = tpu.matmul %1, %3, %cst {dimension_numbers = #tpu.dot_dimension_numbers<[1], [0], [0], [1], [0, 0, 1, 1], [], []>} : vector<56x392xbf16>, vector<392x32xbf16>, vector<56x32xf32> -> vector<56x32xf32>
    %c0_3 = arith.constant 0 : index
    %c0_4 = arith.constant 0 : index
    %5 = vector.load %arg3[%c0_3, %c0_4] : memref<1x32xf32, #tpu.memory_space<vmem>>, vector<1x32xf32>
    %6 = vector.broadcast %5 : vector<1x32xf32> to vector<56x32xf32>
    %7 = arith.addf %4, %6 : vector<56x32xf32>
    %cst_5 = arith.constant 0.000000e+00 : f32
    %8 = vector.broadcast %cst_5 : f32 to vector<56x32xf32>
    %9 = arith.maximumf %7, %8 : vector<56x32xf32>
    %c0_6 = arith.constant 0 : index
    %c0_7 = arith.constant 0 : index
    %10 = vector.load %arg4[%c0_6, %c0_7] : memref<56x32xf32, #tpu.memory_space<vmem>>, vector<56x32xf32>
    tpu.vector_store %arg4[%c0_6, %c0_7], %9 {strides = array<i32>} : memref<56x32xf32, #tpu.memory_space<vmem>>, vector<56x32xf32>,
    return
  }
  func.func @transform_0(%arg0: i32) -> (i32, i32) {
    %c0_i32 = arith.constant 0 : i32
    %c0_i32_0 = arith.constant 0 : i32
    return %arg0, %c0_i32 : i32, i32
  }
  func.func @transform_1(%arg0: i32) -> (i32, i32) {
    %c0_i32 = arith.constant 0 : i32
    %c0_i32_0 = arith.constant 0 : i32
    %c0_i32_1 = arith.constant 0 : i32
    return %c0_i32, %c0_i32_0 : i32, i32
  }
  func.func @transform_2(%arg0: i32) -> (i32, i32) {
    %c0_i32 = arith.constant 0 : i32
    %c0_i32_0 = arith.constant 0 : i32
    %c0_i32_1 = arith.constant 0 : i32
    return %c0_i32, %c0_i32_0 : i32, i32
  }
  func.func @transform_3(%arg0: i32) -> (i32, i32) {
    %c0_i32 = arith.constant 0 : i32
    %c0_i32_0 = arith.constant 0 : i32
    return %arg0, %c0_i32 : i32, i32
  }
}

module attributes {stable_mosaic.version = 11 : i64} {
  func.func @_mm_bias_kernel(%arg0: i32, %arg1: memref<56x288xf32, #tpu.memory_space<vmem>>, %arg2: memref<288x32xf32, #tpu.memory_space<vmem>>, %arg3: memref<1x32xf32, #tpu.memory_space<vmem>>, %arg4: memref<56x32xf32, #tpu.memory_space<vmem>>) attributes {dimension_semantics = [#tpu.dimension_semantics<parallel>], iteration_bounds = array<i64: 1>, scalar_prefetch = 0 : i64, scratch_operands = 0 : i64, tpu.core_type = #tpu.core_type<tc>, window_params = [{transform_indices = @transform_0, window_bounds = array<i64: 56, 288>}, {pipeline_mode = #tpu.pipeline_mode<synchronous>, transform_indices = @transform_1, window_bounds = array<i64: 288, 32>}, {pipeline_mode = #tpu.pipeline_mode<synchronous>, transform_indices = @transform_2, window_bounds = array<i64: 1, 32>}, {transform_indices = @transform_3, window_bounds = array<i64: 56, 32>}]} {
    %c0 = arith.constant 0 : index
    %c0_0 = arith.constant 0 : index
    %0 = vector.load %arg1[%c0, %c0_0] : memref<56x288xf32, #tpu.memory_space<vmem>>, vector<56x288xf32>
    %1 = arith.truncf %0 : vector<56x288xf32> to vector<56x288xbf16>
    %c0_1 = arith.constant 0 : index
    %c0_2 = arith.constant 0 : index
    %2 = vector.load %arg2[%c0_1, %c0_2] : memref<288x32xf32, #tpu.memory_space<vmem>>, vector<288x32xf32>
    %3 = arith.truncf %2 : vector<288x32xf32> to vector<288x32xbf16>
    %cst = arith.constant dense<0.000000e+00> : vector<56x32xf32>
    %4 = tpu.matmul %1, %3, %cst {dimension_numbers = #tpu.dot_dimension_numbers<[1], [0], [0], [1], [0, 0, 1, 1], [], []>} : vector<56x288xbf16>, vector<288x32xbf16>, vector<56x32xf32> -> vector<56x32xf32>
    %c0_3 = arith.constant 0 : index
    %c0_4 = arith.constant 0 : index
    %5 = vector.load %arg3[%c0_3, %c0_4] : memref<1x32xf32, #tpu.memory_space<vmem>>, vector<1x32xf32>
    %6 = vector.broadcast %5 : vector<1x32xf32> to vector<56x32xf32>
    %7 = arith.addf %4, %6 : vector<56x32xf32>
    %c0_5 = arith.constant 0 : index
    %c0_6 = arith.constant 0 : index
    %8 = vector.load %arg4[%c0_5, %c0_6] : memref<56x32xf32, #tpu.memory_space<vmem>>, vector<56x32xf32>
    tpu.vector_store %arg4[%c0_5, %c0_6], %7 {strides = array<i32>} : memref<56x32xf32, #tpu.memory_space<vmem>>, vector<56x32xf32>,
    return
  }
  func.func @transform_0(%arg0: i32) -> (i32, i32) {
    %c0_i32 = arith.constant 0 : i32
    %c0_i32_0 = arith.constant 0 : i32
    return %arg0, %c0_i32 : i32, i32
  }
  func.func @transform_1(%arg0: i32) -> (i32, i32) {
    %c0_i32 = arith.constant 0 : i32
    %c0_i32_0 = arith.constant 0 : i32
    %c0_i32_1 = arith.constant 0 : i32
    return %c0_i32, %c0_i32_0 : i32, i32
  }
  func.func @transform_2(%arg0: i32) -> (i32, i32) {
    %c0_i32 = arith.constant 0 : i32
    %c0_i32_0 = arith.constant 0 : i32
    %c0_i32_1 = arith.constant 0 : i32
    return %c0_i32, %c0_i32_0 : i32, i32
  }
  func.func @transform_3(%arg0: i32) -> (i32, i32) {
    %c0_i32 = arith.constant 0 : i32
    %c0_i32_0 = arith.constant 0 : i32
    return %arg0, %c0_i32 : i32, i32
  }
}

module attributes {stable_mosaic.version = 11 : i64} {
  func.func @_mm_bias_kernel(%arg0: i32, %arg1: memref<56x288xf32, #tpu.memory_space<vmem>>, %arg2: memref<288x32xf32, #tpu.memory_space<vmem>>, %arg3: memref<1x32xf32, #tpu.memory_space<vmem>>, %arg4: memref<56x32xf32, #tpu.memory_space<vmem>>) attributes {dimension_semantics = [#tpu.dimension_semantics<parallel>], iteration_bounds = array<i64: 1>, scalar_prefetch = 0 : i64, scratch_operands = 0 : i64, tpu.core_type = #tpu.core_type<tc>, window_params = [{transform_indices = @transform_0, window_bounds = array<i64: 56, 288>}, {pipeline_mode = #tpu.pipeline_mode<synchronous>, transform_indices = @transform_1, window_bounds = array<i64: 288, 32>}, {pipeline_mode = #tpu.pipeline_mode<synchronous>, transform_indices = @transform_2, window_bounds = array<i64: 1, 32>}, {transform_indices = @transform_3, window_bounds = array<i64: 56, 32>}]} {
    %c0 = arith.constant 0 : index
    %c0_0 = arith.constant 0 : index
    %0 = vector.load %arg1[%c0, %c0_0] : memref<56x288xf32, #tpu.memory_space<vmem>>, vector<56x288xf32>
    %1 = arith.truncf %0 : vector<56x288xf32> to vector<56x288xbf16>
    %c0_1 = arith.constant 0 : index
    %c0_2 = arith.constant 0 : index
    %2 = vector.load %arg2[%c0_1, %c0_2] : memref<288x32xf32, #tpu.memory_space<vmem>>, vector<288x32xf32>
    %3 = arith.truncf %2 : vector<288x32xf32> to vector<288x32xbf16>
    %cst = arith.constant dense<0.000000e+00> : vector<56x32xf32>
    %4 = tpu.matmul %1, %3, %cst {dimension_numbers = #tpu.dot_dimension_numbers<[1], [0], [0], [1], [0, 0, 1, 1], [], []>} : vector<56x288xbf16>, vector<288x32xbf16>, vector<56x32xf32> -> vector<56x32xf32>
    %c0_3 = arith.constant 0 : index
    %c0_4 = arith.constant 0 : index
    %5 = vector.load %arg3[%c0_3, %c0_4] : memref<1x32xf32, #tpu.memory_space<vmem>>, vector<1x32xf32>
    %6 = vector.broadcast %5 : vector<1x32xf32> to vector<56x32xf32>
    %7 = arith.addf %4, %6 : vector<56x32xf32>
    %cst_5 = arith.constant 0.000000e+00 : f32
    %8 = vector.broadcast %cst_5 : f32 to vector<56x32xf32>
    %9 = arith.maximumf %7, %8 : vector<56x32xf32>
    %c0_6 = arith.constant 0 : index
    %c0_7 = arith.constant 0 : index
    %10 = vector.load %arg4[%c0_6, %c0_7] : memref<56x32xf32, #tpu.memory_space<vmem>>, vector<56x32xf32>
    tpu.vector_store %arg4[%c0_6, %c0_7], %9 {strides = array<i32>} : memref<56x32xf32, #tpu.memory_space<vmem>>, vector<56x32xf32>,
    return
  }
  func.func @transform_0(%arg0: i32) -> (i32, i32) {
    %c0_i32 = arith.constant 0 : i32
    %c0_i32_0 = arith.constant 0 : i32
    return %arg0, %c0_i32 : i32, i32
  }
  func.func @transform_1(%arg0: i32) -> (i32, i32) {
    %c0_i32 = arith.constant 0 : i32
    %c0_i32_0 = arith.constant 0 : i32
    %c0_i32_1 = arith.constant 0 : i32
    return %c0_i32, %c0_i32_0 : i32, i32
  }
  func.func @transform_2(%arg0: i32) -> (i32, i32) {
    %c0_i32 = arith.constant 0 : i32
    %c0_i32_0 = arith.constant 0 : i32
    %c0_i32_1 = arith.constant 0 : i32
    return %c0_i32, %c0_i32_0 : i32, i32
  }
  func.func @transform_3(%arg0: i32) -> (i32, i32) {
    %c0_i32 = arith.constant 0 : i32
    %c0_i32_0 = arith.constant 0 : i32
    return %arg0, %c0_i32 : i32, i32
  }
}

module attributes {stable_mosaic.version = 11 : i64} {
  func.func @_pool_proj_kernel(%arg0: i32, %arg1: i32, %arg2: memref<1x32x32xf32, #tpu.memory_space<vmem>>, %arg3: memref<32x64xf32, #tpu.memory_space<vmem>>, %arg4: memref<1x64xf32, #tpu.memory_space<vmem>>, %arg5: memref<1x1x64xf32, #tpu.memory_space<vmem>>, %arg6: memref<1x32xf32, #tpu.memory_space<vmem>>) attributes {dimension_semantics = [#tpu.dimension_semantics<parallel>, #tpu.dimension_semantics<arbitrary>], iteration_bounds = array<i64: 2, 1>, scalar_prefetch = 0 : i64, scratch_operands = 1 : i64, tpu.core_type = #tpu.core_type<tc>, window_params = [{transform_indices = @transform_0, window_bounds = array<i64: 1, 32, 32>}, {pipeline_mode = #tpu.pipeline_mode<synchronous>, transform_indices = @transform_1, window_bounds = array<i64: 32, 64>}, {pipeline_mode = #tpu.pipeline_mode<synchronous>, transform_indices = @transform_2, window_bounds = array<i64: 1, 64>}, {transform_indices = @transform_3, window_bounds = array<i64: 1, 1, 64>}]} {
    %c0_i32 = arith.constant 0 : i32
    %0 = arith.cmpi eq, %arg1, %c0_i32 : i32
    %1 = arith.extui %0 : i1 to i32
    %c0_i32_0 = arith.constant 0 : i32
    %2 = arith.cmpi ne, %1, %c0_i32_0 : i32
    scf.if %2 {
      %cst_9 = arith.constant 0.000000e+00 : f32
      %13 = vector.broadcast %cst_9 : f32 to vector<1x32xf32>
      %c0_10 = arith.constant 0 : index
      %c0_11 = arith.constant 0 : index
      %14 = vector.load %arg6[%c0_10, %c0_11] : memref<1x32xf32, #tpu.memory_space<vmem>>, vector<1x32xf32>
      tpu.vector_store %arg6[%c0_10, %c0_11], %13 {strides = array<i32>} : memref<1x32xf32, #tpu.memory_space<vmem>>, vector<1x32xf32>,
    } else {
    }
    %c0 = arith.constant 0 : index
    %c0_1 = arith.constant 0 : index
    %3 = vector.load %arg6[%c0, %c0_1] : memref<1x32xf32, #tpu.memory_space<vmem>>, vector<1x32xf32>
    %c0_2 = arith.constant 0 : index
    %c0_3 = arith.constant 0 : index
    %c0_4 = arith.constant 0 : index
    %4 = vector.load %arg2[%c0_2, %c0_3, %c0_4] : memref<1x32x32xf32, #tpu.memory_space<vmem>>, vector<1x32x32xf32>
    %5 = vector.shape_cast %4 : vector<1x32x32xf32> to vector<32x32xf32>
    %cst = arith.constant dense<0.000000e+00> : vector<32xf32>
    %6 = vector.multi_reduction <add>, %5, %cst [0] : vector<32x32xf32> to vector<32xf32>
    %7 = vector.shape_cast %6 : vector<32xf32> to vector<1x32xf32>
    %8 = arith.addf %3, %7 : vector<1x32xf32>
    %c0_5 = arith.constant 0 : index
    %c0_6 = arith.constant 0 : index
    %9 = vector.load %arg6[%c0_5, %c0_6] : memref<1x32xf32, #tpu.memory_space<vmem>>, vector<1x32xf32>
    tpu.vector_store %arg6[%c0_5, %c0_6], %8 {strides = array<i32>} : memref<1x32xf32, #tpu.memory_space<vmem>>, vector<1x32xf32>,
    %c0_i32_7 = arith.constant 0 : i32
    %10 = arith.cmpi eq, %arg1, %c0_i32_7 : i32
    %11 = arith.extui %10 : i1 to i32
    %c0_i32_8 = arith.constant 0 : i32
    %12 = arith.cmpi ne, %11, %c0_i32_8 : i32
    scf.if %12 {
      %c0_9 = arith.constant 0 : index
      %c0_10 = arith.constant 0 : index
      %13 = vector.load %arg6[%c0_9, %c0_10] : memref<1x32xf32, #tpu.memory_space<vmem>>, vector<1x32xf32>
      %cst_11 = arith.constant 4.000000e-02 : f32
      %14 = vector.broadcast %cst_11 : f32 to vector<1x32xf32>
      %15 = arith.mulf %13, %14 : vector<1x32xf32>
      %16 = arith.truncf %15 : vector<1x32xf32> to vector<1x32xbf16>
      %c0_12 = arith.constant 0 : index
      %c0_13 = arith.constant 0 : index
      %17 = vector.load %arg3[%c0_12, %c0_13] : memref<32x64xf32, #tpu.memory_space<vmem>>, vector<32x64xf32>
      %18 = arith.truncf %17 : vector<32x64xf32> to vector<32x64xbf16>
      %cst_14 = arith.constant dense<0.000000e+00> : vector<1x64xf32>
      %19 = tpu.matmul %16, %18, %cst_14 {dimension_numbers = #tpu.dot_dimension_numbers<[1], [0], [0], [1], [0, 0, 1, 1], [], []>} : vector<1x32xbf16>, vector<32x64xbf16>, vector<1x64xf32> -> vector<1x64xf32>
      %c0_15 = arith.constant 0 : index
      %c0_16 = arith.constant 0 : index
      %20 = vector.load %arg4[%c0_15, %c0_16] : memref<1x64xf32, #tpu.memory_space<vmem>>, vector<1x64xf32>
      %21 = arith.addf %19, %20 : vector<1x64xf32>
      %c0_17 = arith.constant 0 : index
      %c0_18 = arith.constant 0 : index
      %c0_19 = arith.constant 0 : index
      %22 = vector.load %arg5[%c0_17, %c0_18, %c0_19] : memref<1x1x64xf32, #tpu.memory_space<vmem>>, vector<1x1x64xf32>
      %23 = vector.shape_cast %22 : vector<1x1x64xf32> to vector<1x64xf32>
      %24 = vector.shape_cast %21 : vector<1x64xf32> to vector<1x1x64xf32>
      tpu.vector_store %arg5[%c0_17, %c0_18, %c0_19], %24 {strides = array<i32>} : memref<1x1x64xf32, #tpu.memory_space<vmem>>, vector<1x1x64xf32>,
    } else {
    }
    return
  }
  func.func @transform_0(%arg0: i32, %arg1: i32) -> (i32, i32, i32) {
    %c0_i32 = arith.constant 0 : i32
    %c0_i32_0 = arith.constant 0 : i32
    return %arg0, %arg1, %c0_i32 : i32, i32, i32
  }
  func.func @transform_1(%arg0: i32, %arg1: i32) -> (i32, i32) {
    %c0_i32 = arith.constant 0 : i32
    %c0_i32_0 = arith.constant 0 : i32
    %c0_i32_1 = arith.constant 0 : i32
    return %c0_i32, %c0_i32_0 : i32, i32
  }
  func.func @transform_2(%arg0: i32, %arg1: i32) -> (i32, i32) {
    %c0_i32 = arith.constant 0 : i32
    %c0_i32_0 = arith.constant 0 : i32
    %c0_i32_1 = arith.constant 0 : i32
    return %c0_i32, %c0_i32_0 : i32, i32
  }
  func.func @transform_3(%arg0: i32, %arg1: i32) -> (i32, i32, i32) {
    %c0_i32 = arith.constant 0 : i32
    %c0_i32_0 = arith.constant 0 : i32
    %c0_i32_1 = arith.constant 0 : i32
    return %arg0, %c0_i32, %c0_i32_0 : i32, i32, i32
  }
}

module attributes {stable_mosaic.version = 11 : i64} {
  func.func @_align_kernel(%arg0: i32, %arg1: i32, %arg2: memref<1x3x256xf32, #tpu.memory_space<vmem>>, %arg3: memref<1x2x256xf32, #tpu.memory_space<vmem>>, %arg4: memref<1x64x1xf32, #tpu.memory_space<vmem>>, %arg5: memref<64x5xf32, #tpu.memory_space<vmem>>, %arg6: memref<64x1xf32, #tpu.memory_space<vmem>>, %arg7: memref<64x64xf32, #tpu.memory_space<vmem>>, %arg8: memref<64x1xf32, #tpu.memory_space<vmem>>, %arg9: memref<64x64xf32, #tpu.memory_space<vmem>>, %arg10: memref<64x1xf32, #tpu.memory_space<vmem>>, %arg11: memref<64x64xf32, #tpu.memory_space<vmem>>, %arg12: memref<64x1xf32, #tpu.memory_space<vmem>>, %arg13: memref<3x64xf32, #tpu.memory_space<vmem>>, %arg14: memref<3x1xf32, #tpu.memory_space<vmem>>, %arg15: memref<1x3x256xf32, #tpu.memory_space<vmem>>) attributes {dimension_semantics = [#tpu.dimension_semantics<parallel>, #tpu.dimension_semantics<parallel>], iteration_bounds = array<i64: 1, 2>, scalar_prefetch = 0 : i64, scratch_operands = 0 : i64, tpu.core_type = #tpu.core_type<tc>, window_params = [{transform_indices = @transform_0, window_bounds = array<i64: 1, 3, 256>}, {transform_indices = @transform_1, window_bounds = array<i64: 1, 2, 256>}, {transform_indices = @transform_2, window_bounds = array<i64: 1, 64, 1>}, {pipeline_mode = #tpu.pipeline_mode<synchronous>, transform_indices = @transform_3, window_bounds = array<i64: 64, 5>}, {pipeline_mode = #tpu.pipeline_mode<synchronous>, transform_indices = @transform_4, window_bounds = array<i64: 64, 1>}, {pipeline_mode = #tpu.pipeline_mode<synchronous>, transform_indices = @transform_5, window_bounds = array<i64: 64, 64>}, {pipeline_mode = #tpu.pipeline_mode<synchronous>, transform_indices = @transform_6, window_bounds = array<i64: 64, 1>}, {pipeline_mode = #tpu.pipeline_mode<synchronous>, transform_indices = @transform_7, window_bounds = array<i64: 64, 64>}, {pipeline_mode = #tpu.pipeline_mode<synchronous>, transform_indices = @transform_8, window_bounds = array<i64: 64, 1>}, {pipeline_mode = #tpu.pipeline_mode<synchronous>, transform_indices = @transform_9, window_bounds = array<i64: 64, 64>}, {pipeline_mode = #tpu.pipeline_mode<synchronous>, transform_indices = @transform_10, window_bounds = array<i64: 64, 1>}, {pipeline_mode = #tpu.pipeline_mode<synchronous>, transform_indices = @transform_11, window_bounds = array<i64: 3, 64>}, {pipeline_mode = #tpu.pipeline_mode<synchronous>, transform_indices = @transform_12, window_bounds = array<i64: 3, 1>}, {transform_indices = @transform_13, window_bounds = array<i64: 1, 3, 256>}]} {
    %c0 = arith.constant 0 : index
    %c0_0 = arith.constant 0 : index
    %c0_1 = arith.constant 0 : index
    %0 = vector.load %arg2[%c0, %c0_0, %c0_1] : memref<1x3x256xf32, #tpu.memory_space<vmem>>, vector<1x3x256xf32>
    %1 = vector.shape_cast %0 : vector<1x3x256xf32> to vector<3x256xf32>
    %c0_2 = arith.constant 0 : index
    %c0_3 = arith.constant 0 : index
    %c0_4 = arith.constant 0 : index
    %2 = vector.load %arg3[%c0_2, %c0_3, %c0_4] : memref<1x2x256xf32, #tpu.memory_space<vmem>>, vector<1x2x256xf32>
    %3 = vector.shape_cast %2 : vector<1x2x256xf32> to vector<2x256xf32>
    %c0_5 = arith.constant 0 : index
    %c0_6 = arith.constant 0 : index
    %4 = vector.load %arg5[%c0_5, %c0_6] : memref<64x5xf32, #tpu.memory_space<vmem>>, vector<64x5xf32>
    %c0_7 = arith.constant 0 : index
    %c0_8 = arith.constant 0 : index
    %5 = vector.load %arg6[%c0_7, %c0_8] : memref<64x1xf32, #tpu.memory_space<vmem>>, vector<64x1xf32>
    %6 = vector.extract_strided_slice %4 {offsets = [0, 0], sizes = [64, 1], strides = [1, 1]} : vector<64x5xf32> to vector<64x1xf32>
    %7 = vector.extract_strided_slice %1 {offsets = [0, 0], sizes = [1, 256], strides = [1, 1]} : vector<3x256xf32> to vector<1x256xf32>
    %8 = vector.broadcast %6 : vector<64x1xf32> to vector<64x256xf32>
    %9 = vector.broadcast %7 : vector<1x256xf32> to vector<64x256xf32>
    %10 = arith.mulf %8, %9 : vector<64x256xf32>
    %11 = vector.broadcast %5 : vector<64x1xf32> to vector<64x256xf32>
    %12 = arith.addf %11, %10 : vector<64x256xf32>
    %13 = vector.extract_strided_slice %4 {offsets = [0, 1], sizes = [64, 1], strides = [1, 1]} : vector<64x5xf32> to vector<64x1xf32>
    %14 = vector.extract_strided_slice %1 {offsets = [1, 0], sizes = [1, 256], strides = [1, 1]} : vector<3x256xf32> to vector<1x256xf32>
    %15 = vector.broadcast %13 : vector<64x1xf32> to vector<64x256xf32>
    %16 = vector.broadcast %14 : vector<1x256xf32> to vector<64x256xf32>
    %17 = arith.mulf %15, %16 : vector<64x256xf32>
    %18 = arith.addf %12, %17 : vector<64x256xf32>
    %19 = vector.extract_strided_slice %4 {offsets = [0, 2], sizes = [64, 1], strides = [1, 1]} : vector<64x5xf32> to vector<64x1xf32>
    %20 = vector.extract_strided_slice %1 {offsets = [2, 0], sizes = [1, 256], strides = [1, 1]} : vector<3x256xf32> to vector<1x256xf32>
    %21 = vector.broadcast %19 : vector<64x1xf32> to vector<64x256xf32>
    %22 = vector.broadcast %20 : vector<1x256xf32> to vector<64x256xf32>
    %23 = arith.mulf %21, %22 : vector<64x256xf32>
    %24 = arith.addf %18, %23 : vector<64x256xf32>
    %25 = vector.extract_strided_slice %4 {offsets = [0, 3], sizes = [64, 1], strides = [1, 1]} : vector<64x5xf32> to vector<64x1xf32>
    %26 = vector.extract_strided_slice %3 {offsets = [0, 0], sizes = [1, 256], strides = [1, 1]} : vector<2x256xf32> to vector<1x256xf32>
    %27 = vector.broadcast %25 : vector<64x1xf32> to vector<64x256xf32>
    %28 = vector.broadcast %26 : vector<1x256xf32> to vector<64x256xf32>
    %29 = arith.mulf %27, %28 : vector<64x256xf32>
    %30 = arith.addf %24, %29 : vector<64x256xf32>
    %31 = vector.extract_strided_slice %4 {offsets = [0, 4], sizes = [64, 1], strides = [1, 1]} : vector<64x5xf32> to vector<64x1xf32>
    %32 = vector.extract_strided_slice %3 {offsets = [1, 0], sizes = [1, 256], strides = [1, 1]} : vector<2x256xf32> to vector<1x256xf32>
    %33 = vector.broadcast %31 : vector<64x1xf32> to vector<64x256xf32>
    %34 = vector.broadcast %32 : vector<1x256xf32> to vector<64x256xf32>
    %35 = arith.mulf %33, %34 : vector<64x256xf32>
    %36 = arith.addf %30, %35 : vector<64x256xf32>
    %cst = arith.constant 0.000000e+00 : f32
    %37 = vector.broadcast %cst : f32 to vector<64x256xf32>
    %38 = arith.maximumf %36, %37 : vector<64x256xf32>
    %c0_9 = arith.constant 0 : index
    %c0_10 = arith.constant 0 : index
    %c0_11 = arith.constant 0 : index
    %39 = vector.load %arg4[%c0_9, %c0_10, %c0_11] : memref<1x64x1xf32, #tpu.memory_space<vmem>>, vector<1x64x1xf32>
    %40 = vector.shape_cast %39 : vector<1x64x1xf32> to vector<64x1xf32>
    %41 = vector.broadcast %40 : vector<64x1xf32> to vector<64x256xf32>
    %42 = arith.mulf %41, %38 : vector<64x256xf32>
    %43 = arith.addf %42, %38 : vector<64x256xf32>
    %c0_12 = arith.constant 0 : index
    %c0_13 = arith.constant 0 : index
    %44 = vector.load %arg7[%c0_12, %c0_13] : memref<64x64xf32, #tpu.memory_space<vmem>>, vector<64x64xf32>
    %45 = arith.truncf %44 : vector<64x64xf32> to vector<64x64xbf16>
    %46 = arith.truncf %43 : vector<64x256xf32> to vector<64x256xbf16>
    %cst_14 = arith.constant dense<0.000000e+00> : vector<64x256xf32>
    %47 = tpu.matmul %45, %46, %cst_14 {dimension_numbers = #tpu.dot_dimension_numbers<[1], [0], [0], [1], [0, 0, 1, 1], [], []>} : vector<64x64xbf16>, vector<64x256xbf16>, vector<64x256xf32> -> vector<64x256xf32>
    %c0_15 = arith.constant 0 : index
    %c0_16 = arith.constant 0 : index
    %48 = vector.load %arg8[%c0_15, %c0_16] : memref<64x1xf32, #tpu.memory_space<vmem>>, vector<64x1xf32>
    %49 = vector.broadcast %48 : vector<64x1xf32> to vector<64x256xf32>
    %50 = arith.addf %47, %49 : vector<64x256xf32>
    %cst_17 = arith.constant 0.000000e+00 : f32
    %51 = vector.broadcast %cst_17 : f32 to vector<64x256xf32>
    %52 = arith.maximumf %50, %51 : vector<64x256xf32>
    %c0_18 = arith.constant 0 : index
    %c0_19 = arith.constant 0 : index
    %53 = vector.load %arg9[%c0_18, %c0_19] : memref<64x64xf32, #tpu.memory_space<vmem>>, vector<64x64xf32>
    %54 = arith.truncf %53 : vector<64x64xf32> to vector<64x64xbf16>
    %55 = arith.truncf %52 : vector<64x256xf32> to vector<64x256xbf16>
    %cst_20 = arith.constant dense<0.000000e+00> : vector<64x256xf32>
    %56 = tpu.matmul %54, %55, %cst_20 {dimension_numbers = #tpu.dot_dimension_numbers<[1], [0], [0], [1], [0, 0, 1, 1], [], []>} : vector<64x64xbf16>, vector<64x256xbf16>, vector<64x256xf32> -> vector<64x256xf32>
    %c0_21 = arith.constant 0 : index
    %c0_22 = arith.constant 0 : index
    %57 = vector.load %arg10[%c0_21, %c0_22] : memref<64x1xf32, #tpu.memory_space<vmem>>, vector<64x1xf32>
    %58 = vector.broadcast %57 : vector<64x1xf32> to vector<64x256xf32>
    %59 = arith.addf %56, %58 : vector<64x256xf32>
    %cst_23 = arith.constant 0.000000e+00 : f32
    %60 = vector.broadcast %cst_23 : f32 to vector<64x256xf32>
    %61 = arith.maximumf %59, %60 : vector<64x256xf32>
    %c0_24 = arith.constant 0 : index
    %c0_25 = arith.constant 0 : index
    %62 = vector.load %arg11[%c0_24, %c0_25] : memref<64x64xf32, #tpu.memory_space<vmem>>, vector<64x64xf32>
    %63 = arith.truncf %62 : vector<64x64xf32> to vector<64x64xbf16>
    %64 = arith.truncf %61 : vector<64x256xf32> to vector<64x256xbf16>
    %cst_26 = arith.constant dense<0.000000e+00> : vector<64x256xf32>
    %65 = tpu.matmul %63, %64, %cst_26 {dimension_numbers = #tpu.dot_dimension_numbers<[1], [0], [0], [1], [0, 0, 1, 1], [], []>} : vector<64x64xbf16>, vector<64x256xbf16>, vector<64x256xf32> -> vector<64x256xf32>
    %c0_27 = arith.constant 0 : index
    %c0_28 = arith.constant 0 : index
    %66 = vector.load %arg12[%c0_27, %c0_28] : memref<64x1xf32, #tpu.memory_space<vmem>>, vector<64x1xf32>
    %67 = vector.broadcast %66 : vector<64x1xf32> to vector<64x256xf32>
    %68 = arith.addf %65, %67 : vector<64x256xf32>
    %cst_29 = arith.constant 0.000000e+00 : f32
    %69 = vector.broadcast %cst_29 : f32 to vector<64x256xf32>
    %70 = arith.maximumf %68, %69 : vector<64x256xf32>
    %c0_30 = arith.constant 0 : index
    %c0_31 = arith.constant 0 : index
    %71 = vector.load %arg13[%c0_30, %c0_31] : memref<3x64xf32, #tpu.memory_space<vmem>>, vector<3x64xf32>
    %72 = arith.truncf %71 : vector<3x64xf32> to vector<3x64xbf16>
    %73 = arith.truncf %70 : vector<64x256xf32> to vector<64x256xbf16>
    %cst_32 = arith.constant dense<0.000000e+00> : vector<3x256xf32>
    %74 = tpu.matmul %72, %73, %cst_32 {dimension_numbers = #tpu.dot_dimension_numbers<[1], [0], [0], [1], [0, 0, 1, 1], [], []>} : vector<3x64xbf16>, vector<64x256xbf16>, vector<3x256xf32> -> vector<3x256xf32>
    %c0_33 = arith.constant 0 : index
    %c0_34 = arith.constant 0 : index
    %75 = vector.load %arg14[%c0_33, %c0_34] : memref<3x1xf32, #tpu.memory_space<vmem>>, vector<3x1xf32>
    %76 = vector.broadcast %75 : vector<3x1xf32> to vector<3x256xf32>
    %77 = arith.addf %74, %76 : vector<3x256xf32>
    %78 = arith.addf %77, %1 : vector<3x256xf32>
    %c0_35 = arith.constant 0 : index
    %c0_36 = arith.constant 0 : index
    %c0_37 = arith.constant 0 : index
    %79 = vector.load %arg15[%c0_35, %c0_36, %c0_37] : memref<1x3x256xf32, #tpu.memory_space<vmem>>, vector<1x3x256xf32>
    %80 = vector.shape_cast %79 : vector<1x3x256xf32> to vector<3x256xf32>
    %81 = vector.shape_cast %78 : vector<3x256xf32> to vector<1x3x256xf32>
    tpu.vector_store %arg15[%c0_35, %c0_36, %c0_37], %81 {strides = array<i32>} : memref<1x3x256xf32, #tpu.memory_space<vmem>>, vector<1x3x256xf32>,
    return
  }
  func.func @transform_0(%arg0: i32, %arg1: i32) -> (i32, i32, i32) {
    %c0_i32 = arith.constant 0 : i32
    %c0_i32_0 = arith.constant 0 : i32
    return %arg1, %c0_i32, %arg0 : i32, i32, i32
  }
  func.func @transform_1(%arg0: i32, %arg1: i32) -> (i32, i32, i32) {
    %c0_i32 = arith.constant 0 : i32
    %c0_i32_0 = arith.constant 0 : i32
    return %arg1, %c0_i32, %arg0 : i32, i32, i32
  }
  func.func @transform_2(%arg0: i32, %arg1: i32) -> (i32, i32, i32) {
    %c0_i32 = arith.constant 0 : i32
    %c0_i32_0 = arith.constant 0 : i32
    %c0_i32_1 = arith.constant 0 : i32
    return %arg1, %c0_i32, %c0_i32_0 : i32, i32, i32
  }
  func.func @transform_3(%arg0: i32, %arg1: i32) -> (i32, i32) {
    %c0_i32 = arith.constant 0 : i32
    %c0_i32_0 = arith.constant 0 : i32
    %c0_i32_1 = arith.constant 0 : i32
    return %c0_i32, %c0_i32_0 : i32, i32
  }
  func.func @transform_4(%arg0: i32, %arg1: i32) -> (i32, i32) {
    %c0_i32 = arith.constant 0 : i32
    %c0_i32_0 = arith.constant 0 : i32
    %c0_i32_1 = arith.constant 0 : i32
    return %c0_i32, %c0_i32_0 : i32, i32
  }
  func.func @transform_5(%arg0: i32, %arg1: i32) -> (i32, i32) {
    %c0_i32 = arith.constant 0 : i32
    %c0_i32_0 = arith.constant 0 : i32
    %c0_i32_1 = arith.constant 0 : i32
    return %c0_i32, %c0_i32_0 : i32, i32
  }
  func.func @transform_6(%arg0: i32, %arg1: i32) -> (i32, i32) {
    %c0_i32 = arith.constant 0 : i32
    %c0_i32_0 = arith.constant 0 : i32
    %c0_i32_1 = arith.constant 0 : i32
    return %c0_i32, %c0_i32_0 : i32, i32
  }
  func.func @transform_7(%arg0: i32, %arg1: i32) -> (i32, i32) {
    %c0_i32 = arith.constant 0 : i32
    %c0_i32_0 = arith.constant 0 : i32
    %c0_i32_1 = arith.constant 0 : i32
    return %c0_i32, %c0_i32_0 : i32, i32
  }
  func.func @transform_8(%arg0: i32, %arg1: i32) -> (i32, i32) {
    %c0_i32 = arith.constant 0 : i32
    %c0_i32_0 = arith.constant 0 : i32
    %c0_i32_1 = arith.constant 0 : i32
    return %c0_i32, %c0_i32_0 : i32, i32
  }
  func.func @transform_9(%arg0: i32, %arg1: i32) -> (i32, i32) {
    %c0_i32 = arith.constant 0 : i32
    %c0_i32_0 = arith.constant 0 : i32
    %c0_i32_1 = arith.constant 0 : i32
    return %c0_i32, %c0_i32_0 : i32, i32
  }
  func.func @transform_10(%arg0: i32, %arg1: i32) -> (i32, i32) {
    %c0_i32 = arith.constant 0 : i32
    %c0_i32_0 = arith.constant 0 : i32
    %c0_i32_1 = arith.constant 0 : i32
    return %c0_i32, %c0_i32_0 : i32, i32
  }
  func.func @transform_11(%arg0: i32, %arg1: i32) -> (i32, i32) {
    %c0_i32 = arith.constant 0 : i32
    %c0_i32_0 = arith.constant 0 : i32
    %c0_i32_1 = arith.constant 0 : i32
    return %c0_i32, %c0_i32_0 : i32, i32
  }
  func.func @transform_12(%arg0: i32, %arg1: i32) -> (i32, i32) {
    %c0_i32 = arith.constant 0 : i32
    %c0_i32_0 = arith.constant 0 : i32
    %c0_i32_1 = arith.constant 0 : i32
    return %c0_i32, %c0_i32_0 : i32, i32
  }
  func.func @transform_13(%arg0: i32, %arg1: i32) -> (i32, i32, i32) {
    %c0_i32 = arith.constant 0 : i32
    %c0_i32_0 = arith.constant 0 : i32
    return %arg1, %c0_i32, %arg0 : i32, i32, i32
  }
}

</mosaic_0001>

<llo_original>
// kernel: gcm_forward.5
$region0: #{gcm_forward.5}
  #allocation0 [shape = 'u32[]', space=smem, size = 0x4, offset = 0x4, fixed_abs, tag = 'smem constant byte address 0x4 - core index']
  #allocation1 [shape = 'u32[144,128]{1,0:T(1,128)}', space=vmem, size = 0x12000, scoped, tag = 'internal scratch']
  %s0 = inlined_call_operand.vmem [shape: f32[56,392], index: 0, kind: input, shape index: {}]
  %s1 = inlined_call_operand.vmem [shape: f32[392,32], index: 1, kind: input, shape index: {}]
  %s2 = inlined_call_operand.vmem [shape: f32[1,32], index: 2, kind: input, shape index: {}]
  %s3 = inlined_call_operand.vmem [shape: f32[56,32], index: 3, kind: output, shape index: {}]
  %s4 = sld [smem:[#allocation0]]
  $region22: #{gcm_forward.5} parent=0
    _
  %s6 = ssub.s32 1, %s4
  %s7 = scalar_select 0, %s6, %s4
  // Predicated region
  $region2: #{gcm_forward.5} parent=0 // pred_check
    _
  $region3: #{gcm_forward.5} parent=0 // pred_check_branch
    %9 = sbr.rel (0) target = $region5
  $region4: #{gcm_forward.5} parent=0 // pred_region
    _
  $region5: #{gcm_forward.5} parent=0 // pred_fallthru
    _
  // Predicated region
  $region6: #{gcm_forward.5} parent=0 // pred_check
    _
  $region7: #{gcm_forward.5} parent=0 // pred_check_branch
    %11 = sbr.rel (0) target = $region9
  $region8: #{gcm_forward.5} parent=0 // pred_region
    _
  $region9: #{gcm_forward.5} parent=0 // pred_fallthru
    _
  // Predicated region
  $region10: #{gcm_forward.5} parent=0 // pred_check
    _
  $region11: #{gcm_forward.5} parent=0 // pred_check_branch
    %13 = sbr.rel (0) target = $region13
  $region12: #{gcm_forward.5} parent=0 // pred_region
    _
  $region13: #{gcm_forward.5} parent=0 // pred_fallthru
    _
  %v15 = vld [vmem:[%s0] sm:$0xff]
  %v16 = vld [vmem:[%s0 + $0x8] sm:$0xff]
  %v17 = vld [vmem:[%s0 + $0x10] sm:$0xff]
  %v18 = vld [vmem:[%s0 + $0x18] sm:$0xff]
  %v19 = vld [vmem:[%s0 + $0x20] sm:$0xff]
  %v20 = vld [vmem:[%s0 + $0x28] sm:$0xff]
  %v21 = vld [vmem:[%s0 + $0x30] sm:$0xff]
  %v22 = vld [vmem:[%s0 + $0x38] sm:$0xff]
  %v23 = vld [vmem:[%s0 + $0x40] sm:$0xff]
  %v24 = vld [vmem:[%s0 + $0x48] sm:$0xff]
  %v25 = vld [vmem:[%s0 + $0x50] sm:$0xff]
  %v26 = vld [vmem:[%s0 + $0x58] sm:$0xff]
  %v27 = vld [vmem:[%s0 + $0x60] sm:$0xff]
  %v28 = vld [vmem:[%s0 + $0x68] sm:$0xff]
  %v29 = vld [vmem:[%s0 + $0x70] sm:$0xff]
  %v30 = vld [vmem:[%s0 + $0x78] sm:$0xff]
  %v31 = vld [vmem:[%s0 + $0x80] sm:$0xff]
  %v32 = vld [vmem:[%s0 + $0x88] sm:$0xff]
  %v33 = vld [vmem:[%s0 + $0x90] sm:$0xff]
  %v34 = vld [vmem:[%s0 + $0x98] sm:$0xff]
  %v35 = vld [vmem:[%s0 + $0xa0] sm:$0xff]
  %v36 = vld [vmem:[%s0 + $0xa8] sm:$0xff]
  %v37 = vld [vmem:[%s0 + $0xb0] sm:$0xff]
  %v38 = vld [vmem:[%s0 + $0xb8] sm:$0xff]
  %v39 = vld [vmem:[%s0 + $0xc0] sm:$0xff]
  %v40 = vld [vmem:[%s0 + $0xc8] sm:$0xff]
  %v41 = vld [vmem:[%s0 + $0xd0] sm:$0xff]
  %v42 = vld [vmem:[%s0 + $0xd8] sm:$0xff]
  %v43 = vpack.c.bf16 %v19, %v15
  %v44 = vpack.c.bf16 %v20, %v16
  %v45 = vpack.c.bf16 %v21, %v17
  %v46 = vpack.c.bf16 %v22, %v18
  %v47 = vpack.c.bf16 %v27, %v23
  %v48 = vpack.c.bf16 %v28, %v24
  %v49 = vpack.c.bf16 %v29, %v25
  %v50 = vpack.c.bf16 %v30, %v26
  %v51 = vpack.c.bf16 %v35, %v31
  %v52 = vpack.c.bf16 %v36, %v32
  %v53 = vpack.c.bf16 %v37, %v33
  %v54 = vpack.c.bf16 %v38, %v34
  %v55 = vpack.c.bf16 %v39, %v39
  %v56 = vpack.c.bf16 %v40, %v40
  %v57 = vpack.c.bf16 %v41, %v41
  %v58 = vpack.c.bf16 %v42, %v42
  %v59 = vld [vmem:[%s1] sm:$0xff]
  %v60 = vld [vmem:[%s1 + $0x8] sm:$0xff]
  %v61 = vld [vmem:[%s1 + $0x10] sm:$0xff]
  %v62 = vld [vmem:[%s1 + $0x18] sm:$0xff]
  %v63 = vld [vmem:[%s1 + $0x20] sm:$0xff]
  %v64 = vld [vmem:[%s1 + $0x28] sm:$0xff]
  %v65 = vld [vmem:[%s1 + $0x30] sm:$0xff]
  %v66 = vld [vmem:[%s1 + $0x38] sm:$0xff]
  %v67 = vld [vmem:[%s1 + $0x40] sm:$0xff]
  %v68 = vld [vmem:[%s1 + $0x48] sm:$0xff]
  %v69 = vld [vmem:[%s1 + $0x50] sm:$0xff]
  %v70 = vld [vmem:[%s1 + $0x58] sm:$0xff]
  %v71 = vld [vmem:[%s1 + $0x60] sm:$0xff]
  %v72 = vld [vmem:[%s1 + $0x68] sm:$0xff]
  %v73 = vld [vmem:[%s1 + $0x70] sm:$0xff]
  %v74 = vld [vmem:[%s1 + $0x78] sm:$0xff]
  %v75 = vld [vmem:[%s1 + $0x80] sm:$0xff]
  %v76 = vld [vmem:[%s1 + $0x88] sm:$0xff]
  %v77 = vld [vmem:[%s1 + $0x90] sm:$0xff]
  %v78 = vld [vmem:[%s1 + $0x98] sm:$0xff]
  %v79 = vld [vmem:[%s1 + $0xa0] sm:$0xff]
  %v80 = vld [vmem:[%s1 + $0xa8] sm:$0xff]
  %v81 = vld [vmem:[%s1 + $0xb0] sm:$0xff]
  %v82 = vld [vmem:[%s1 + $0xb8] sm:$0xff]
  %v83 = vld [vmem:[%s1 + $0xc0] sm:$0xff]
  %v84 = vld [vmem:[%s1 + $0xc8] sm:$0xff]
  %v85 = vld [vmem:[%s1 + $0xd0] sm:$0xff]
  %v86 = vld [vmem:[%s1 + $0xd8] sm:$0xff]
  %v87 = vld [vmem:[%s1 + $0xe0] sm:$0xff]
  %v88 = vld [vmem:[%s1 + $0xe8] sm:$0xff]
  %v89 = vld [vmem:[%s1 + $0xf0] sm:$0xff]
  %v90 = vld [vmem:[%s1 + $0xf8] sm:$0xff]
  %v91 = vld [vmem:[%s1 + $0x100] sm:$0xff]
  %v92 = vld [vmem:[%s1 + $0x108] sm:$0xff]
  %v93 = vld [vmem:[%s1 + $0x110] sm:$0xff]
  %v94 = vld [vmem:[%s1 + $0x118] sm:$0xff]
  %v95 = vld [vmem:[%s1 + $0x120] sm:$0xff]
  %v96 = vld [vmem:[%s1 + $0x128] sm:$0xff]
  %v97 = vld [vmem:[%s1 + $0x130] sm:$0xff]
  %v98 = vld [vmem:[%s1 + $0x138] sm:$0xff]
  %v99 = vld [vmem:[%s1 + $0x140] sm:$0xff]
  %v100 = vld [vmem:[%s1 + $0x148] sm:$0xff]
  %v101 = vld [vmem:[%s1 + $0x150] sm:$0xff]
  %v102 = vld [vmem:[%s1 + $0x158] sm:$0xff]
  %v103 = vld [vmem:[%s1 + $0x160] sm:$0xff]
  %v104 = vld [vmem:[%s1 + $0x168] sm:$0xff]
  %v105 = vld [vmem:[%s1 + $0x170] sm:$0xff]
  %v106 = vld [vmem:[%s1 + $0x178] sm:$0xff]
  %v107 = vld [vmem:[%s1 + $0x180] sm:$0xff]
  %v108 = vpack.c.bf16 %v60, %v59
  %v109 = vpack.c.bf16 %v62, %v61
  %v110 = vpack.c.bf16 %v64, %v63
  %v111 = vpack.c.bf16 %v66, %v65
  %v112 = vpack.c.bf16 %v68, %v67
  %v113 = vpack.c.bf16 %v70, %v69
  %v114 = vpack.c.bf16 %v72, %v71
  %v115 = vpack.c.bf16 %v74, %v73
  %v116 = vpack.c.bf16 %v76, %v75
  %v117 = vpack.c.bf16 %v78, %v77
  %v118 = vpack.c.bf16 %v80, %v79
  %v119 = vpack.c.bf16 %v82, %v81
  %v120 = vpack.c.bf16 %v84, %v83
  %v121 = vpack.c.bf16 %v86, %v85
  %v122 = vpack.c.bf16 %v88, %v87
  %v123 = vpack.c.bf16 %v90, %v89
  %v124 = vpack.c.bf16 %v92, %v91
  %v125 = vpack.c.bf16 %v94, %v93
  %v126 = vpack.c.bf16 %v96, %v95
  %v127 = vpack.c.bf16 %v98, %v97
  %v128 = vpack.c.bf16 %v100, %v99
  %v129 = vpack.c.bf16 %v102, %v101
  %v130 = vpack.c.bf16 %v104, %v103
  %v131 = vpack.c.bf16 %v106, %v105
  %v132 = vpack.c.bf16 %v107, %v107
  %v133 = vld [vmem:[%s2] sm:$0x1]
  %v135 = vlaneseq
  %v136 = vshrl.u32 %v135, 7
  %v137 = vsub.s32 0, %v136
  %v138 = vrot.slane %v133, %v137
  %vm140 = vcmask 64512
  %v142 = vsel %vm140, %v46, 0
  %v145 = vsel %vm140, %v50, 0
  %v148 = vsel %vm140, %v54, 0
  %v151 = vsel %vm140, %v58, 0
  %vm153 = vcmask 1043456
  %v155 = vsel %vm153, %v132, 0
  %157 = vmatprep.subr.bf16.mxu0 0
  %158 = vmatpush1.bf16.msra.mxu0 %v115
  %159 = vmatprep.subr.bf16.mxu0 0
  %160 = vmatpush1.bf16.msra.mxu0 %v114
  %161 = vmatprep.subr.bf16.mxu0 0
  %162 = vmatpush1.bf16.msra.mxu0 %v113
  %163 = vmatprep.subr.bf16.mxu0 0
  %164 = vmatpush1.bf16.msra.mxu0 %v112
  %165 = vmatprep.subr.bf16.mxu0 0
  %166 = vmatpush1.bf16.msra.mxu0 %v111
  %167 = vmatprep.subr.bf16.mxu0 0
  %168 = vmatpush1.bf16.msra.mxu0 %v110
  %169 = vmatprep.subr.bf16.mxu0 0
  %170 = vmatpush1.bf16.msra.mxu0 %v109
  %171 = vmatprep.subr.bf16.mxu0 0
  %172 = vmatpush1.bf16.msra.mxu0 %v108
  %173 = vmatprep.subr.bf16.mxu0 0
  %174 = vmatpush2.bf16.msra.mxu0 %v123
  %175 = vmatprep.subr.bf16.mxu0 0
  %176 = vmatpush2.bf16.msra.mxu0 %v122
  %177 = vmatprep.subr.bf16.mxu0 0
  %178 = vmatpush2.bf16.msra.mxu0 %v121
  %179 = vmatprep.subr.bf16.mxu0 0
  %180 = vmatpush2.bf16.msra.mxu0 %v120
  %181 = vmatprep.subr.bf16.mxu0 0
  %182 = vmatpush2.bf16.msra.mxu0 %v119
  %183 = vmatprep.subr.bf16.mxu0 0
  %184 = vmatpush2.bf16.msra.mxu0 %v118
  %185 = vmatprep.subr.bf16.mxu0 0
  %186 = vmatpush2.bf16.msra.mxu0 %v117
  %187 = vmatprep.subr.bf16.mxu0 0
  %188 = vmatpush2.bf16.msra.mxu0 %v116
  %189 = vmatprep.mubr.bf16.mxu0 %v44
  %190 = vmatmul.mubr.bf16.gmra.mxu0 %v43
  %v191 = vpop.f32.mrf.mxu0
  %v192 = vadd.f32 %v138, %v191
  %v193 = vpop.f32.mrf.mxu0
  %v194 = vpop.f32.mrf.mxu0
  %v195 = vadd.f32 %v138, %v194
  %v196 = vpop.f32.mrf.mxu0
  %197 = vmatprep.mubr.bf16.mxu0 %v48
  %198 = vmatmul.mubr.bf16.gmra.mxu0 %v47
  %v199 = vpop.f32.mrf.mxu0
  %v200 = vadd.f32 %v138, %v199
  %v201 = vpop.f32.mrf.mxu0
  %v202 = vpop.f32.mrf.mxu0
  %v203 = vadd.f32 %v138, %v202
  %v204 = vpop.f32.mrf.mxu0
  %205 = vmatprep.mubr.bf16.mxu0 %v52
  %206 = vmatmul.mubr.bf16.gmra.mxu0 %v51
  %v207 = vpop.f32.mrf.mxu0
  %v208 = vadd.f32 %v138, %v207
  %v209 = vpop.f32.mrf.mxu0
  %v210 = vpop.f32.mrf.mxu0
  %v211 = vadd.f32 %v138, %v210
  %v212 = vpop.f32.mrf.mxu0
  %213 = vmatprep.mubr.bf16.mxu0 %v56
  %214 = vmatmul.mubr.bf16.gmra.mxu0 %v55
  %v215 = vpop.f32.mrf.mxu0
  %v216 = vadd.f32 %v138, %v215
  %v217 = vpop.f32.mrf.mxu0
  %v218 = vpop.f32.mrf.mxu0
  %v219 = vpop.f32.mrf.mxu0
  %220 = vdwg.mxu0
  %221 = vmatprep.subr.bf16.mxu0 0
  %222 = vmatpush1.bf16.msra.mxu0 %v131
  %223 = vmatprep.subr.bf16.mxu0 0
  %224 = vmatpush1.bf16.msra.mxu0 %v130
  %225 = vmatprep.subr.bf16.mxu0 0
  %226 = vmatpush1.bf16.msra.mxu0 %v129
  %227 = vmatprep.subr.bf16.mxu0 0
  %228 = vmatpush1.bf16.msra.mxu0 %v128
  %229 = vmatprep.subr.bf16.mxu0 0
  %230 = vmatpush1.bf16.msra.mxu0 %v127
  %231 = vmatprep.subr.bf16.mxu0 0
  %232 = vmatpush1.bf16.msra.mxu0 %v126
  %233 = vmatprep.subr.bf16.mxu0 0
  %234 = vmatpush1.bf16.msra.mxu0 %v125
  %235 = vmatprep.subr.bf16.mxu0 0
  %236 = vmatpush1.bf16.msra.mxu0 %v124
  %237 = vmatprep.subr.bf16.mxu0 0
  %238 = vmatpush2.bf16.msra.mxu0 0
  %239 = vmatprep.subr.bf16.mxu0 0
  %240 = vmatpush2.bf16.msra.mxu0 0
  %241 = vmatprep.subr.bf16.mxu0 0
  %242 = vmatpush2.bf16.msra.mxu0 0
  %243 = vmatprep.subr.bf16.mxu0 0
  %244 = vmatpush2.bf16.msra.mxu0 0
  %245 = vmatprep.subr.bf16.mxu0 0
  %246 = vmatpush2.bf16.msra.mxu0 0
  %247 = vmatprep.subr.bf16.mxu0 0
  %248 = vmatpush2.bf16.msra.mxu0 0
  %249 = vmatprep.subr.bf16.mxu0 0
  %250 = vmatpush2.bf16.msra.mxu0 0
  %251 = vmatprep.subr.bf16.mxu0 0
  %252 = vmatpush2.bf16.msra.mxu0 %v155
  %253 = vmatprep.mubr.bf16.mxu0 %v142
  %254 = vmatmul.mubr.bf16.gmra.mxu0 %v45
  %v255 = vpop.f32.mrf.mxu0
  %v256 = vadd.f32 %v192, %v255
  %v257 = vpop.f32.mrf.mxu0
  %v258 = vpop.f32.mrf.mxu0
  %v259 = vadd.f32 %v195, %v258
  %v260 = vpop.f32.mrf.mxu0
  %261 = vmatprep.mubr.bf16.mxu0 %v145
  %262 = vmatmul.mubr.bf16.gmra.mxu0 %v49
  %v263 = vpop.f32.mrf.mxu0
  %v264 = vadd.f32 %v200, %v263
  %v265 = vpop.f32.mrf.mxu0
  %v266 = vpop.f32.mrf.mxu0
  %v267 = vadd.f32 %v203, %v266
  %v268 = vpop.f32.mrf.mxu0
  %269 = vmatprep.mubr.bf16.mxu0 %v148
  %270 = vmatmul.mubr.bf16.gmra.mxu0 %v53
  %v271 = vpop.f32.mrf.mxu0
  %v272 = vadd.f32 %v208, %v271
  %v273 = vpop.f32.mrf.mxu0
  %v274 = vpop.f32.mrf.mxu0
  %v275 = vadd.f32 %v211, %v274
  %v276 = vpop.f32.mrf.mxu0
  %277 = vmatprep.mubr.bf16.mxu0 %v151
  %278 = vmatmul.mubr.bf16.gmra.mxu0 %v57
  %v279 = vpop.f32.mrf.mxu0
  %v280 = vadd.f32 %v216, %v279
  %v281 = vpop.f32.mrf.mxu0
  %v282 = vpop.f32.mrf.mxu0
  %v283 = vpop.f32.mrf.mxu0
  %284 = vdwg.mxu0
  %v285 = vmax.f32 %v256, 0.0
  %v286 = vmax.f32 %v259, 0.0
  %v287 = vmax.f32 %v264, 0.0
  %v288 = vmax.f32 %v267, 0.0
  %v289 = vmax.f32 %v272, 0.0
  %v290 = vmax.f32 %v275, 0.0
  %v291 = vmax.f32 %v280, 0.0
  %vm292 = vcmask 261120
  %293 = vst.msk [vmem:[%s3] sm:$0xff] %vm292, %v285
  %294 = vst.msk [vmem:[%s3 + $0x8] sm:$0xff] %vm292, %v286
  %295 = vst.msk [vmem:[%s3 + $0x10] sm:$0xff] %vm292, %v287
  %296 = vst.msk [vmem:[%s3 + $0x18] sm:$0xff] %vm292, %v288
  %297 = vst.msk [vmem:[%s3 + $0x20] sm:$0xff] %vm292, %v289
  %298 = vst.msk [vmem:[%s3 + $0x28] sm:$0xff] %vm292, %v290
  %299 = vst.msk [vmem:[%s3 + $0x30] sm:$0xff] %vm292, %v291
  // Predicated region
  $region14: #{gcm_forward.5} parent=0 // pred_check
    _
  $region15: #{gcm_forward.5} parent=0 // pred_check_branch
    %301 = sbr.rel (0) target = $region17
  $region16: #{gcm_forward.5} parent=0 // pred_region
    _
  $region17: #{gcm_forward.5} parent=0 // pred_fallthru
    _
  // Predicated region
  $region18: #{gcm_forward.5} parent=0 // pred_check
    _
  $region19: #{gcm_forward.5} parent=0 // pred_check_branch
    %303 = sbr.rel (0) target = $region21
  $region20: #{gcm_forward.5} parent=0 // pred_region
    _
  $region21: #{gcm_forward.5} parent=0 // pred_fallthru
    _

// kernel: gcm_forward.7
$region0: #{gcm_forward.7}
  #allocation0 [shape = 'u32[]', space=smem, size = 0x4, offset = 0x4, fixed_abs, tag = 'smem constant byte address 0x4 - core index']
  #allocation1 [shape = 'u32[144,128]{1,0:T(1,128)}', space=vmem, size = 0x12000, scoped, tag = 'internal scratch']
  %s0 = inlined_call_operand.vmem [shape: f32[56,288], index: 0, kind: input, shape index: {}]
  %s1 = inlined_call_operand.vmem [shape: f32[288,32], index: 1, kind: input, shape index: {}]
  %s2 = inlined_call_operand.vmem [shape: f32[1,32], index: 2, kind: input, shape index: {}]
  %s3 = inlined_call_operand.vmem [shape: f32[56,32], index: 3, kind: output, shape index: {}]
  %s4 = sld [smem:[#allocation0]]
  $region22: #{gcm_forward.7} parent=0
    _
  %s6 = ssub.s32 1, %s4
  %s7 = scalar_select 0, %s6, %s4
  // Predicated region
  $region2: #{gcm_forward.7} parent=0 // pred_check
    _
  $region3: #{gcm_forward.7} parent=0 // pred_check_branch
    %9 = sbr.rel (0) target = $region5
  $region4: #{gcm_forward.7} parent=0 // pred_region
    _
  $region5: #{gcm_forward.7} parent=0 // pred_fallthru
    _
  // Predicated region
  $region6: #{gcm_forward.7} parent=0 // pred_check
    _
  $region7: #{gcm_forward.7} parent=0 // pred_check_branch
    %11 = sbr.rel (0) target = $region9
  $region8: #{gcm_forward.7} parent=0 // pred_region
    _
  $region9: #{gcm_forward.7} parent=0 // pred_fallthru
    _
  // Predicated region
  $region10: #{gcm_forward.7} parent=0 // pred_check
    _
  $region11: #{gcm_forward.7} parent=0 // pred_check_branch
    %13 = sbr.rel (0) target = $region13
  $region12: #{gcm_forward.7} parent=0 // pred_region
    _
  $region13: #{gcm_forward.7} parent=0 // pred_fallthru
    _
  %v15 = vld [vmem:[%s0] sm:$0xff]
  %v16 = vld [vmem:[%s0 + $0x8] sm:$0xff]
  %v17 = vld [vmem:[%s0 + $0x10] sm:$0xff]
  %v18 = vld [vmem:[%s0 + $0x18] sm:$0xff]
  %v19 = vld [vmem:[%s0 + $0x20] sm:$0xff]
  %v20 = vld [vmem:[%s0 + $0x28] sm:$0xff]
  %v21 = vld [vmem:[%s0 + $0x30] sm:$0xff]
  %v22 = vld [vmem:[%s0 + $0x38] sm:$0xff]
  %v23 = vld [vmem:[%s0 + $0x40] sm:$0xff]
  %v24 = vld [vmem:[%s0 + $0x48] sm:$0xff]
  %v25 = vld [vmem:[%s0 + $0x50] sm:$0xff]
  %v26 = vld [vmem:[%s0 + $0x58] sm:$0xff]
  %v27 = vld [vmem:[%s0 + $0x60] sm:$0xff]
  %v28 = vld [vmem:[%s0 + $0x68] sm:$0xff]
  %v29 = vld [vmem:[%s0 + $0x70] sm:$0xff]
  %v30 = vld [vmem:[%s0 + $0x78] sm:$0xff]
  %v31 = vld [vmem:[%s0 + $0x80] sm:$0xff]
  %v32 = vld [vmem:[%s0 + $0x88] sm:$0xff]
  %v33 = vld [vmem:[%s0 + $0x90] sm:$0xff]
  %v34 = vld [vmem:[%s0 + $0x98] sm:$0xff]
  %v35 = vld [vmem:[%s0 + $0xa0] sm:$0xff]
  %v36 = vpack.c.bf16 %v18, %v15
  %v37 = vpack.c.bf16 %v19, %v16
  %v38 = vpack.c.bf16 %v20, %v17
  %v39 = vpack.c.bf16 %v24, %v21
  %v40 = vpack.c.bf16 %v25, %v22
  %v41 = vpack.c.bf16 %v26, %v23
  %v42 = vpack.c.bf16 %v30, %v27
  %v43 = vpack.c.bf16 %v31, %v28
  %v44 = vpack.c.bf16 %v32, %v29
  %v45 = vpack.c.bf16 %v33, %v33
  %v46 = vpack.c.bf16 %v34, %v34
  %v47 = vpack.c.bf16 %v35, %v35
  %v48 = vld [vmem:[%s1] sm:$0xff]
  %v49 = vld [vmem:[%s1 + $0x8] sm:$0xff]
  %v50 = vld [vmem:[%s1 + $0x10] sm:$0xff]
  %v51 = vld [vmem:[%s1 + $0x18] sm:$0xff]
  %v52 = vld [vmem:[%s1 + $0x20] sm:$0xff]
  %v53 = vld [vmem:[%s1 + $0x28] sm:$0xff]
  %v54 = vld [vmem:[%s1 + $0x30] sm:$0xff]
  %v55 = vld [vmem:[%s1 + $0x38] sm:$0xff]
  %v56 = vld [vmem:[%s1 + $0x40] sm:$0xff]
  %v57 = vld [vmem:[%s1 + $0x48] sm:$0xff]
  %v58 = vld [vmem:[%s1 + $0x50] sm:$0xff]
  %v59 = vld [vmem:[%s1 + $0x58] sm:$0xff]
  %v60 = vld [vmem:[%s1 + $0x60] sm:$0xff]
  %v61 = vld [vmem:[%s1 + $0x68] sm:$0xff]
  %v62 = vld [vmem:[%s1 + $0x70] sm:$0xff]
  %v63 = vld [vmem:[%s1 + $0x78] sm:$0xff]
  %v64 = vld [vmem:[%s1 + $0x80] sm:$0xff]
  %v65 = vld [vmem:[%s1 + $0x88] sm:$0xff]
  %v66 = vld [vmem:[%s1 + $0x90] sm:$0xff]
  %v67 = vld [vmem:[%s1 + $0x98] sm:$0xff]
  %v68 = vld [vmem:[%s1 + $0xa0] sm:$0xff]
  %v69 = vld [vmem:[%s1 + $0xa8] sm:$0xff]
  %v70 = vld [vmem:[%s1 + $0xb0] sm:$0xff]
  %v71 = vld [vmem:[%s1 + $0xb8] sm:$0xff]
  %v72 = vld [vmem:[%s1 + $0xc0] sm:$0xff]
  %v73 = vld [vmem:[%s1 + $0xc8] sm:$0xff]
  %v74 = vld [vmem:[%s1 + $0xd0] sm:$0xff]
  %v75 = vld [vmem:[%s1 + $0xd8] sm:$0xff]
  %v76 = vld [vmem:[%s1 + $0xe0] sm:$0xff]
  %v77 = vld [vmem:[%s1 + $0xe8] sm:$0xff]
  %v78 = vld [vmem:[%s1 + $0xf0] sm:$0xff]
  %v79 = vld [vmem:[%s1 + $0xf8] sm:$0xff]
  %v80 = vld [vmem:[%s1 + $0x100] sm:$0xff]
  %v81 = vld [vmem:[%s1 + $0x108] sm:$0xff]
  %v82 = vld [vmem:[%s1 + $0x110] sm:$0xff]
  %v83 = vld [vmem:[%s1 + $0x118] sm:$0xff]
  %v84 = vpack.c.bf16 %v49, %v48
  %v85 = vpack.c.bf16 %v51, %v50
  %v86 = vpack.c.bf16 %v53, %v52
  %v87 = vpack.c.bf16 %v55, %v54
  %v88 = vpack.c.bf16 %v57, %v56
  %v89 = vpack.c.bf16 %v59, %v58
  %v90 = vpack.c.bf16 %v61, %v60
  %v91 = vpack.c.bf16 %v63, %v62
  %v92 = vpack.c.bf16 %v65, %v64
  %v93 = vpack.c.bf16 %v67, %v66
  %v94 = vpack.c.bf16 %v69, %v68
  %v95 = vpack.c.bf16 %v71, %v70
  %v96 = vpack.c.bf16 %v73, %v72
  %v97 = vpack.c.bf16 %v75, %v74
  %v98 = vpack.c.bf16 %v77, %v76
  %v99 = vpack.c.bf16 %v79, %v78
  %v100 = vpack.c.bf16 %v81, %v80
  %v101 = vpack.c.bf16 %v83, %v82
  %v102 = vld [vmem:[%s2] sm:$0x1]
  %v104 = vlaneseq
  %v105 = vshrl.u32 %v104, 7
  %v106 = vsub.s32 0, %v105
  %v107 = vrot.slane %v102, %v106
  %vm109 = vcmask 261120
  %v111 = vsel %vm109, %v38, 0
  %v114 = vsel %vm109, %v41, 0
  %v117 = vsel %vm109, %v44, 0
  %v120 = vsel %vm109, %v47, 0
  %122 = vmatprep.subr.bf16.mxu0 0
  %123 = vmatpush1.bf16.msra.mxu0 %v91
  %124 = vmatprep.subr.bf16.mxu0 0
  %125 = vmatpush1.bf16.msra.mxu0 %v90
  %126 = vmatprep.subr.bf16.mxu0 0
  %127 = vmatpush1.bf16.msra.mxu0 %v89
  %128 = vmatprep.subr.bf16.mxu0 0
  %129 = vmatpush1.bf16.msra.mxu0 %v88
  %130 = vmatprep.subr.bf16.mxu0 0
  %131 = vmatpush1.bf16.msra.mxu0 %v87
  %132 = vmatprep.subr.bf16.mxu0 0
  %133 = vmatpush1.bf16.msra.mxu0 %v86
  %134 = vmatprep.subr.bf16.mxu0 0
  %135 = vmatpush1.bf16.msra.mxu0 %v85
  %136 = vmatprep.subr.bf16.mxu0 0
  %137 = vmatpush1.bf16.msra.mxu0 %v84
  %138 = vmatprep.subr.bf16.mxu0 0
  %139 = vmatpush2.bf16.msra.mxu0 %v99
  %140 = vmatprep.subr.bf16.mxu0 0
  %141 = vmatpush2.bf16.msra.mxu0 %v98
  %142 = vmatprep.subr.bf16.mxu0 0
  %143 = vmatpush2.bf16.msra.mxu0 %v97
  %144 = vmatprep.subr.bf16.mxu0 0
  %145 = vmatpush2.bf16.msra.mxu0 %v96
  %146 = vmatprep.subr.bf16.mxu0 0
  %147 = vmatpush2.bf16.msra.mxu0 %v95
  %148 = vmatprep.subr.bf16.mxu0 0
  %149 = vmatpush2.bf16.msra.mxu0 %v94
  %150 = vmatprep.subr.bf16.mxu0 0
  %151 = vmatpush2.bf16.msra.mxu0 %v93
  %152 = vmatprep.subr.bf16.mxu0 0
  %153 = vmatpush2.bf16.msra.mxu0 %v92
  %154 = vmatprep.mubr.bf16.mxu0 %v37
  %155 = vmatmul.mubr.bf16.gmra.mxu0 %v36
  %v156 = vpop.f32.mrf.mxu0
  %v157 = vadd.f32 %v107, %v156
  %v158 = vpop.f32.mrf.mxu0
  %v159 = vpop.f32.mrf.mxu0
  %v160 = vadd.f32 %v107, %v159
  %v161 = vpop.f32.mrf.mxu0
  %162 = vmatprep.mubr.bf16.mxu0 %v40
  %163 = vmatmul.mubr.bf16.gmra.mxu0 %v39
  %v164 = vpop.f32.mrf.mxu0
  %v165 = vadd.f32 %v107, %v164
  %v166 = vpop.f32.mrf.mxu0
  %v167 = vpop.f32.mrf.mxu0
  %v168 = vadd.f32 %v107, %v167
  %v169 = vpop.f32.mrf.mxu0
  %170 = vmatprep.mubr.bf16.mxu0 %v43
  %171 = vmatmul.mubr.bf16.gmra.mxu0 %v42
  %v172 = vpop.f32.mrf.mxu0
  %v173 = vadd.f32 %v107, %v172
  %v174 = vpop.f32.mrf.mxu0
  %v175 = vpop.f32.mrf.mxu0
  %v176 = vadd.f32 %v107, %v175
  %v177 = vpop.f32.mrf.mxu0
  %178 = vmatprep.mubr.bf16.mxu0 %v46
  %179 = vmatmul.mubr.bf16.gmra.mxu0 %v45
  %v180 = vpop.f32.mrf.mxu0
  %v181 = vadd.f32 %v107, %v180
  %v182 = vpop.f32.mrf.mxu0
  %v183 = vpop.f32.mrf.mxu0
  %v184 = vpop.f32.mrf.mxu0
  %185 = vdwg.mxu0
  %186 = vmatprep.subr.bf16.mxu0 0
  %187 = vmatpush1.bf16.msra.mxu0 0
  %188 = vmatprep.subr.bf16.mxu0 0
  %189 = vmatpush1.bf16.msra.mxu0 0
  %190 = vmatprep.subr.bf16.mxu0 0
  %191 = vmatpush1.bf16.msra.mxu0 0
  %192 = vmatprep.subr.bf16.mxu0 0
  %193 = vmatpush1.bf16.msra.mxu0 0
  %194 = vmatprep.subr.bf16.mxu0 0
  %195 = vmatpush1.bf16.msra.mxu0 0
  %196 = vmatprep.subr.bf16.mxu0 0
  %197 = vmatpush1.bf16.msra.mxu0 0
  %198 = vmatprep.subr.bf16.mxu0 0
  %199 = vmatpush1.bf16.msra.mxu0 %v101
  %200 = vmatprep.subr.bf16.mxu0 0
  %201 = vmatpush1.bf16.msra.mxu0 %v100
  %202 = vmatprep.subr.bf16.mxu0 0
  %203 = vmatpush2.bf16.msra.mxu0 0
  %204 = vmatprep.subr.bf16.mxu0 0
  %205 = vmatpush2.bf16.msra.mxu0 0
  %206 = vmatprep.subr.bf16.mxu0 0
  %207 = vmatpush2.bf16.msra.mxu0 0
  %208 = vmatprep.subr.bf16.mxu0 0
  %209 = vmatpush2.bf16.msra.mxu0 0
  %210 = vmatprep.subr.bf16.mxu0 0
  %211 = vmatpush2.bf16.msra.mxu0 0
  %212 = vmatprep.subr.bf16.mxu0 0
  %213 = vmatpush2.bf16.msra.mxu0 0
  %214 = vmatprep.subr.bf16.mxu0 0
  %215 = vmatpush2.bf16.msra.mxu0 0
  %216 = vmatprep.subr.bf16.mxu0 0
  %217 = vmatpush2.bf16.msra.mxu0 0
  %218 = vmatprep.mubr.bf16.mxu0 0
  %219 = vmatmul.mubr.bf16.gmra.mxu0 %v111
  %v220 = vpop.f32.mrf.mxu0
  %v221 = vadd.f32 %v157, %v220
  %v222 = vpop.f32.mrf.mxu0
  %v223 = vpop.f32.mrf.mxu0
  %v224 = vadd.f32 %v160, %v223
  %v225 = vpop.f32.mrf.mxu0
  %226 = vmatprep.mubr.bf16.mxu0 0
  %227 = vmatmul.mubr.bf16.gmra.mxu0 %v114
  %v228 = vpop.f32.mrf.mxu0
  %v229 = vadd.f32 %v165, %v228
  %v230 = vpop.f32.mrf.mxu0
  %v231 = vpop.f32.mrf.mxu0
  %v232 = vadd.f32 %v168, %v231
  %v233 = vpop.f32.mrf.mxu0
  %234 = vmatprep.mubr.bf16.mxu0 0
  %235 = vmatmul.mubr.bf16.gmra.mxu0 %v117
  %v236 = vpop.f32.mrf.mxu0
  %v237 = vadd.f32 %v173, %v236
  %v238 = vpop.f32.mrf.mxu0
  %v239 = vpop.f32.mrf.mxu0
  %v240 = vadd.f32 %v176, %v239
  %v241 = vpop.f32.mrf.mxu0
  %242 = vmatprep.mubr.bf16.mxu0 0
  %243 = vmatmul.mubr.bf16.gmra.mxu0 %v120
  %v244 = vpop.f32.mrf.mxu0
  %v245 = vadd.f32 %v181, %v244
  %v246 = vpop.f32.mrf.mxu0
  %v247 = vpop.f32.mrf.mxu0
  %v248 = vpop.f32.mrf.mxu0
  %249 = vdwg.mxu0
  %250 = vst.msk [vmem:[%s3] sm:$0xff] %vm109, %v221
  %251 = vst.msk [vmem:[%s3 + $0x8] sm:$0xff] %vm109, %v224
  %252 = vst.msk [vmem:[%s3 + $0x10] sm:$0xff] %vm109, %v229
  %253 = vst.msk [vmem:[%s3 + $0x18] sm:$0xff] %vm109, %v232
  %254 = vst.msk [vmem:[%s3 + $0x20] sm:$0xff] %vm109, %v237
  %255 = vst.msk [vmem:[%s3 + $0x28] sm:$0xff] %vm109, %v240
  %256 = vst.msk [vmem:[%s3 + $0x30] sm:$0xff] %vm109, %v245
  // Predicated region
  $region14: #{gcm_forward.7} parent=0 // pred_check
    _
  $region15: #{gcm_forward.7} parent=0 // pred_check_branch
    %258 = sbr.rel (0) target = $region17
  $region16: #{gcm_forward.7} parent=0 // pred_region
    _
  $region17: #{gcm_forward.7} parent=0 // pred_fallthru
    _
  // Predicated region
  $region18: #{gcm_forward.7} parent=0 // pred_check
    _
  $region19: #{gcm_forward.7} parent=0 // pred_check_branch
    %260 = sbr.rel (0) target = $region21
  $region20: #{gcm_forward.7} parent=0 // pred_region
    _
  $region21: #{gcm_forward.7} parent=0 // pred_fallthru
    _

// kernel: gcm_forward.8
$region0: #{gcm_forward.8}
  #allocation0 [shape = 'u32[]', space=smem, size = 0x4, offset = 0x4, fixed_abs, tag = 'smem constant byte address 0x4 - core index']
  #allocation1 [shape = 'u32[144,128]{1,0:T(1,128)}', space=vmem, size = 0x12000, scoped, tag = 'internal scratch']
  #allocation2 [shape = 'f32[1,32]{1,0:T(1,128)}', space=vmem, size = 0x200, scoped, tag = 'scratch operand']
  %s0 = inlined_call_operand.vmem [shape: f32[2,32,32], index: 0, kind: input, shape index: {}]
  %s1 = inlined_call_operand.vmem [shape: f32[32,64], index: 1, kind: input, shape index: {}]
  %s2 = inlined_call_operand.vmem [shape: f32[1,64], index: 2, kind: input, shape index: {}]
  %s3 = inlined_call_operand.vmem [shape: f32[2,1,64], index: 3, kind: output, shape index: {}]
  %s4 = sld [smem:[#allocation0]]
  $region53: #{gcm_forward.8} parent=0
    _
  %s6 = ssub.s32 1, %s4
  %s7 = scalar_select 0, %s6, %s4
  loop: start=0, step=1, limit=4
  $region2: #{gcm_forward.8} parent=0 // loop_pre_header
    _
  $region3: #{gcm_forward.8} parent=0 // loop_header
    %s9 = sphi 0, %s13
    %p10 = scmp.ge.s32.totalorder %s9, 4
    %s16 = sphi 0, %s28
    %s17 = sphi 0, %s24
    %s18 = sphi 0, %s16
    %s19 = sphi 0, %s17
    %s20 = sphi 0, %s18
    %s21 = sphi 0, %s19
    %s33 = sphi 0, %s35
    %s36 = sphi 0, %s33
    %s37 = sphi 0, %s36
    %s53 = sphi 0, %s37
    %s57 = sphi 0, %s57
    %s59 = sphi 0, %s57
    %s60 = sphi 0, %s59
    %s74 = sphi 0, %s60
    %s78 = sphi 0, %s78
    %s80 = sphi 0, %s78
    %s81 = sphi 0, %s80
    %s95 = sphi 0, %s81
    %s101 = sphi 0, %s103
    %s104 = sphi 0, %s101
    %s105 = sphi 0, %s104
    %s121 = sphi 0, %s105
  $region4: #{gcm_forward.8} parent=0 // loop_header_branch
    %12 = sbr.rel (%p10) target = $region8
  $region5: #{gcm_forward.8} parent=0 // loop_body
    %s14 = ssub.s32 %s9, 1
    %s15 = ssub.s32 %s9, 2
    %s22 = sadd.s32 1, %s17
    %p23 = scmp.ge.s32.totalorder %s22, 1
    %s24 = scalar_select %p23, 0, %s22
    %s25 = sadd.s32 1, %s16
    %s26 = scalar_select %p23, %s25, %s16
    %p27 = scmp.ge.s32.totalorder %s26, 2
    %s28 = scalar_select %p27, 0, %s26
    %s29 = ssub.s32 %s16, %s28
    %s30 = ssub.s32 %s17, %s24
    %s31 = sor.u32 %s29, %s30
    %p32 = scmp.eq.s32.totalorder %s31, 0
    %s34 = sadd.s32 %s33, 1
    %s35 = scalar_select %p32, %s33, %s34
    %p38 = pneg %p32
    %p39 = scmp.eq.s32.totalorder %s9, 1
    %p40 = por %p38, %p39
    %p41 = scmp.ne.s32.totalorder %s33, %s36
    %p42 = scmp.eq.s32.totalorder %s9, 0
    %p43 = por %p41, %p42
    %p44 = scmp.ne.s32.totalorder %s33, %s36
    %p45 = scmp.eq.s32.totalorder %s14, 1
    %p46 = por %p44, %p45
    %p47 = scmp.ne.s32.totalorder %s36, %s37
    %p48 = scmp.eq.s32.totalorder %s14, 0
    %p49 = por %p47, %p48
    %p50 = scmp.ne.s32.totalorder %s36, %s37
    %p51 = scmp.eq.s32.totalorder %s15, 1
    %p52 = por %p50, %p51
    %p54 = scmp.ne.s32.totalorder %s37, %s53
    %p55 = scmp.eq.s32.totalorder %s15, 0
    %p56 = por %p54, %p55
    %s58 = sadd.s32 %s57, 1
    %p61 = scmp.eq.s32.totalorder %s9, 1
    %p62 = scmp.ne.s32.totalorder %s57, %s59
    %p63 = scmp.eq.s32.totalorder %s9, 0
    %p64 = por %p62, %p63
    %p65 = scmp.ne.s32.totalorder %s57, %s59
    %p66 = scmp.eq.s32.totalorder %s14, 1
    %p67 = por %p65, %p66
    %p68 = scmp.ne.s32.totalorder %s59, %s60
    %p69 = scmp.eq.s32.totalorder %s14, 0
    %p70 = por %p68, %p69
    %p71 = scmp.ne.s32.totalorder %s59, %s60
    %p72 = scmp.eq.s32.totalorder %s15, 1
    %p73 = por %p71, %p72
    %p75 = scmp.ne.s32.totalorder %s60, %s74
    %p76 = scmp.eq.s32.totalorder %s15, 0
    %p77 = por %p75, %p76
    %s79 = sadd.s32 %s78, 1
    %p82 = scmp.eq.s32.totalorder %s9, 1
    %p83 = scmp.ne.s32.totalorder %s78, %s80
    %p84 = scmp.eq.s32.totalorder %s9, 0
    %p85 = por %p83, %p84
    %p86 = scmp.ne.s32.totalorder %s78, %s80
    %p87 = scmp.eq.s32.totalorder %s14, 1
    %p88 = por %p86, %p87
    %p89 = scmp.ne.s32.totalorder %s80, %s81
    %p90 = scmp.eq.s32.totalorder %s14, 0
    %p91 = por %p89, %p90
    %p92 = scmp.ne.s32.totalorder %s80, %s81
    %p93 = scmp.eq.s32.totalorder %s15, 1
    %p94 = por %p92, %p93
    %p96 = scmp.ne.s32.totalorder %s81, %s95
    %p97 = scmp.eq.s32.totalorder %s15, 0
    %p98 = por %p96, %p97
    %s99 = ssub.s32 %s16, %s28
    %p100 = scmp.eq.s32.totalorder %s99, 0
    %s102 = sadd.s32 %s101, 1
    %s103 = scalar_select %p100, %s101, %s102
    %p106 = pneg %p100
    %p107 = scmp.eq.s32.totalorder %s9, 1
    %p108 = por %p106, %p107
    %p109 = scmp.ne.s32.totalorder %s101, %s104
    %p110 = scmp.eq.s32.totalorder %s9, 0
    %p111 = por %p109, %p110
    %p112 = scmp.ne.s32.totalorder %s101, %s104
    %p113 = scmp.eq.s32.totalorder %s14, 1
    %p114 = por %p112, %p113
    %p115 = scmp.ne.s32.totalorder %s104, %s105
    %p116 = scmp.eq.s32.totalorder %s14, 0
    %p117 = por %p115, %p116
    %p118 = scmp.ne.s32.totalorder %s104, %s105
    %p119 = scmp.eq.s32.totalorder %s15, 1
    %p120 = por %p118, %p119
    %p122 = scmp.ne.s32.totalorder %s105, %s121
    %p123 = scmp.eq.s32.totalorder %s15, 0
    %p124 = por %p122, %p123
    %p125 = scmp.le.s32.totalorder 1, %s9
    %p126 = scmp.lt.s32.totalorder %s9, 3
    %p127 = pnand %p125, %p126
    %p128 = pneg %p127
    // Predicated region
    $region9: #{gcm_forward.8} parent=5 // pred_check
      _
    $region10: #{gcm_forward.8} parent=5 // pred_check_branch
      %130 = sbr.rel (%p127) target = $region12
    $region11: #{gcm_forward.8} parent=5 // pred_region
      %s131 = ssub.s32 %s9, 1
      // Predicated region
      $region13: #{gcm_forward.8} parent=11 // pred_check
        %p132 = pneg %p70
      $region14: #{gcm_forward.8} parent=11 // pred_check_branch
        %134 = sbr.rel (%p132) target = $region16
      $region15: #{gcm_forward.8} parent=11 // pred_region
        _
      $region16: #{gcm_forward.8} parent=11 // pred_fallthru
        _
      // Predicated region
      $region17: #{gcm_forward.8} parent=11 // pred_check
        %p135 = pneg %p91
      $region18: #{gcm_forward.8} parent=11 // pred_check_branch
        %137 = sbr.rel (%p135) target = $region20
      $region19: #{gcm_forward.8} parent=11 // pred_region
        _
      $region20: #{gcm_forward.8} parent=11 // pred_fallthru
        _
    $region12: #{gcm_forward.8} parent=5 // pred_fallthru
      _
    %p138 = scmp.lt.s32.totalorder %s9, 2
    // Predicated region
    $region21: #{gcm_forward.8} parent=5 // pred_check
      %p139 = pneg %p138
    $region22: #{gcm_forward.8} parent=5 // pred_check_branch
      %141 = sbr.rel (%p139) target = $region24
    $region23: #{gcm_forward.8} parent=5 // pred_region
      // Predicated region
      $region25: #{gcm_forward.8} parent=23 // pred_check
        %p142 = pneg %p43
      $region26: #{gcm_forward.8} parent=23 // pred_check_branch
        %144 = sbr.rel (%p142) target = $region28
      $region27: #{gcm_forward.8} parent=23 // pred_region
        %s145 = smul.u32 4, %s17
        %p146 = scmp.lt.s32.totalorder %s16, 1
        %s147 = scalar_select %p146, %s16, 1
        %p148 = scmp.lt.s32.totalorder %s145, 3
        %s149 = scalar_select %p148, %s145, 3
        %s150 = smul.addr %s147, 4
        %s151 = sadd.s32 %s149, %s150
        %s152 = smul.addr %s151, 8
        %s153 = scalar_lea.vmem %s0, %s152
        %s154 = smul.u32 4, %s17
      $region28: #{gcm_forward.8} parent=23 // pred_fallthru
        _
    $region24: #{gcm_forward.8} parent=5 // pred_fallthru
      _
    %p155 = scmp.le.s32.totalorder 1, %s9
    %p156 = scmp.lt.s32.totalorder %s9, 3
    %p157 = pnand %p155, %p156
    %p158 = pneg %p157
    // Predicated region
    $region29: #{gcm_forward.8} parent=5 // pred_check
      _
    $region30: #{gcm_forward.8} parent=5 // pred_check_branch
      %160 = sbr.rel (%p157) target = $region32
    $region31: #{gcm_forward.8} parent=5 // pred_region
      %s161 = ssub.s32 %s9, 1
      %s162 = smul.u32 4, %s19
      %p163 = scmp.lt.s32.totalorder %s18, 1
      %s164 = scalar_select %p163, %s18, 1
      %p165 = scmp.lt.s32.totalorder %s162, 3
      %s166 = scalar_select %p165, %s162, 3
      %s167 = smul.addr %s164, 4
      %s168 = sadd.s32 %s166, %s167
      %s169 = smul.addr %s168, 8
      %s170 = scalar_lea.vmem %s0, %s169
      %p171 = pneg %p49
      %p172 = pneg %p46
      %p173 = pneg %p70
      %p174 = pneg %p67
      %p175 = pneg %p91
      %p176 = pneg %p88
      %p177 = pneg %p117
      %p178 = pneg %p114
      %p179 = scmp.lt.s32.totalorder %s18, 1
      %s180 = scalar_select %p179, %s18, 1
      %s181 = scalar_lea.vmem %s3, %s180
      %s182 = smul.u32 4, %s19
      %p183 = scmp.lt.s32.totalorder %s18, 1
      %s184 = scalar_select %p183, %s18, 1
      %p185 = scmp.lt.s32.totalorder %s182, 3
      %s186 = scalar_select %p185, %s182, 3
      %s187 = smul.addr %s184, 4
      %s188 = sadd.s32 %s186, %s187
      %s189 = smul.addr %s188, 8
      %s190 = scalar_lea.vmem %s0, %s189
      %s191 = smul.u32 4, %s19
      %p192 = scmp.lt.s32.totalorder %s18, 1
      %s193 = scalar_select %p192, %s18, 1
      %s194 = scalar_lea.vmem %s3, %s193
      %p196 = scmp.eq.s32.totalorder %s19, 0
      // Predicated region
      $region33: #{gcm_forward.8} parent=31 // pred_check
        %p197 = pneg %p196
      $region34: #{gcm_forward.8} parent=31 // pred_check_branch
        %199 = sbr.rel (%p197) target = $region36
      $region35: #{gcm_forward.8} parent=31 // pred_region
        %vm200 = vcmask 253952
        %201 = vst.msk [vmem:[#allocation2] sm:$0x1] %vm200, 0.0
      $region36: #{gcm_forward.8} parent=31 // pred_fallthru
        _
      %v202 = vld [vmem:[#allocation2] sm:$0x1]
      %v203 = vld [vmem:[%s190] sm:$0xff]
      %v204 = vld [vmem:[%s190 + $0x8] sm:$0xff]
      %v205 = vld [vmem:[%s190 + $0x10] sm:$0xff]
      %v206 = vld [vmem:[%s190 + $0x18] sm:$0xff]
      %vm207 = vcmask 261120
      %v208 = vsel %vm207, %v203, 0.0
      %v209 = vsel %vm207, %v204, 0.0
      %v210 = vadd.f32 %v208, %v209
      %v211 = vsel %vm207, %v205, 0.0
      %v212 = vadd.f32 %v210, %v211
      %v213 = vsel %vm207, %v206, 0.0
      %v214 = vadd.f32 %v212, %v213
      %v215 = vrot.slane %v214, 4
      %v216 = vadd.f32 %v214, %v215
      %v217 = vrot.slane %v216, 2
      %v218 = vadd.f32 %v216, %v217
      %v219 = vrot.slane %v218, 1
      %v220 = vadd.f32 %v218, %v219
      %v221 = vadd.f32 %v202, %v220
      %vm222 = vcmask 253952
      %223 = vst.msk [vmem:[#allocation2] sm:$0x1] %vm222, %v221
      // Predicated region
      $region37: #{gcm_forward.8} parent=31 // pred_check
        %p224 = pneg %p196
      $region38: #{gcm_forward.8} parent=31 // pred_check_branch
        %226 = sbr.rel (%p224) target = $region40
      $region39: #{gcm_forward.8} parent=31 // pred_region
        %v227 = vld [vmem:[#allocation2] sm:$0x1]
        %v228 = vmul.f32 %v227, 0.04
        %v229 = vpack.c.bf16 %v228, %v228
        %v230 = vld [vmem:[%s1] sm:$0xff]
        %v231 = vld [vmem:[%s1 + $0x8] sm:$0xff]
        %v232 = vld [vmem:[%s1 + $0x10] sm:$0xff]
        %v233 = vld [vmem:[%s1 + $0x18] sm:$0xff]
        %v234 = vpack.c.bf16 %v231, %v230
        %v235 = vpack.c.bf16 %v233, %v232
        %v236 = vld [vmem:[%s2] sm:$0x1]
        %v238 = vsel %vm207, %v229, 0
        %240 = vmatprep.subr.bf16.mxu0 0
        %241 = vmatpush1.bf16.msra.mxu0 0
        %242 = vmatprep.subr.bf16.mxu0 0
        %243 = vmatpush1.bf16.msra.mxu0 0
        %244 = vmatprep.subr.bf16.mxu0 0
        %245 = vmatpush1.bf16.msra.mxu0 0
        %246 = vmatprep.subr.bf16.mxu0 0
        %247 = vmatpush1.bf16.msra.mxu0 0
        %248 = vmatprep.subr.bf16.mxu0 0
        %249 = vmatpush1.bf16.msra.mxu0 0
        %250 = vmatprep.subr.bf16.mxu0 0
        %251 = vmatpush1.bf16.msra.mxu0 0
        %252 = vmatprep.subr.bf16.mxu0 0
        %253 = vmatpush1.bf16.msra.mxu0 %v235
        %254 = vmatprep.subr.bf16.mxu0 0
        %255 = vmatpush1.bf16.msra.mxu0 %v234
        %256 = vmatprep.subr.bf16.mxu0 0
        %257 = vmatpush2.bf16.msra.mxu0 0
        %258 = vmatprep.subr.bf16.mxu0 0
        %259 = vmatpush2.bf16.msra.mxu0 0
        %260 = vmatprep.subr.bf16.mxu0 0
        %261 = vmatpush2.bf16.msra.mxu0 0
        %262 = vmatprep.subr.bf16.mxu0 0
        %263 = vmatpush2.bf16.msra.mxu0 0
        %264 = vmatprep.subr.bf16.mxu0 0
        %265 = vmatpush2.bf16.msra.mxu0 0
        %266 = vmatprep.subr.bf16.mxu0 0
        %267 = vmatpush2.bf16.msra.mxu0 0
        %268 = vmatprep.subr.bf16.mxu0 0
        %269 = vmatpush2.bf16.msra.mxu0 0
        %270 = vmatprep.subr.bf16.mxu0 0
        %271 = vmatpush2.bf16.msra.mxu0 0
        %272 = vmatprep.mubr.bf16.mxu0 0
        %273 = vmatmul.mubr.bf16.gmra.mxu0 %v238
        %v274 = vpop.f32.mrf.mxu0
        %v275 = vadd.f32 %v236, %v274
        %v276 = vpop.f32.mrf.mxu0
        %v277 = vpop.f32.mrf.mxu0
        %v278 = vpop.f32.mrf.mxu0
        %279 = vdwg.mxu0
        %vm280 = vcmask 516096
        %281 = vst.msk [vmem:[%s194] sm:$0x1] %vm280, %v275
      $region40: #{gcm_forward.8} parent=31 // pred_fallthru
        _
      %p282 = scmp.lt.s32.totalorder %s18, 1
      %s283 = scalar_select %p282, %s18, 1
      %s284 = scalar_lea.vmem %s3, %s283
      // Predicated region
      $region41: #{gcm_forward.8} parent=31 // pred_check
        %p285 = pneg %p114
      $region42: #{gcm_forward.8} parent=31 // pred_check_branch
        %287 = sbr.rel (%p285) target = $region44
      $region43: #{gcm_forward.8} parent=31 // pred_region
        _
      $region44: #{gcm_forward.8} parent=31 // pred_fallthru
        _
    $region32: #{gcm_forward.8} parent=5 // pred_fallthru
      _
    %p288 = scmp.le.s32.totalorder 2, %s9
    // Predicated region
    $region45: #{gcm_forward.8} parent=5 // pred_check
      %p289 = pneg %p288
    $region46: #{gcm_forward.8} parent=5 // pred_check_branch
      %291 = sbr.rel (%p289) target = $region48
    $region47: #{gcm_forward.8} parent=5 // pred_region
      %s292 = ssub.s32 %s9, 2
      // Predicated region
      $region49: #{gcm_forward.8} parent=47 // pred_check
        %p293 = pneg %p120
      $region50: #{gcm_forward.8} parent=47 // pred_check_branch
        %295 = sbr.rel (%p293) target = $region52
      $region51: #{gcm_forward.8} parent=47 // pred_region
        %p296 = scmp.lt.s32.totalorder %s20, 1
        %s297 = scalar_select %p296, %s20, 1
        %s298 = scalar_lea.vmem %s3, %s297
      $region52: #{gcm_forward.8} parent=47 // pred_fallthru
        _
    $region48: #{gcm_forward.8} parent=5 // pred_fallthru
      _
  $region6: #{gcm_forward.8} parent=0 // loop_footer
    %s13 = sadd.s32 1, %s9
  $region7: #{gcm_forward.8} parent=0 // loop_footer_branch
    %8 = sbr.rel target = $region3
  $region8: #{gcm_forward.8} parent=0 // loop_exit
    _

// kernel: gcm_forward.6
$region0: #{gcm_forward.6}
  #allocation0 [shape = 'u32[]', space=smem, size = 0x4, offset = 0x4, fixed_abs, tag = 'smem constant byte address 0x4 - core index']
  #allocation1 [shape = 'u32[144,128]{1,0:T(1,128)}', space=vmem, size = 0x12000, scoped, tag = 'internal scratch']
  %s0 = inlined_call_operand.vmem [shape: f32[56,288], index: 0, kind: input, shape index: {}]
  %s1 = inlined_call_operand.vmem [shape: f32[288,32], index: 1, kind: input, shape index: {}]
  %s2 = inlined_call_operand.vmem [shape: f32[1,32], index: 2, kind: input, shape index: {}]
  %s3 = inlined_call_operand.vmem [shape: f32[56,32], index: 3, kind: output, shape index: {}]
  %s4 = sld [smem:[#allocation0]]
  $region22: #{gcm_forward.6} parent=0
    _
  %s6 = ssub.s32 1, %s4
  %s7 = scalar_select 0, %s6, %s4
  // Predicated region
  $region2: #{gcm_forward.6} parent=0 // pred_check
    _
  $region3: #{gcm_forward.6} parent=0 // pred_check_branch
    %9 = sbr.rel (0) target = $region5
  $region4: #{gcm_forward.6} parent=0 // pred_region
    _
  $region5: #{gcm_forward.6} parent=0 // pred_fallthru
    _
  // Predicated region
  $region6: #{gcm_forward.6} parent=0 // pred_check
    _
  $region7: #{gcm_forward.6} parent=0 // pred_check_branch
    %11 = sbr.rel (0) target = $region9
  $region8: #{gcm_forward.6} parent=0 // pred_region
    _
  $region9: #{gcm_forward.6} parent=0 // pred_fallthru
    _
  // Predicated region
  $region10: #{gcm_forward.6} parent=0 // pred_check
    _
  $region11: #{gcm_forward.6} parent=0 // pred_check_branch
    %13 = sbr.rel (0) target = $region13
  $region12: #{gcm_forward.6} parent=0 // pred_region
    _
  $region13: #{gcm_forward.6} parent=0 // pred_fallthru
    _
  %v15 = vld [vmem:[%s0] sm:$0xff]
  %v16 = vld [vmem:[%s0 + $0x8] sm:$0xff]
  %v17 = vld [vmem:[%s0 + $0x10] sm:$0xff]
  %v18 = vld [vmem:[%s0 + $0x18] sm:$0xff]
  %v19 = vld [vmem:[%s0 + $0x20] sm:$0xff]
  %v20 = vld [vmem:[%s0 + $0x28] sm:$0xff]
  %v21 = vld [vmem:[%s0 + $0x30] sm:$0xff]
  %v22 = vld [vmem:[%s0 + $0x38] sm:$0xff]
  %v23 = vld [vmem:[%s0 + $0x40] sm:$0xff]
  %v24 = vld [vmem:[%s0 + $0x48] sm:$0xff]
  %v25 = vld [vmem:[%s0 + $0x50] sm:$0xff]
  %v26 = vld [vmem:[%s0 + $0x58] sm:$0xff]
  %v27 = vld [vmem:[%s0 + $0x60] sm:$0xff]
  %v28 = vld [vmem:[%s0 + $0x68] sm:$0xff]
  %v29 = vld [vmem:[%s0 + $0x70] sm:$0xff]
  %v30 = vld [vmem:[%s0 + $0x78] sm:$0xff]
  %v31 = vld [vmem:[%s0 + $0x80] sm:$0xff]
  %v32 = vld [vmem:[%s0 + $0x88] sm:$0xff]
  %v33 = vld [vmem:[%s0 + $0x90] sm:$0xff]
  %v34 = vld [vmem:[%s0 + $0x98] sm:$0xff]
  %v35 = vld [vmem:[%s0 + $0xa0] sm:$0xff]
  %v36 = vpack.c.bf16 %v18, %v15
  %v37 = vpack.c.bf16 %v19, %v16
  %v38 = vpack.c.bf16 %v20, %v17
  %v39 = vpack.c.bf16 %v24, %v21
  %v40 = vpack.c.bf16 %v25, %v22
  %v41 = vpack.c.bf16 %v26, %v23
  %v42 = vpack.c.bf16 %v30, %v27
  %v43 = vpack.c.bf16 %v31, %v28
  %v44 = vpack.c.bf16 %v32, %v29
  %v45 = vpack.c.bf16 %v33, %v33
  %v46 = vpack.c.bf16 %v34, %v34
  %v47 = vpack.c.bf16 %v35, %v35
  %v48 = vld [vmem:[%s1] sm:$0xff]
  %v49 = vld [vmem:[%s1 + $0x8] sm:$0xff]
  %v50 = vld [vmem:[%s1 + $0x10] sm:$0xff]
  %v51 = vld [vmem:[%s1 + $0x18] sm:$0xff]
  %v52 = vld [vmem:[%s1 + $0x20] sm:$0xff]
  %v53 = vld [vmem:[%s1 + $0x28] sm:$0xff]
  %v54 = vld [vmem:[%s1 + $0x30] sm:$0xff]
  %v55 = vld [vmem:[%s1 + $0x38] sm:$0xff]
  %v56 = vld [vmem:[%s1 + $0x40] sm:$0xff]
  %v57 = vld [vmem:[%s1 + $0x48] sm:$0xff]
  %v58 = vld [vmem:[%s1 + $0x50] sm:$0xff]
  %v59 = vld [vmem:[%s1 + $0x58] sm:$0xff]
  %v60 = vld [vmem:[%s1 + $0x60] sm:$0xff]
  %v61 = vld [vmem:[%s1 + $0x68] sm:$0xff]
  %v62 = vld [vmem:[%s1 + $0x70] sm:$0xff]
  %v63 = vld [vmem:[%s1 + $0x78] sm:$0xff]
  %v64 = vld [vmem:[%s1 + $0x80] sm:$0xff]
  %v65 = vld [vmem:[%s1 + $0x88] sm:$0xff]
  %v66 = vld [vmem:[%s1 + $0x90] sm:$0xff]
  %v67 = vld [vmem:[%s1 + $0x98] sm:$0xff]
  %v68 = vld [vmem:[%s1 + $0xa0] sm:$0xff]
  %v69 = vld [vmem:[%s1 + $0xa8] sm:$0xff]
  %v70 = vld [vmem:[%s1 + $0xb0] sm:$0xff]
  %v71 = vld [vmem:[%s1 + $0xb8] sm:$0xff]
  %v72 = vld [vmem:[%s1 + $0xc0] sm:$0xff]
  %v73 = vld [vmem:[%s1 + $0xc8] sm:$0xff]
  %v74 = vld [vmem:[%s1 + $0xd0] sm:$0xff]
  %v75 = vld [vmem:[%s1 + $0xd8] sm:$0xff]
  %v76 = vld [vmem:[%s1 + $0xe0] sm:$0xff]
  %v77 = vld [vmem:[%s1 + $0xe8] sm:$0xff]
  %v78 = vld [vmem:[%s1 + $0xf0] sm:$0xff]
  %v79 = vld [vmem:[%s1 + $0xf8] sm:$0xff]
  %v80 = vld [vmem:[%s1 + $0x100] sm:$0xff]
  %v81 = vld [vmem:[%s1 + $0x108] sm:$0xff]
  %v82 = vld [vmem:[%s1 + $0x110] sm:$0xff]
  %v83 = vld [vmem:[%s1 + $0x118] sm:$0xff]
  %v84 = vpack.c.bf16 %v49, %v48
  %v85 = vpack.c.bf16 %v51, %v50
  %v86 = vpack.c.bf16 %v53, %v52
  %v87 = vpack.c.bf16 %v55, %v54
  %v88 = vpack.c.bf16 %v57, %v56
  %v89 = vpack.c.bf16 %v59, %v58
  %v90 = vpack.c.bf16 %v61, %v60
  %v91 = vpack.c.bf16 %v63, %v62
  %v92 = vpack.c.bf16 %v65, %v64
  %v93 = vpack.c.bf16 %v67, %v66
  %v94 = vpack.c.bf16 %v69, %v68
  %v95 = vpack.c.bf16 %v71, %v70
  %v96 = vpack.c.bf16 %v73, %v72
  %v97 = vpack.c.bf16 %v75, %v74
  %v98 = vpack.c.bf16 %v77, %v76
  %v99 = vpack.c.bf16 %v79, %v78
  %v100 = vpack.c.bf16 %v81, %v80
  %v101 = vpack.c.bf16 %v83, %v82
  %v102 = vld [vmem:[%s2] sm:$0x1]
  %v104 = vlaneseq
  %v105 = vshrl.u32 %v104, 7
  %v106 = vsub.s32 0, %v105
  %v107 = vrot.slane %v102, %v106
  %vm109 = vcmask 261120
  %v111 = vsel %vm109, %v38, 0
  %v114 = vsel %vm109, %v41, 0
  %v117 = vsel %vm109, %v44, 0
  %v120 = vsel %vm109, %v47, 0
  %122 = vmatprep.subr.bf16.mxu0 0
  %123 = vmatpush1.bf16.msra.mxu0 %v91
  %124 = vmatprep.subr.bf16.mxu0 0
  %125 = vmatpush1.bf16.msra.mxu0 %v90
  %126 = vmatprep.subr.bf16.mxu0 0
  %127 = vmatpush1.bf16.msra.mxu0 %v89
  %128 = vmatprep.subr.bf16.mxu0 0
  %129 = vmatpush1.bf16.msra.mxu0 %v88
  %130 = vmatprep.subr.bf16.mxu0 0
  %131 = vmatpush1.bf16.msra.mxu0 %v87
  %132 = vmatprep.subr.bf16.mxu0 0
  %133 = vmatpush1.bf16.msra.mxu0 %v86
  %134 = vmatprep.subr.bf16.mxu0 0
  %135 = vmatpush1.bf16.msra.mxu0 %v85
  %136 = vmatprep.subr.bf16.mxu0 0
  %137 = vmatpush1.bf16.msra.mxu0 %v84
  %138 = vmatprep.subr.bf16.mxu0 0
  %139 = vmatpush2.bf16.msra.mxu0 %v99
  %140 = vmatprep.subr.bf16.mxu0 0
  %141 = vmatpush2.bf16.msra.mxu0 %v98
  %142 = vmatprep.subr.bf16.mxu0 0
  %143 = vmatpush2.bf16.msra.mxu0 %v97
  %144 = vmatprep.subr.bf16.mxu0 0
  %145 = vmatpush2.bf16.msra.mxu0 %v96
  %146 = vmatprep.subr.bf16.mxu0 0
  %147 = vmatpush2.bf16.msra.mxu0 %v95
  %148 = vmatprep.subr.bf16.mxu0 0
  %149 = vmatpush2.bf16.msra.mxu0 %v94
  %150 = vmatprep.subr.bf16.mxu0 0
  %151 = vmatpush2.bf16.msra.mxu0 %v93
  %152 = vmatprep.subr.bf16.mxu0 0
  %153 = vmatpush2.bf16.msra.mxu0 %v92
  %154 = vmatprep.mubr.bf16.mxu0 %v37
  %155 = vmatmul.mubr.bf16.gmra.mxu0 %v36
  %v156 = vpop.f32.mrf.mxu0
  %v157 = vadd.f32 %v107, %v156
  %v158 = vpop.f32.mrf.mxu0
  %v159 = vpop.f32.mrf.mxu0
  %v160 = vadd.f32 %v107, %v159
  %v161 = vpop.f32.mrf.mxu0
  %162 = vmatprep.mubr.bf16.mxu0 %v40
  %163 = vmatmul.mubr.bf16.gmra.mxu0 %v39
  %v164 = vpop.f32.mrf.mxu0
  %v165 = vadd.f32 %v107, %v164
  %v166 = vpop.f32.mrf.mxu0
  %v167 = vpop.f32.mrf.mxu0
  %v168 = vadd.f32 %v107, %v167
  %v169 = vpop.f32.mrf.mxu0
  %170 = vmatprep.mubr.bf16.mxu0 %v43
  %171 = vmatmul.mubr.bf16.gmra.mxu0 %v42
  %v172 = vpop.f32.mrf.mxu0
  %v173 = vadd.f32 %v107, %v172
  %v174 = vpop.f32.mrf.mxu0
  %v175 = vpop.f32.mrf.mxu0
  %v176 = vadd.f32 %v107, %v175
  %v177 = vpop.f32.mrf.mxu0
  %178 = vmatprep.mubr.bf16.mxu0 %v46
  %179 = vmatmul.mubr.bf16.gmra.mxu0 %v45
  %v180 = vpop.f32.mrf.mxu0
  %v181 = vadd.f32 %v107, %v180
  %v182 = vpop.f32.mrf.mxu0
  %v183 = vpop.f32.mrf.mxu0
  %v184 = vpop.f32.mrf.mxu0
  %185 = vdwg.mxu0
  %186 = vmatprep.subr.bf16.mxu0 0
  %187 = vmatpush1.bf16.msra.mxu0 0
  %188 = vmatprep.subr.bf16.mxu0 0
  %189 = vmatpush1.bf16.msra.mxu0 0
  %190 = vmatprep.subr.bf16.mxu0 0
  %191 = vmatpush1.bf16.msra.mxu0 0
  %192 = vmatprep.subr.bf16.mxu0 0
  %193 = vmatpush1.bf16.msra.mxu0 0
  %194 = vmatprep.subr.bf16.mxu0 0
  %195 = vmatpush1.bf16.msra.mxu0 0
  %196 = vmatprep.subr.bf16.mxu0 0
  %197 = vmatpush1.bf16.msra.mxu0 0
  %198 = vmatprep.subr.bf16.mxu0 0
  %199 = vmatpush1.bf16.msra.mxu0 %v101
  %200 = vmatprep.subr.bf16.mxu0 0
  %201 = vmatpush1.bf16.msra.mxu0 %v100
  %202 = vmatprep.subr.bf16.mxu0 0
  %203 = vmatpush2.bf16.msra.mxu0 0
  %204 = vmatprep.subr.bf16.mxu0 0
  %205 = vmatpush2.bf16.msra.mxu0 0
  %206 = vmatprep.subr.bf16.mxu0 0
  %207 = vmatpush2.bf16.msra.mxu0 0
  %208 = vmatprep.subr.bf16.mxu0 0
  %209 = vmatpush2.bf16.msra.mxu0 0
  %210 = vmatprep.subr.bf16.mxu0 0
  %211 = vmatpush2.bf16.msra.mxu0 0
  %212 = vmatprep.subr.bf16.mxu0 0
  %213 = vmatpush2.bf16.msra.mxu0 0
  %214 = vmatprep.subr.bf16.mxu0 0
  %215 = vmatpush2.bf16.msra.mxu0 0
  %216 = vmatprep.subr.bf16.mxu0 0
  %217 = vmatpush2.bf16.msra.mxu0 0
  %218 = vmatprep.mubr.bf16.mxu0 0
  %219 = vmatmul.mubr.bf16.gmra.mxu0 %v111
  %v220 = vpop.f32.mrf.mxu0
  %v221 = vadd.f32 %v157, %v220
  %v222 = vpop.f32.mrf.mxu0
  %v223 = vpop.f32.mrf.mxu0
  %v224 = vadd.f32 %v160, %v223
  %v225 = vpop.f32.mrf.mxu0
  %226 = vmatprep.mubr.bf16.mxu0 0
  %227 = vmatmul.mubr.bf16.gmra.mxu0 %v114
  %v228 = vpop.f32.mrf.mxu0
  %v229 = vadd.f32 %v165, %v228
  %v230 = vpop.f32.mrf.mxu0
  %v231 = vpop.f32.mrf.mxu0
  %v232 = vadd.f32 %v168, %v231
  %v233 = vpop.f32.mrf.mxu0
  %234 = vmatprep.mubr.bf16.mxu0 0
  %235 = vmatmul.mubr.bf16.gmra.mxu0 %v117
  %v236 = vpop.f32.mrf.mxu0
  %v237 = vadd.f32 %v173, %v236
  %v238 = vpop.f32.mrf.mxu0
  %v239 = vpop.f32.mrf.mxu0
  %v240 = vadd.f32 %v176, %v239
  %v241 = vpop.f32.mrf.mxu0
  %242 = vmatprep.mubr.bf16.mxu0 0
  %243 = vmatmul.mubr.bf16.gmra.mxu0 %v120
  %v244 = vpop.f32.mrf.mxu0
  %v245 = vadd.f32 %v181, %v244
  %v246 = vpop.f32.mrf.mxu0
  %v247 = vpop.f32.mrf.mxu0
  %v248 = vpop.f32.mrf.mxu0
  %249 = vdwg.mxu0
  %v250 = vmax.f32 %v221, 0.0
  %v251 = vmax.f32 %v224, 0.0
  %v252 = vmax.f32 %v229, 0.0
  %v253 = vmax.f32 %v232, 0.0
  %v254 = vmax.f32 %v237, 0.0
  %v255 = vmax.f32 %v240, 0.0
  %v256 = vmax.f32 %v245, 0.0
  %257 = vst.msk [vmem:[%s3] sm:$0xff] %vm109, %v250
  %258 = vst.msk [vmem:[%s3 + $0x8] sm:$0xff] %vm109, %v251
  %259 = vst.msk [vmem:[%s3 + $0x10] sm:$0xff] %vm109, %v252
  %260 = vst.msk [vmem:[%s3 + $0x18] sm:$0xff] %vm109, %v253
  %261 = vst.msk [vmem:[%s3 + $0x20] sm:$0xff] %vm109, %v254
  %262 = vst.msk [vmem:[%s3 + $0x28] sm:$0xff] %vm109, %v255
  %263 = vst.msk [vmem:[%s3 + $0x30] sm:$0xff] %vm109, %v256
  // Predicated region
  $region14: #{gcm_forward.6} parent=0 // pred_check
    _
  $region15: #{gcm_forward.6} parent=0 // pred_check_branch
    %265 = sbr.rel (0) target = $region17
  $region16: #{gcm_forward.6} parent=0 // pred_region
    _
  $region17: #{gcm_forward.6} parent=0 // pred_fallthru
    _
  // Predicated region
  $region18: #{gcm_forward.6} parent=0 // pred_check
    _
  $region19: #{gcm_forward.6} parent=0 // pred_check_branch
    %267 = sbr.rel (0) target = $region21
  $region20: #{gcm_forward.6} parent=0 // pred_region
    _
  $region21: #{gcm_forward.6} parent=0 // pred_fallthru
    _

// kernel: gcm_forward.9
$region0: #{gcm_forward.9}
  #allocation0 [shape = 'u32[]', space=smem, size = 0x4, offset = 0x4, fixed_abs, tag = 'smem constant byte address 0x4 - core index']
  #allocation1 [shape = 'u32[144,128]{1,0:T(1,128)}', space=vmem, size = 0x12000, scoped, tag = 'internal scratch']
  %s0 = inlined_call_operand.vmem [shape: f32[2,3,256], index: 0, kind: input, shape index: {}]
  %s1 = inlined_call_operand.vmem [shape: f32[2,2,256], index: 1, kind: input, shape index: {}]
  %s2 = inlined_call_operand.vmem [shape: f32[2,64,1], index: 2, kind: input, shape index: {}]
  %s3 = inlined_call_operand.vmem [shape: f32[64,5], index: 3, kind: input, shape index: {}]
  %s4 = inlined_call_operand.vmem [shape: f32[64,1], index: 4, kind: input, shape index: {}]
  %s5 = inlined_call_operand.vmem [shape: f32[64,64], index: 5, kind: input, shape index: {}]
  %s6 = inlined_call_operand.vmem [shape: f32[64,1], index: 6, kind: input, shape index: {}]
  %s7 = inlined_call_operand.vmem [shape: f32[64,64], index: 7, kind: input, shape index: {}]
  %s8 = inlined_call_operand.vmem [shape: f32[64,1], index: 8, kind: input, shape index: {}]
  %s9 = inlined_call_operand.vmem [shape: f32[64,64], index: 9, kind: input, shape index: {}]
  %s10 = inlined_call_operand.vmem [shape: f32[64,1], index: 10, kind: input, shape index: {}]
  %s11 = inlined_call_operand.vmem [shape: f32[3,64], index: 11, kind: input, shape index: {}]
  %s12 = inlined_call_operand.vmem [shape: f32[3,1], index: 12, kind: input, shape index: {}]
  %s13 = inlined_call_operand.vmem [shape: f32[2,3,256], index: 13, kind: output, shape index: {}]
  %s14 = sld [smem:[#allocation0]]
  $region85: #{gcm_forward.9} parent=0
    _
  %s16 = ssub.s32 1, %s14
  %s17 = scalar_select 0, %s16, %s14
  loop: start=0, step=1, limit=4
  $region2: #{gcm_forward.9} parent=0 // loop_pre_header
    _
  $region3: #{gcm_forward.9} parent=0 // loop_header
    %s19 = sphi 0, %s23
    %p20 = scmp.ge.s32.totalorder %s19, 4
    %s26 = sphi 0, %s38
    %s27 = sphi 0, %s34
    %s28 = sphi 0, %s26
    %s29 = sphi 0, %s27
    %s30 = sphi 0, %s28
    %s31 = sphi 0, %s29
    %s43 = sphi 0, %s45
    %s46 = sphi 0, %s43
    %s47 = sphi 0, %s46
    %s63 = sphi 0, %s47
    %s71 = sphi 0, %s73
    %s74 = sphi 0, %s71
    %s75 = sphi 0, %s74
    %s91 = sphi 0, %s75
    %s97 = sphi 0, %s99
    %s100 = sphi 0, %s97
    %s101 = sphi 0, %s100
    %s117 = sphi 0, %s101
    %s121 = sphi 0, %s121
    %s123 = sphi 0, %s121
    %s124 = sphi 0, %s123
    %s138 = sphi 0, %s124
    %s142 = sphi 0, %s142
    %s144 = sphi 0, %s142
    %s145 = sphi 0, %s144
    %s159 = sphi 0, %s145
    %s163 = sphi 0, %s163
    %s165 = sphi 0, %s163
    %s166 = sphi 0, %s165
    %s180 = sphi 0, %s166
    %s184 = sphi 0, %s184
    %s186 = sphi 0, %s184
    %s187 = sphi 0, %s186
    %s201 = sphi 0, %s187
    %s205 = sphi 0, %s205
    %s207 = sphi 0, %s205
    %s208 = sphi 0, %s207
    %s222 = sphi 0, %s208
    %s226 = sphi 0, %s226
    %s228 = sphi 0, %s226
    %s229 = sphi 0, %s228
    %s243 = sphi 0, %s229
    %s247 = sphi 0, %s247
    %s249 = sphi 0, %s247
    %s250 = sphi 0, %s249
    %s264 = sphi 0, %s250
    %s268 = sphi 0, %s268
    %s270 = sphi 0, %s268
    %s271 = sphi 0, %s270
    %s285 = sphi 0, %s271
    %s289 = sphi 0, %s289
    %s291 = sphi 0, %s289
    %s292 = sphi 0, %s291
    %s306 = sphi 0, %s292
    %s310 = sphi 0, %s310
    %s312 = sphi 0, %s310
    %s313 = sphi 0, %s312
    %s327 = sphi 0, %s313
    %s335 = sphi 0, %s337
    %s338 = sphi 0, %s335
    %s339 = sphi 0, %s338
    %s355 = sphi 0, %s339
  $region4: #{gcm_forward.9} parent=0 // loop_header_branch
    %22 = sbr.rel (%p20) target = $region8
  $region5: #{gcm_forward.9} parent=0 // loop_body
    %s24 = ssub.s32 %s19, 1
    %s25 = ssub.s32 %s19, 2
    %s32 = sadd.s32 1, %s27
    %p33 = scmp.ge.s32.totalorder %s32, 2
    %s34 = scalar_select %p33, 0, %s32
    %s35 = sadd.s32 1, %s26
    %s36 = scalar_select %p33, %s35, %s26
    %p37 = scmp.ge.s32.totalorder %s36, 1
    %s38 = scalar_select %p37, 0, %s36
    %s39 = ssub.s32 %s27, %s34
    %s40 = ssub.s32 %s26, %s38
    %s41 = sor.u32 %s39, %s40
    %p42 = scmp.eq.s32.totalorder %s41, 0
    %s44 = sadd.s32 %s43, 1
    %s45 = scalar_select %p42, %s43, %s44
    %p48 = pneg %p42
    %p49 = scmp.eq.s32.totalorder %s19, 1
    %p50 = por %p48, %p49
    %p51 = scmp.ne.s32.totalorder %s43, %s46
    %p52 = scmp.eq.s32.totalorder %s19, 0
    %p53 = por %p51, %p52
    %p54 = scmp.ne.s32.totalorder %s43, %s46
    %p55 = scmp.eq.s32.totalorder %s24, 1
    %p56 = por %p54, %p55
    %p57 = scmp.ne.s32.totalorder %s46, %s47
    %p58 = scmp.eq.s32.totalorder %s24, 0
    %p59 = por %p57, %p58
    %p60 = scmp.ne.s32.totalorder %s46, %s47
    %p61 = scmp.eq.s32.totalorder %s25, 1
    %p62 = por %p60, %p61
    %p64 = scmp.ne.s32.totalorder %s47, %s63
    %p65 = scmp.eq.s32.totalorder %s25, 0
    %p66 = por %p64, %p65
    %s67 = ssub.s32 %s27, %s34
    %s68 = ssub.s32 %s26, %s38
    %s69 = sor.u32 %s67, %s68
    %p70 = scmp.eq.s32.totalorder %s69, 0
    %s72 = sadd.s32 %s71, 1
    %s73 = scalar_select %p70, %s71, %s72
    %p76 = pneg %p70
    %p77 = scmp.eq.s32.totalorder %s19, 1
    %p78 = por %p76, %p77
    %p79 = scmp.ne.s32.totalorder %s71, %s74
    %p80 = scmp.eq.s32.totalorder %s19, 0
    %p81 = por %p79, %p80
    %p82 = scmp.ne.s32.totalorder %s71, %s74
    %p83 = scmp.eq.s32.totalorder %s24, 1
    %p84 = por %p82, %p83
    %p85 = scmp.ne.s32.totalorder %s74, %s75
    %p86 = scmp.eq.s32.totalorder %s24, 0
    %p87 = por %p85, %p86
    %p88 = scmp.ne.s32.totalorder %s74, %s75
    %p89 = scmp.eq.s32.totalorder %s25, 1
    %p90 = por %p88, %p89
    %p92 = scmp.ne.s32.totalorder %s75, %s91
    %p93 = scmp.eq.s32.totalorder %s25, 0
    %p94 = por %p92, %p93
    %s95 = ssub.s32 %s27, %s34
    %p96 = scmp.eq.s32.totalorder %s95, 0
    %s98 = sadd.s32 %s97, 1
    %s99 = scalar_select %p96, %s97, %s98
    %p102 = pneg %p96
    %p103 = scmp.eq.s32.totalorder %s19, 1
    %p104 = por %p102, %p103
    %p105 = scmp.ne.s32.totalorder %s97, %s100
    %p106 = scmp.eq.s32.totalorder %s19, 0
    %p107 = por %p105, %p106
    %p108 = scmp.ne.s32.totalorder %s97, %s100
    %p109 = scmp.eq.s32.totalorder %s24, 1
    %p110 = por %p108, %p109
    %p111 = scmp.ne.s32.totalorder %s100, %s101
    %p112 = scmp.eq.s32.totalorder %s24, 0
    %p113 = por %p111, %p112
    %p114 = scmp.ne.s32.totalorder %s100, %s101
    %p115 = scmp.eq.s32.totalorder %s25, 1
    %p116 = por %p114, %p115
    %p118 = scmp.ne.s32.totalorder %s101, %s117
    %p119 = scmp.eq.s32.totalorder %s25, 0
    %p120 = por %p118, %p119
    %s122 = sadd.s32 %s121, 1
    %p125 = scmp.eq.s32.totalorder %s19, 1
    %p126 = scmp.ne.s32.totalorder %s121, %s123
    %p127 = scmp.eq.s32.totalorder %s19, 0
    %p128 = por %p126, %p127
    %p129 = scmp.ne.s32.totalorder %s121, %s123
    %p130 = scmp.eq.s32.totalorder %s24, 1
    %p131 = por %p129, %p130
    %p132 = scmp.ne.s32.totalorder %s123, %s124
    %p133 = scmp.eq.s32.totalorder %s24, 0
    %p134 = por %p132, %p133
    %p135 = scmp.ne.s32.totalorder %s123, %s124
    %p136 = scmp.eq.s32.totalorder %s25, 1
    %p137 = por %p135, %p136
    %p139 = scmp.ne.s32.totalorder %s124, %s138
    %p140 = scmp.eq.s32.totalorder %s25, 0
    %p141 = por %p139, %p140
    %s143 = sadd.s32 %s142, 1
    %p146 = scmp.eq.s32.totalorder %s19, 1
    %p147 = scmp.ne.s32.totalorder %s142, %s144
    %p148 = scmp.eq.s32.totalorder %s19, 0
    %p149 = por %p147, %p148
    %p150 = scmp.ne.s32.totalorder %s142, %s144
    %p151 = scmp.eq.s32.totalorder %s24, 1
    %p152 = por %p150, %p151
    %p153 = scmp.ne.s32.totalorder %s144, %s145
    %p154 = scmp.eq.s32.totalorder %s24, 0
    %p155 = por %p153, %p154
    %p156 = scmp.ne.s32.totalorder %s144, %s145
    %p157 = scmp.eq.s32.totalorder %s25, 1
    %p158 = por %p156, %p157
    %p160 = scmp.ne.s32.totalorder %s145, %s159
    %p161 = scmp.eq.s32.totalorder %s25, 0
    %p162 = por %p160, %p161
    %s164 = sadd.s32 %s163, 1
    %p167 = scmp.eq.s32.totalorder %s19, 1
    %p168 = scmp.ne.s32.totalorder %s163, %s165
    %p169 = scmp.eq.s32.totalorder %s19, 0
    %p170 = por %p168, %p169
    %p171 = scmp.ne.s32.totalorder %s163, %s165
    %p172 = scmp.eq.s32.totalorder %s24, 1
    %p173 = por %p171, %p172
    %p174 = scmp.ne.s32.totalorder %s165, %s166
    %p175 = scmp.eq.s32.totalorder %s24, 0
    %p176 = por %p174, %p175
    %p177 = scmp.ne.s32.totalorder %s165, %s166
    %p178 = scmp.eq.s32.totalorder %s25, 1
    %p179 = por %p177, %p178
    %p181 = scmp.ne.s32.totalorder %s166, %s180
    %p182 = scmp.eq.s32.totalorder %s25, 0
    %p183 = por %p181, %p182
    %s185 = sadd.s32 %s184, 1
    %p188 = scmp.eq.s32.totalorder %s19, 1
    %p189 = scmp.ne.s32.totalorder %s184, %s186
    %p190 = scmp.eq.s32.totalorder %s19, 0
    %p191 = por %p189, %p190
    %p192 = scmp.ne.s32.totalorder %s184, %s186
    %p193 = scmp.eq.s32.totalorder %s24, 1
    %p194 = por %p192, %p193
    %p195 = scmp.ne.s32.totalorder %s186, %s187
    %p196 = scmp.eq.s32.totalorder %s24, 0
    %p197 = por %p195, %p196
    %p198 = scmp.ne.s32.totalorder %s186, %s187
    %p199 = scmp.eq.s32.totalorder %s25, 1
    %p200 = por %p198, %p199
    %p202 = scmp.ne.s32.totalorder %s187, %s201
    %p203 = scmp.eq.s32.totalorder %s25, 0
    %p204 = por %p202, %p203
    %s206 = sadd.s32 %s205, 1
    %p209 = scmp.eq.s32.totalorder %s19, 1
    %p210 = scmp.ne.s32.totalorder %s205, %s207
    %p211 = scmp.eq.s32.totalorder %s19, 0
    %p212 = por %p210, %p211
    %p213 = scmp.ne.s32.totalorder %s205, %s207
    %p214 = scmp.eq.s32.totalorder %s24, 1
    %p215 = por %p213, %p214
    %p216 = scmp.ne.s32.totalorder %s207, %s208
    %p217 = scmp.eq.s32.totalorder %s24, 0
    %p218 = por %p216, %p217
    %p219 = scmp.ne.s32.totalorder %s207, %s208
    %p220 = scmp.eq.s32.totalorder %s25, 1
    %p221 = por %p219, %p220
    %p223 = scmp.ne.s32.totalorder %s208, %s222
    %p224 = scmp.eq.s32.totalorder %s25, 0
    %p225 = por %p223, %p224
    %s227 = sadd.s32 %s226, 1
    %p230 = scmp.eq.s32.totalorder %s19, 1
    %p231 = scmp.ne.s32.totalorder %s226, %s228
    %p232 = scmp.eq.s32.totalorder %s19, 0
    %p233 = por %p231, %p232
    %p234 = scmp.ne.s32.totalorder %s226, %s228
    %p235 = scmp.eq.s32.totalorder %s24, 1
    %p236 = por %p234, %p235
    %p237 = scmp.ne.s32.totalorder %s228, %s229
    %p238 = scmp.eq.s32.totalorder %s24, 0
    %p239 = por %p237, %p238
    %p240 = scmp.ne.s32.totalorder %s228, %s229
    %p241 = scmp.eq.s32.totalorder %s25, 1
    %p242 = por %p240, %p241
    %p244 = scmp.ne.s32.totalorder %s229, %s243
    %p245 = scmp.eq.s32.totalorder %s25, 0
    %p246 = por %p244, %p245
    %s248 = sadd.s32 %s247, 1
    %p251 = scmp.eq.s32.totalorder %s19, 1
    %p252 = scmp.ne.s32.totalorder %s247, %s249
    %p253 = scmp.eq.s32.totalorder %s19, 0
    %p254 = por %p252, %p253
    %p255 = scmp.ne.s32.totalorder %s247, %s249
    %p256 = scmp.eq.s32.totalorder %s24, 1
    %p257 = por %p255, %p256
    %p258 = scmp.ne.s32.totalorder %s249, %s250
    %p259 = scmp.eq.s32.totalorder %s24, 0
    %p260 = por %p258, %p259
    %p261 = scmp.ne.s32.totalorder %s249, %s250
    %p262 = scmp.eq.s32.totalorder %s25, 1
    %p263 = por %p261, %p262
    %p265 = scmp.ne.s32.totalorder %s250, %s264
    %p266 = scmp.eq.s32.totalorder %s25, 0
    %p267 = por %p265, %p266
    %s269 = sadd.s32 %s268, 1
    %p272 = scmp.eq.s32.totalorder %s19, 1
    %p273 = scmp.ne.s32.totalorder %s268, %s270
    %p274 = scmp.eq.s32.totalorder %s19, 0
    %p275 = por %p273, %p274
    %p276 = scmp.ne.s32.totalorder %s268, %s270
    %p277 = scmp.eq.s32.totalorder %s24, 1
    %p278 = por %p276, %p277
    %p279 = scmp.ne.s32.totalorder %s270, %s271
    %p280 = scmp.eq.s32.totalorder %s24, 0
    %p281 = por %p279, %p280
    %p282 = scmp.ne.s32.totalorder %s270, %s271
    %p283 = scmp.eq.s32.totalorder %s25, 1
    %p284 = por %p282, %p283
    %p286 = scmp.ne.s32.totalorder %s271, %s285
    %p287 = scmp.eq.s32.totalorder %s25, 0
    %p288 = por %p286, %p287
    %s290 = sadd.s32 %s289, 1
    %p293 = scmp.eq.s32.totalorder %s19, 1
    %p294 = scmp.ne.s32.totalorder %s289, %s291
    %p295 = scmp.eq.s32.totalorder %s19, 0
    %p296 = por %p294, %p295
    %p297 = scmp.ne.s32.totalorder %s289, %s291
    %p298 = scmp.eq.s32.totalorder %s24, 1
    %p299 = por %p297, %p298
    %p300 = scmp.ne.s32.totalorder %s291, %s292
    %p301 = scmp.eq.s32.totalorder %s24, 0
    %p302 = por %p300, %p301
    %p303 = scmp.ne.s32.totalorder %s291, %s292
    %p304 = scmp.eq.s32.totalorder %s25, 1
    %p305 = por %p303, %p304
    %p307 = scmp.ne.s32.totalorder %s292, %s306
    %p308 = scmp.eq.s32.totalorder %s25, 0
    %p309 = por %p307, %p308
    %s311 = sadd.s32 %s310, 1
    %p314 = scmp.eq.s32.totalorder %s19, 1
    %p315 = scmp.ne.s32.totalorder %s310, %s312
    %p316 = scmp.eq.s32.totalorder %s19, 0
    %p317 = por %p315, %p316
    %p318 = scmp.ne.s32.totalorder %s310, %s312
    %p319 = scmp.eq.s32.totalorder %s24, 1
    %p320 = por %p318, %p319
    %p321 = scmp.ne.s32.totalorder %s312, %s313
    %p322 = scmp.eq.s32.totalorder %s24, 0
    %p323 = por %p321, %p322
    %p324 = scmp.ne.s32.totalorder %s312, %s313
    %p325 = scmp.eq.s32.totalorder %s25, 1
    %p326 = por %p324, %p325
    %p328 = scmp.ne.s32.totalorder %s313, %s327
    %p329 = scmp.eq.s32.totalorder %s25, 0
    %p330 = por %p328, %p329
    %s331 = ssub.s32 %s27, %s34
    %s332 = ssub.s32 %s26, %s38
    %s333 = sor.u32 %s331, %s332
    %p334 = scmp.eq.s32.totalorder %s333, 0
    %s336 = sadd.s32 %s335, 1
    %s337 = scalar_select %p334, %s335, %s336
    %p340 = pneg %p334
    %p341 = scmp.eq.s32.totalorder %s19, 1
    %p342 = por %p340, %p341
    %p343 = scmp.ne.s32.totalorder %s335, %s338
    %p344 = scmp.eq.s32.totalorder %s19, 0
    %p345 = por %p343, %p344
    %p346 = scmp.ne.s32.totalorder %s335, %s338
    %p347 = scmp.eq.s32.totalorder %s24, 1
    %p348 = por %p346, %p347
    %p349 = scmp.ne.s32.totalorder %s338, %s339
    %p350 = scmp.eq.s32.totalorder %s24, 0
    %p351 = por %p349, %p350
    %p352 = scmp.ne.s32.totalorder %s338, %s339
    %p353 = scmp.eq.s32.totalorder %s25, 1
    %p354 = por %p352, %p353
    %p356 = scmp.ne.s32.totalorder %s339, %s355
    %p357 = scmp.eq.s32.totalorder %s25, 0
    %p358 = por %p356, %p357
    %p359 = scmp.le.s32.totalorder 1, %s19
    %p360 = scmp.lt.s32.totalorder %s19, 3
    %p361 = pnand %p359, %p360
    %p362 = pneg %p361
    // Predicated region
    $region9: #{gcm_forward.9} parent=5 // pred_check
      _
    $region10: #{gcm_forward.9} parent=5 // pred_check_branch
      %364 = sbr.rel (%p361) target = $region12
    $region11: #{gcm_forward.9} parent=5 // pred_region
      %s365 = ssub.s32 %s19, 1
      // Predicated region
      $region13: #{gcm_forward.9} parent=11 // pred_check
        %p366 = pneg %p134
      $region14: #{gcm_forward.9} parent=11 // pred_check_branch
        %368 = sbr.rel (%p366) target = $region16
      $region15: #{gcm_forward.9} parent=11 // pred_region
        _
      $region16: #{gcm_forward.9} parent=11 // pred_fallthru
        _
      // Predicated region
      $region17: #{gcm_forward.9} parent=11 // pred_check
        %p369 = pneg %p155
      $region18: #{gcm_forward.9} parent=11 // pred_check_branch
        %371 = sbr.rel (%p369) target = $region20
      $region19: #{gcm_forward.9} parent=11 // pred_region
        _
      $region20: #{gcm_forward.9} parent=11 // pred_fallthru
        _
      // Predicated region
      $region21: #{gcm_forward.9} parent=11 // pred_check
        %p372 = pneg %p176
      $region22: #{gcm_forward.9} parent=11 // pred_check_branch
        %374 = sbr.rel (%p372) target = $region24
      $region23: #{gcm_forward.9} parent=11 // pred_region
        _
      $region24: #{gcm_forward.9} parent=11 // pred_fallthru
        _
      // Predicated region
      $region25: #{gcm_forward.9} parent=11 // pred_check
        %p375 = pneg %p197
      $region26: #{gcm_forward.9} parent=11 // pred_check_branch
        %377 = sbr.rel (%p375) target = $region28
      $region27: #{gcm_forward.9} parent=11 // pred_region
        _
      $region28: #{gcm_forward.9} parent=11 // pred_fallthru
        _
      // Predicated region
      $region29: #{gcm_forward.9} parent=11 // pred_check
        %p378 = pneg %p218
      $region30: #{gcm_forward.9} parent=11 // pred_check_branch
        %380 = sbr.rel (%p378) target = $region32
      $region31: #{gcm_forward.9} parent=11 // pred_region
        _
      $region32: #{gcm_forward.9} parent=11 // pred_fallthru
        _
      // Predicated region
      $region33: #{gcm_forward.9} parent=11 // pred_check
        %p381 = pneg %p239
      $region34: #{gcm_forward.9} parent=11 // pred_check_branch
        %383 = sbr.rel (%p381) target = $region36
      $region35: #{gcm_forward.9} parent=11 // pred_region
        _
      $region36: #{gcm_forward.9} parent=11 // pred_fallthru
        _
      // Predicated region
      $region37: #{gcm_forward.9} parent=11 // pred_check
        %p384 = pneg %p260
      $region38: #{gcm_forward.9} parent=11 // pred_check_branch
        %386 = sbr.rel (%p384) target = $region40
      $region39: #{gcm_forward.9} parent=11 // pred_region
        _
      $region40: #{gcm_forward.9} parent=11 // pred_fallthru
        _
      // Predicated region
      $region41: #{gcm_forward.9} parent=11 // pred_check
        %p387 = pneg %p281
      $region42: #{gcm_forward.9} parent=11 // pred_check_branch
        %389 = sbr.rel (%p387) target = $region44
      $region43: #{gcm_forward.9} parent=11 // pred_region
        _
      $region44: #{gcm_forward.9} parent=11 // pred_fallthru
        _
      // Predicated region
      $region45: #{gcm_forward.9} parent=11 // pred_check
        %p390 = pneg %p302
      $region46: #{gcm_forward.9} parent=11 // pred_check_branch
        %392 = sbr.rel (%p390) target = $region48
      $region47: #{gcm_forward.9} parent=11 // pred_region
        _
      $region48: #{gcm_forward.9} parent=11 // pred_fallthru
        _
      // Predicated region
      $region49: #{gcm_forward.9} parent=11 // pred_check
        %p393 = pneg %p323
      $region50: #{gcm_forward.9} parent=11 // pred_check_branch
        %395 = sbr.rel (%p393) target = $region52
      $region51: #{gcm_forward.9} parent=11 // pred_region
        _
      $region52: #{gcm_forward.9} parent=11 // pred_fallthru
        _
    $region12: #{gcm_forward.9} parent=5 // pred_fallthru
      _
    %p396 = scmp.lt.s32.totalorder %s19, 2
    // Predicated region
    $region53: #{gcm_forward.9} parent=5 // pred_check
      %p397 = pneg %p396
    $region54: #{gcm_forward.9} parent=5 // pred_check_branch
      %399 = sbr.rel (%p397) target = $region56
    $region55: #{gcm_forward.9} parent=5 // pred_region
      // Predicated region
      $region57: #{gcm_forward.9} parent=55 // pred_check
        %p400 = pneg %p53
      $region58: #{gcm_forward.9} parent=55 // pred_check_branch
        %402 = sbr.rel (%p400) target = $region60
      $region59: #{gcm_forward.9} parent=55 // pred_region
        %s403 = smul.u32 2, %s26
        %p404 = scmp.lt.s32.totalorder %s27, 1
        %s405 = scalar_select %p404, %s27, 1
        %p406 = scmp.lt.s32.totalorder %s403, 1
        %s407 = scalar_select %p406, %s403, 1
        %s408 = smul.addr %s405, 2
        %s409 = sadd.s32 %s407, %s408
        %s410 = smul.addr %s409, 4
        %s411 = scalar_lea.vmem %s0, %s410
        %s412 = smul.u32 2, %s26
      $region60: #{gcm_forward.9} parent=55 // pred_fallthru
        _
      // Predicated region
      $region61: #{gcm_forward.9} parent=55 // pred_check
        %p413 = pneg %p81
      $region62: #{gcm_forward.9} parent=55 // pred_check_branch
        %415 = sbr.rel (%p413) target = $region64
      $region63: #{gcm_forward.9} parent=55 // pred_region
        %s416 = smul.u32 2, %s26
        %p417 = scmp.lt.s32.totalorder %s27, 1
        %s418 = scalar_select %p417, %s27, 1
        %p419 = scmp.lt.s32.totalorder %s416, 1
        %s420 = scalar_select %p419, %s416, 1
        %s421 = smul.addr %s418, 2
        %s422 = sadd.s32 %s420, %s421
        %s423 = smul.addr %s422, 2
        %s424 = scalar_lea.vmem %s1, %s423
        %s425 = smul.u32 2, %s26
      $region64: #{gcm_forward.9} parent=55 // pred_fallthru
        _
      // Predicated region
      $region65: #{gcm_forward.9} parent=55 // pred_check
        %p426 = pneg %p107
      $region66: #{gcm_forward.9} parent=55 // pred_check_branch
        %428 = sbr.rel (%p426) target = $region68
      $region67: #{gcm_forward.9} parent=55 // pred_region
        %p429 = scmp.lt.s32.totalorder %s27, 1
        %s430 = scalar_select %p429, %s27, 1
        %s431 = smul.addr %s430, 8
        %s432 = smul.addr %s431, 8
        %s433 = scalar_lea.vmem %s2, %s432
      $region68: #{gcm_forward.9} parent=55 // pred_fallthru
        _
    $region56: #{gcm_forward.9} parent=5 // pred_fallthru
      _
    %p434 = scmp.le.s32.totalorder 1, %s19
    %p435 = scmp.lt.s32.totalorder %s19, 3
    %p436 = pnand %p434, %p435
    %p437 = pneg %p436
    // Predicated region
    $region69: #{gcm_forward.9} parent=5 // pred_check
      _
    $region70: #{gcm_forward.9} parent=5 // pred_check_branch
      %439 = sbr.rel (%p436) target = $region72
    $region71: #{gcm_forward.9} parent=5 // pred_region
      %s440 = ssub.s32 %s19, 1
      %s441 = smul.u32 2, %s28
      %p442 = scmp.lt.s32.totalorder %s29, 1
      %s443 = scalar_select %p442, %s29, 1
      %p444 = scmp.lt.s32.totalorder %s441, 1
      %s445 = scalar_select %p444, %s441, 1
      %s446 = smul.addr %s443, 2
      %s447 = sadd.s32 %s445, %s446
      %s448 = smul.addr %s447, 4
      %s449 = scalar_lea.vmem %s0, %s448
      %p450 = pneg %p59
      %p451 = pneg %p56
      %s452 = smul.u32 2, %s28
      %p453 = scmp.lt.s32.totalorder %s29, 1
      %s454 = scalar_select %p453, %s29, 1
      %p455 = scmp.lt.s32.totalorder %s452, 1
      %s456 = scalar_select %p455, %s452, 1
      %s457 = smul.addr %s454, 2
      %s458 = sadd.s32 %s456, %s457
      %s459 = smul.addr %s458, 2
      %s460 = scalar_lea.vmem %s1, %s459
      %p461 = pneg %p87
      %p462 = pneg %p84
      %p463 = scmp.lt.s32.totalorder %s29, 1
      %s464 = scalar_select %p463, %s29, 1
      %s465 = smul.addr %s464, 8
      %s466 = smul.addr %s465, 8
      %s467 = scalar_lea.vmem %s2, %s466
      %p468 = pneg %p113
      %p469 = pneg %p110
      %p470 = pneg %p134
      %p471 = pneg %p131
      %p472 = pneg %p155
      %p473 = pneg %p152
      %p474 = pneg %p176
      %p475 = pneg %p173
      %p476 = pneg %p197
      %p477 = pneg %p194
      %p478 = pneg %p218
      %p479 = pneg %p215
      %p480 = pneg %p239
      %p481 = pneg %p236
      %p482 = pneg %p260
      %p483 = pneg %p257
      %p484 = pneg %p281
      %p485 = pneg %p278
      %p486 = pneg %p302
      %p487 = pneg %p299
      %p488 = pneg %p323
      %p489 = pneg %p320
      %p490 = pneg %p351
      %p491 = pneg %p348
      %s492 = smul.u32 2, %s28
      %p493 = scmp.lt.s32.totalorder %s29, 1
      %s494 = scalar_select %p493, %s29, 1
      %p495 = scmp.lt.s32.totalorder %s492, 1
      %s496 = scalar_select %p495, %s492, 1
      %s497 = smul.addr %s494, 2
      %s498 = sadd.s32 %s496, %s497
      %s499 = smul.addr %s498, 4
      %s500 = scalar_lea.vmem %s13, %s499
      %s501 = smul.u32 2, %s28
      %p502 = scmp.lt.s32.totalorder %s29, 1
      %s503 = scalar_select %p502, %s29, 1
      %p504 = scmp.lt.s32.totalorder %s501, 1
      %s505 = scalar_select %p504, %s501, 1
      %s506 = smul.addr %s503, 2
      %s507 = sadd.s32 %s505, %s506
      %s508 = smul.addr %s507, 4
      %s509 = scalar_lea.vmem %s0, %s508
      %s510 = smul.u32 2, %s28
      %s511 = smul.u32 2, %s28
      %p512 = scmp.lt.s32.totalorder %s29, 1
      %s513 = scalar_select %p512, %s29, 1
      %p514 = scmp.lt.s32.totalorder %s511, 1
      %s515 = scalar_select %p514, %s511, 1
      %s516 = smul.addr %s513, 2
      %s517 = sadd.s32 %s515, %s516
      %s518 = smul.addr %s517, 2
      %s519 = scalar_lea.vmem %s1, %s518
      %s520 = smul.u32 2, %s28
      %p521 = scmp.lt.s32.totalorder %s29, 1
      %s522 = scalar_select %p521, %s29, 1
      %s523 = smul.addr %s522, 8
      %s524 = smul.addr %s523, 8
      %s525 = scalar_lea.vmem %s2, %s524
      %s526 = smul.u32 2, %s28
      %p527 = scmp.lt.s32.totalorder %s29, 1
      %s528 = scalar_select %p527, %s29, 1
      %p529 = scmp.lt.s32.totalorder %s526, 1
      %s530 = scalar_select %p529, %s526, 1
      %s531 = smul.addr %s528, 2
      %s532 = sadd.s32 %s530, %s531
      %s533 = smul.addr %s532, 4
      %s534 = scalar_lea.vmem %s13, %s533
      %s535 = smul.u32 2, %s28
      %v537 = vld [vmem:[%s509] sm:$0x77]
      %v538 = vld [vmem:[%s519] sm:$0xf]
      %v539 = vld [vmem:[%s3] sm:$0xff]
      %v540 = vld [vmem:[%s3 + $0x8] sm:$0xff]
      %v541 = vld [vmem:[%s3 + $0x10] sm:$0xff]
      %v542 = vld [vmem:[%s3 + $0x18] sm:$0xff]
      %v543 = vld [vmem:[%s3 + $0x20] sm:$0xff]
      %v544 = vld [vmem:[%s3 + $0x28] sm:$0xff]
      %v545 = vld [vmem:[%s3 + $0x30] sm:$0xff]
      %v546 = vld [vmem:[%s3 + $0x38] sm:$0xff]
      %v547 = vld [vmem:[%s4] sm:$0xff]
      %v548 = vld [vmem:[%s4 + $0x8] sm:$0xff]
      %v549 = vld [vmem:[%s4 + $0x10] sm:$0xff]
      %v550 = vld [vmem:[%s4 + $0x18] sm:$0xff]
      %v551 = vld [vmem:[%s4 + $0x20] sm:$0xff]
      %v552 = vld [vmem:[%s4 + $0x28] sm:$0xff]
      %v553 = vld [vmem:[%s4 + $0x30] sm:$0xff]
      %v554 = vld [vmem:[%s4 + $0x38] sm:$0xff]
      %556 = vset.pattern.permute.xlu0 0
      %557 = vperm.xlu0 %556, %v539
      %v558 = vpop.permute.xlu0 %557
      %561 = vset.pattern.permute.xlu0 0
      %562 = vperm.xlu0 %561, %v540
      %v563 = vpop.permute.xlu0 %562
      %566 = vset.pattern.permute.xlu0 0
      %567 = vperm.xlu0 %566, %v541
      %v568 = vpop.permute.xlu0 %567
      %571 = vset.pattern.permute.xlu0 0
      %572 = vperm.xlu0 %571, %v542
      %v573 = vpop.permute.xlu0 %572
      %576 = vset.pattern.permute.xlu0 0
      %577 = vperm.xlu0 %576, %v543
      %v578 = vpop.permute.xlu0 %577
      %581 = vset.pattern.permute.xlu0 0
      %582 = vperm.xlu0 %581, %v544
      %v583 = vpop.permute.xlu0 %582
      %586 = vset.pattern.permute.xlu0 0
      %587 = vperm.xlu0 %586, %v545
      %v588 = vpop.permute.xlu0 %587
      %591 = vset.pattern.permute.xlu0 0
      %592 = vperm.xlu0 %591, %v546
      %v593 = vpop.permute.xlu0 %592
      %v596 = vlaneseq
      %v597 = vshrl.u32 %v596, 7
      %v598 = vsub.s32 0, %v597
      %v599 = vrot.slane %v537, %v598
      %v600 = vlaneseq
      %v601 = vshrl.u32 %v600, 7
      %v602 = vsub.s32 4, %v601
      %v603 = vrot.slane %v537, %v602
      %v606 = vlaneseq
      %v607 = vshrl.u32 %v606, 7
      %v608 = vsub.s32 0, %v607
      %v609 = vrot.slane %v599, %v608
      %v610 = vlaneseq
      %v611 = vshrl.u32 %v610, 7
      %v612 = vsub.s32 0, %v611
      %v613 = vrot.slane %v603, %v612
      %v614 = vmul.f32 %v558, %v609
      %v615 = vmul.f32 %v558, %v613
      %v616 = vmul.f32 %v563, %v609
      %v617 = vmul.f32 %v563, %v613
      %v618 = vmul.f32 %v568, %v609
      %v619 = vmul.f32 %v568, %v613
      %v620 = vmul.f32 %v573, %v609
      %v621 = vmul.f32 %v573, %v613
      %v622 = vmul.f32 %v578, %v609
      %v623 = vmul.f32 %v578, %v613
      %v624 = vmul.f32 %v583, %v609
      %v625 = vmul.f32 %v583, %v613
      %v626 = vmul.f32 %v588, %v609
      %v627 = vmul.f32 %v588, %v613
      %v628 = vmul.f32 %v593, %v609
      %v629 = vmul.f32 %v593, %v613
      %631 = vset.pattern.permute.xlu0 0
      %632 = vperm.xlu0 %631, %v547
      %v633 = vpop.permute.xlu0 %632
      %636 = vset.pattern.permute.xlu0 0
      %637 = vperm.xlu0 %636, %v548
      %v638 = vpop.permute.xlu0 %637
      %641 = vset.pattern.permute.xlu0 0
      %642 = vperm.xlu0 %641, %v549
      %v643 = vpop.permute.xlu0 %642
      %646 = vset.pattern.permute.xlu0 0
      %647 = vperm.xlu0 %646, %v550
      %v648 = vpop.permute.xlu0 %647
      %651 = vset.pattern.permute.xlu0 0
      %652 = vperm.xlu0 %651, %v551
      %v653 = vpop.permute.xlu0 %652
      %656 = vset.pattern.permute.xlu0 0
      %657 = vperm.xlu0 %656, %v552
      %v658 = vpop.permute.xlu0 %657
      %661 = vset.pattern.permute.xlu0 0
      %662 = vperm.xlu0 %661, %v553
      %v663 = vpop.permute.xlu0 %662
      %666 = vset.pattern.permute.xlu0 0
      %667 = vperm.xlu0 %666, %v554
      %v668 = vpop.permute.xlu0 %667
      %v670 = vadd.f32 %v633, %v614
      %v671 = vadd.f32 %v633, %v615
      %v672 = vadd.f32 %v638, %v616
      %v673 = vadd.f32 %v638, %v617
      %v674 = vadd.f32 %v643, %v618
      %v675 = vadd.f32 %v643, %v619
      %v676 = vadd.f32 %v648, %v620
      %v677 = vadd.f32 %v648, %v621
      %v678 = vadd.f32 %v653, %v622
      %v679 = vadd.f32 %v653, %v623
      %v680 = vadd.f32 %v658, %v624
      %v681 = vadd.f32 %v658, %v625
      %v682 = vadd.f32 %v663, %v626
      %v683 = vadd.f32 %v663, %v627
      %v684 = vadd.f32 %v668, %v628
      %v685 = vadd.f32 %v668, %v629
      %686 = vset.pattern.permute.xlu0 1
      %687 = vperm.xlu0 %686, %v539
      %v688 = vpop.permute.xlu0 %687
      %690 = vset.pattern.permute.xlu0 1
      %691 = vperm.xlu0 %690, %v540
      %v692 = vpop.permute.xlu0 %691
      %694 = vset.pattern.permute.xlu0 1
      %695 = vperm.xlu0 %694, %v541
      %v696 = vpop.permute.xlu0 %695
      %698 = vset.pattern.permute.xlu0 1
      %699 = vperm.xlu0 %698, %v542
      %v700 = vpop.permute.xlu0 %699
      %702 = vset.pattern.permute.xlu0 1
      %703 = vperm.xlu0 %702, %v543
      %v704 = vpop.permute.xlu0 %703
      %706 = vset.pattern.permute.xlu0 1
      %707 = vperm.xlu0 %706, %v544
      %v708 = vpop.permute.xlu0 %707
      %710 = vset.pattern.permute.xlu0 1
      %711 = vperm.xlu0 %710, %v545
      %v712 = vpop.permute.xlu0 %711
      %714 = vset.pattern.permute.xlu0 1
      %715 = vperm.xlu0 %714, %v546
      %v716 = vpop.permute.xlu0 %715
      %v718 = vlaneseq
      %v719 = vshrl.u32 %v718, 7
      %v720 = vsub.s32 1, %v719
      %v721 = vrot.slane %v537, %v720
      %v722 = vlaneseq
      %v723 = vshrl.u32 %v722, 7
      %v724 = vsub.s32 5, %v723
      %v725 = vrot.slane %v537, %v724
      %v728 = vlaneseq
      %v729 = vshrl.u32 %v728, 7
      %v730 = vsub.s32 1, %v729
      %v731 = vrot.slane %v721, %v730
      %v732 = vlaneseq
      %v733 = vshrl.u32 %v732, 7
      %v734 = vsub.s32 1, %v733
      %v735 = vrot.slane %v725, %v734
      %v736 = vmul.f32 %v688, %v731
      %v737 = vmul.f32 %v688, %v735
      %v738 = vmul.f32 %v692, %v731
      %v739 = vmul.f32 %v692, %v735
      %v740 = vmul.f32 %v696, %v731
      %v741 = vmul.f32 %v696, %v735
      %v742 = vmul.f32 %v700, %v731
      %v743 = vmul.f32 %v700, %v735
      %v744 = vmul.f32 %v704, %v731
      %v745 = vmul.f32 %v704, %v735
      %v746 = vmul.f32 %v708, %v731
      %v747 = vmul.f32 %v708, %v735
      %v748 = vmul.f32 %v712, %v731
      %v749 = vmul.f32 %v712, %v735
      %v750 = vmul.f32 %v716, %v731
      %v751 = vmul.f32 %v716, %v735
      %v752 = vadd.f32 %v670, %v736
      %v753 = vadd.f32 %v671, %v737
      %v754 = vadd.f32 %v672, %v738
      %v755 = vadd.f32 %v673, %v739
      %v756 = vadd.f32 %v674, %v740
      %v757 = vadd.f32 %v675, %v741
      %v758 = vadd.f32 %v676, %v742
      %v759 = vadd.f32 %v677, %v743
      %v760 = vadd.f32 %v678, %v744
      %v761 = vadd.f32 %v679, %v745
      %v762 = vadd.f32 %v680, %v746
      %v763 = vadd.f32 %v681, %v747
      %v764 = vadd.f32 %v682, %v748
      %v765 = vadd.f32 %v683, %v749
      %v766 = vadd.f32 %v684, %v750
      %v767 = vadd.f32 %v685, %v751
      %768 = vset.pattern.permute.xlu0 2
      %769 = vperm.xlu0 %768, %v539
      %v770 = vpop.permute.xlu0 %769
      %772 = vset.pattern.permute.xlu0 2
      %773 = vperm.xlu0 %772, %v540
      %v774 = vpop.permute.xlu0 %773
      %776 = vset.pattern.permute.xlu0 2
      %777 = vperm.xlu0 %776, %v541
      %v778 = vpop.permute.xlu0 %777
      %780 = vset.pattern.permute.xlu0 2
      %781 = vperm.xlu0 %780, %v542
      %v782 = vpop.permute.xlu0 %781
      %784 = vset.pattern.permute.xlu0 2
      %785 = vperm.xlu0 %784, %v543
      %v786 = vpop.permute.xlu0 %785
      %788 = vset.pattern.permute.xlu0 2
      %789 = vperm.xlu0 %788, %v544
      %v790 = vpop.permute.xlu0 %789
      %792 = vset.pattern.permute.xlu0 2
      %793 = vperm.xlu0 %792, %v545
      %v794 = vpop.permute.xlu0 %793
      %796 = vset.pattern.permute.xlu0 2
      %797 = vperm.xlu0 %796, %v546
      %v798 = vpop.permute.xlu0 %797
      %v800 = vlaneseq
      %v801 = vshrl.u32 %v800, 7
      %v802 = vsub.s32 2, %v801
      %v803 = vrot.slane %v537, %v802
      %v804 = vlaneseq
      %v805 = vshrl.u32 %v804, 7
      %v806 = vsub.s32 6, %v805
      %v807 = vrot.slane %v537, %v806
      %v810 = vlaneseq
      %v811 = vshrl.u32 %v810, 7
      %v812 = vsub.s32 2, %v811
      %v813 = vrot.slane %v803, %v812
      %v814 = vlaneseq
      %v815 = vshrl.u32 %v814, 7
      %v816 = vsub.s32 2, %v815
      %v817 = vrot.slane %v807, %v816
      %v818 = vmul.f32 %v770, %v813
      %v819 = vmul.f32 %v770, %v817
      %v820 = vmul.f32 %v774, %v813
      %v821 = vmul.f32 %v774, %v817
      %v822 = vmul.f32 %v778, %v813
      %v823 = vmul.f32 %v778, %v817
      %v824 = vmul.f32 %v782, %v813
      %v825 = vmul.f32 %v782, %v817
      %v826 = vmul.f32 %v786, %v813
      %v827 = vmul.f32 %v786, %v817
      %v828 = vmul.f32 %v790, %v813
      %v829 = vmul.f32 %v790, %v817
      %v830 = vmul.f32 %v794, %v813
      %v831 = vmul.f32 %v794, %v817
      %v832 = vmul.f32 %v798, %v813
      %v833 = vmul.f32 %v798, %v817
      %v834 = vadd.f32 %v752, %v818
      %v835 = vadd.f32 %v753, %v819
      %v836 = vadd.f32 %v754, %v820
      %v837 = vadd.f32 %v755, %v821
      %v838 = vadd.f32 %v756, %v822
      %v839 = vadd.f32 %v757, %v823
      %v840 = vadd.f32 %v758, %v824
      %v841 = vadd.f32 %v759, %v825
      %v842 = vadd.f32 %v760, %v826
      %v843 = vadd.f32 %v761, %v827
      %v844 = vadd.f32 %v762, %v828
      %v845 = vadd.f32 %v763, %v829
      %v846 = vadd.f32 %v764, %v830
      %v847 = vadd.f32 %v765, %v831
      %v848 = vadd.f32 %v766, %v832
      %v849 = vadd.f32 %v767, %v833
      %850 = vset.pattern.permute.xlu0 3
      %851 = vperm.xlu0 %850, %v539
      %v852 = vpop.permute.xlu0 %851
      %854 = vset.pattern.permute.xlu0 3
      %855 = vperm.xlu0 %854, %v540
      %v856 = vpop.permute.xlu0 %855
      %858 = vset.pattern.permute.xlu0 3
      %859 = vperm.xlu0 %858, %v541
      %v860 = vpop.permute.xlu0 %859
      %862 = vset.pattern.permute.xlu0 3
      %863 = vperm.xlu0 %862, %v542
      %v864 = vpop.permute.xlu0 %863
      %866 = vset.pattern.permute.xlu0 3
      %867 = vperm.xlu0 %866, %v543
      %v868 = vpop.permute.xlu0 %867
      %870 = vset.pattern.permute.xlu0 3
      %871 = vperm.xlu0 %870, %v544
      %v872 = vpop.permute.xlu0 %871
      %874 = vset.pattern.permute.xlu0 3
      %875 = vperm.xlu0 %874, %v545
      %v876 = vpop.permute.xlu0 %875
      %878 = vset.pattern.permute.xlu0 3
      %879 = vperm.xlu0 %878, %v546
      %v880 = vpop.permute.xlu0 %879
      %v883 = vlaneseq
      %v884 = vshrl.u32 %v883, 7
      %v885 = vsub.s32 0, %v884
      %v886 = vrot.slane %v538, %v885
      %v887 = vlaneseq
      %v888 = vshrl.u32 %v887, 7
      %v889 = vsub.s32 2, %v888
      %v890 = vrot.slane %v538, %v889
      %v893 = vlaneseq
      %v894 = vshrl.u32 %v893, 7
      %v895 = vsub.s32 0, %v894
      %v896 = vrot.slane %v886, %v895
      %v897 = vlaneseq
      %v898 = vshrl.u32 %v897, 7
      %v899 = vsub.s32 0, %v898
      %v900 = vrot.slane %v890, %v899
      %v901 = vmul.f32 %v852, %v896
      %v902 = vmul.f32 %v852, %v900
      %v903 = vmul.f32 %v856, %v896
      %v904 = vmul.f32 %v856, %v900
      %v905 = vmul.f32 %v860, %v896
      %v906 = vmul.f32 %v860, %v900
      %v907 = vmul.f32 %v864, %v896
      %v908 = vmul.f32 %v864, %v900
      %v909 = vmul.f32 %v868, %v896
      %v910 = vmul.f32 %v868, %v900
      %v911 = vmul.f32 %v872, %v896
      %v912 = vmul.f32 %v872, %v900
      %v913 = vmul.f32 %v876, %v896
      %v914 = vmul.f32 %v876, %v900
      %v915 = vmul.f32 %v880, %v896
      %v916 = vmul.f32 %v880, %v900
      %v917 = vadd.f32 %v834, %v901
      %v918 = vadd.f32 %v835, %v902
      %v919 = vadd.f32 %v836, %v903
      %v920 = vadd.f32 %v837, %v904
      %v921 = vadd.f32 %v838, %v905
      %v922 = vadd.f32 %v839, %v906
      %v923 = vadd.f32 %v840, %v907
      %v924 = vadd.f32 %v841, %v908
      %v925 = vadd.f32 %v842, %v909
      %v926 = vadd.f32 %v843, %v910
      %v927 = vadd.f32 %v844, %v911
      %v928 = vadd.f32 %v845, %v912
      %v929 = vadd.f32 %v846, %v913
      %v930 = vadd.f32 %v847, %v914
      %v931 = vadd.f32 %v848, %v915
      %v932 = vadd.f32 %v849, %v916
      %933 = vset.pattern.permute.xlu0 4
      %934 = vperm.xlu0 %933, %v539
      %v935 = vpop.permute.xlu0 %934
      %937 = vset.pattern.permute.xlu0 4
      %938 = vperm.xlu0 %937, %v540
      %v939 = vpop.permute.xlu0 %938
      %941 = vset.pattern.permute.xlu0 4
      %942 = vperm.xlu0 %941, %v541
      %v943 = vpop.permute.xlu0 %942
      %945 = vset.pattern.permute.xlu0 4
      %946 = vperm.xlu0 %945, %v542
      %v947 = vpop.permute.xlu0 %946
      %949 = vset.pattern.permute.xlu0 4
      %950 = vperm.xlu0 %949, %v543
      %v951 = vpop.permute.xlu0 %950
      %953 = vset.pattern.permute.xlu0 4
      %954 = vperm.xlu0 %953, %v544
      %v955 = vpop.permute.xlu0 %954
      %957 = vset.pattern.permute.xlu0 4
      %958 = vperm.xlu0 %957, %v545
      %v959 = vpop.permute.xlu0 %958
      %961 = vset.pattern.permute.xlu0 4
      %962 = vperm.xlu0 %961, %v546
      %v963 = vpop.permute.xlu0 %962
      %v965 = vlaneseq
      %v966 = vshrl.u32 %v965, 7
      %v967 = vsub.s32 1, %v966
      %v968 = vrot.slane %v538, %v967
      %v969 = vlaneseq
      %v970 = vshrl.u32 %v969, 7
      %v971 = vsub.s32 3, %v970
      %v972 = vrot.slane %v538, %v971
      %v975 = vlaneseq
      %v976 = vshrl.u32 %v975, 7
      %v977 = vsub.s32 1, %v976
      %v978 = vrot.slane %v968, %v977
      %v979 = vlaneseq
      %v980 = vshrl.u32 %v979, 7
      %v981 = vsub.s32 1, %v980
      %v982 = vrot.slane %v972, %v981
      %v983 = vmul.f32 %v935, %v978
      %v984 = vmul.f32 %v935, %v982
      %v985 = vmul.f32 %v939, %v978
      %v986 = vmul.f32 %v939, %v982
      %v987 = vmul.f32 %v943, %v978
      %v988 = vmul.f32 %v943, %v982
      %v989 = vmul.f32 %v947, %v978
      %v990 = vmul.f32 %v947, %v982
      %v991 = vmul.f32 %v951, %v978
      %v992 = vmul.f32 %v951, %v982
      %v993 = vmul.f32 %v955, %v978
      %v994 = vmul.f32 %v955, %v982
      %v995 = vmul.f32 %v959, %v978
      %v996 = vmul.f32 %v959, %v982
      %v997 = vmul.f32 %v963, %v978
      %v998 = vmul.f32 %v963, %v982
      %v999 = vadd.f32 %v917, %v983
      %v1000 = vadd.f32 %v918, %v984
      %v1001 = vadd.f32 %v919, %v985
      %v1002 = vadd.f32 %v920, %v986
      %v1003 = vadd.f32 %v921, %v987
      %v1004 = vadd.f32 %v922, %v988
      %v1005 = vadd.f32 %v923, %v989
      %v1006 = vadd.f32 %v924, %v990
      %v1007 = vadd.f32 %v925, %v991
      %v1008 = vadd.f32 %v926, %v992
      %v1009 = vadd.f32 %v927, %v993
      %v1010 = vadd.f32 %v928, %v994
      %v1011 = vadd.f32 %v929, %v995
      %v1012 = vadd.f32 %v930, %v996
      %v1013 = vadd.f32 %v931, %v997
      %v1014 = vadd.f32 %v932, %v998
      %v1015 = vmax.f32 %v999, 0.0
      %v1016 = vmax.f32 %v1000, 0.0
      %v1017 = vmax.f32 %v1001, 0.0
      %v1018 = vmax.f32 %v1002, 0.0
      %v1019 = vmax.f32 %v1003, 0.0
      %v1020 = vmax.f32 %v1004, 0.0
      %v1021 = vmax.f32 %v1005, 0.0
      %v1022 = vmax.f32 %v1006, 0.0
      %v1023 = vmax.f32 %v1007, 0.0
      %v1024 = vmax.f32 %v1008, 0.0
      %v1025 = vmax.f32 %v1009, 0.0
      %v1026 = vmax.f32 %v1010, 0.0
      %v1027 = vmax.f32 %v1011, 0.0
      %v1028 = vmax.f32 %v1012, 0.0
      %v1029 = vmax.f32 %v1013, 0.0
      %v1030 = vmax.f32 %v1014, 0.0
      %v1031 = vld [vmem:[%s525] sm:$0xff]
      %v1032 = vld [vmem:[%s525 + $0x8] sm:$0xff]
      %v1033 = vld [vmem:[%s525 + $0x10] sm:$0xff]
      %v1034 = vld [vmem:[%s525 + $0x18] sm:$0xff]
      %v1035 = vld [vmem:[%s525 + $0x20] sm:$0xff]
      %v1036 = vld [vmem:[%s525 + $0x28] sm:$0xff]
      %v1037 = vld [vmem:[%s525 + $0x30] sm:$0xff]
      %v1038 = vld [vmem:[%s525 + $0x38] sm:$0xff]
      %1040 = vset.pattern.permute.xlu0 0
      %1041 = vperm.xlu0 %1040, %v1031
      %v1042 = vpop.permute.xlu0 %1041
      %1045 = vset.pattern.permute.xlu0 0
      %1046 = vperm.xlu0 %1045, %v1032
      %v1047 = vpop.permute.xlu0 %1046
      %1050 = vset.pattern.permute.xlu0 0
      %1051 = vperm.xlu0 %1050, %v1033
      %v1052 = vpop.permute.xlu0 %1051
      %1055 = vset.pattern.permute.xlu0 0
      %1056 = vperm.xlu0 %1055, %v1034
      %v1057 = vpop.permute.xlu0 %1056
      %1060 = vset.pattern.permute.xlu0 0
      %1061 = vperm.xlu0 %1060, %v1035
      %v1062 = vpop.permute.xlu0 %1061
      %1065 = vset.pattern.permute.xlu0 0
      %1066 = vperm.xlu0 %1065, %v1036
      %v1067 = vpop.permute.xlu0 %1066
      %1070 = vset.pattern.permute.xlu0 0
      %1071 = vperm.xlu0 %1070, %v1037
      %v1072 = vpop.permute.xlu0 %1071
      %1075 = vset.pattern.permute.xlu0 0
      %1076 = vperm.xlu0 %1075, %v1038
      %v1077 = vpop.permute.xlu0 %1076
      %v1079 = vmul.f32 %v1042, %v1015
      %v1080 = vmul.f32 %v1042, %v1016
      %v1081 = vmul.f32 %v1047, %v1017
      %v1082 = vmul.f32 %v1047, %v1018
      %v1083 = vmul.f32 %v1052, %v1019
      %v1084 = vmul.f32 %v1052, %v1020
      %v1085 = vmul.f32 %v1057, %v1021
      %v1086 = vmul.f32 %v1057, %v1022
      %v1087 = vmul.f32 %v1062, %v1023
      %v1088 = vmul.f32 %v1062, %v1024
      %v1089 = vmul.f32 %v1067, %v1025
      %v1090 = vmul.f32 %v1067, %v1026
      %v1091 = vmul.f32 %v1072, %v1027
      %v1092 = vmul.f32 %v1072, %v1028
      %v1093 = vmul.f32 %v1077, %v1029
      %v1094 = vmul.f32 %v1077, %v1030
      %v1095 = vadd.f32 %v1079, %v1015
      %v1096 = vadd.f32 %v1080, %v1016
      %v1097 = vadd.f32 %v1081, %v1017
      %v1098 = vadd.f32 %v1082, %v1018
      %v1099 = vadd.f32 %v1083, %v1019
      %v1100 = vadd.f32 %v1084, %v1020
      %v1101 = vadd.f32 %v1085, %v1021
      %v1102 = vadd.f32 %v1086, %v1022
      %v1103 = vadd.f32 %v1087, %v1023
      %v1104 = vadd.f32 %v1088, %v1024
      %v1105 = vadd.f32 %v1089, %v1025
      %v1106 = vadd.f32 %v1090, %v1026
      %v1107 = vadd.f32 %v1091, %v1027
      %v1108 = vadd.f32 %v1092, %v1028
      %v1109 = vadd.f32 %v1093, %v1029
      %v1110 = vadd.f32 %v1094, %v1030
      %v1111 = vld [vmem:[%s5] sm:$0xff]
      %v1112 = vld [vmem:[%s5 + $0x8] sm:$0xff]
      %v1113 = vld [vmem:[%s5 + $0x10] sm:$0xff]
      %v1114 = vld [vmem:[%s5 + $0x18] sm:$0xff]
      %v1115 = vld [vmem:[%s5 + $0x20] sm:$0xff]
      %v1116 = vld [vmem:[%s5 + $0x28] sm:$0xff]
      %v1117 = vld [vmem:[%s5 + $0x30] sm:$0xff]
      %v1118 = vld [vmem:[%s5 + $0x38] sm:$0xff]
      %v1119 = vpack.c.bf16 %v1112, %v1111
      %v1120 = vpack.c.bf16 %v1114, %v1113
      %v1121 = vpack.c.bf16 %v1116, %v1115
      %v1122 = vpack.c.bf16 %v1118, %v1117
      %v1123 = vpack.c.bf16 %v1097, %v1095
      %v1124 = vpack.c.bf16 %v1098, %v1096
      %v1125 = vpack.c.bf16 %v1101, %v1099
      %v1126 = vpack.c.bf16 %v1102, %v1100
      %v1127 = vpack.c.bf16 %v1105, %v1103
      %v1128 = vpack.c.bf16 %v1106, %v1104
      %v1129 = vpack.c.bf16 %v1109, %v1107
      %v1130 = vpack.c.bf16 %v1110, %v1108
      %v1131 = vld [vmem:[%s6] sm:$0xff]
      %v1132 = vld [vmem:[%s6 + $0x8] sm:$0xff]
      %v1133 = vld [vmem:[%s6 + $0x10] sm:$0xff]
      %v1134 = vld [vmem:[%s6 + $0x18] sm:$0xff]
      %v1135 = vld [vmem:[%s6 + $0x20] sm:$0xff]
      %v1136 = vld [vmem:[%s6 + $0x28] sm:$0xff]
      %v1137 = vld [vmem:[%s6 + $0x30] sm:$0xff]
      %v1138 = vld [vmem:[%s6 + $0x38] sm:$0xff]
      %1140 = vset.pattern.permute.xlu0 0
      %1141 = vperm.xlu0 %1140, %v1131
      %v1142 = vpop.permute.xlu0 %1141
      %1145 = vset.pattern.permute.xlu0 0
      %1146 = vperm.xlu0 %1145, %v1132
      %v1147 = vpop.permute.xlu0 %1146
      %1150 = vset.pattern.permute.xlu0 0
      %1151 = vperm.xlu0 %1150, %v1133
      %v1152 = vpop.permute.xlu0 %1151
      %1155 = vset.pattern.permute.xlu0 0
      %1156 = vperm.xlu0 %1155, %v1134
      %v1157 = vpop.permute.xlu0 %1156
      %1160 = vset.pattern.permute.xlu0 0
      %1161 = vperm.xlu0 %1160, %v1135
      %v1162 = vpop.permute.xlu0 %1161
      %1165 = vset.pattern.permute.xlu0 0
      %1166 = vperm.xlu0 %1165, %v1136
      %v1167 = vpop.permute.xlu0 %1166
      %1170 = vset.pattern.permute.xlu0 0
      %1171 = vperm.xlu0 %1170, %v1137
      %v1172 = vpop.permute.xlu0 %1171
      %1175 = vset.pattern.permute.xlu0 0
      %1176 = vperm.xlu0 %1175, %v1138
      %v1177 = vpop.permute.xlu0 %1176
      %vm1179 = vcmask 523264
      %v1181 = vsel %vm1179, %v1119, 0
      %v1184 = vsel %vm1179, %v1120, 0
      %v1187 = vsel %vm1179, %v1121, 0
      %v1190 = vsel %vm1179, %v1122, 0
      %1192 = vmatprep.subr.bf16.mxu0 0
      %1193 = vmatpush1.bf16.msra.mxu0 0
      %1194 = vmatprep.subr.bf16.mxu0 0
      %1195 = vmatpush1.bf16.msra.mxu0 0
      %1196 = vmatprep.subr.bf16.mxu0 0
      %1197 = vmatpush1.bf16.msra.mxu0 0
      %1198 = vmatprep.subr.bf16.mxu0 0
      %1199 = vmatpush1.bf16.msra.mxu0 0
      %1200 = vmatprep.subr.bf16.mxu0 %v1130
      %1201 = vmatpush1.bf16.msra.mxu0 %v1129
      %1202 = vmatprep.subr.bf16.mxu0 %v1128
      %1203 = vmatpush1.bf16.msra.mxu0 %v1127
      %1204 = vmatprep.subr.bf16.mxu0 %v1126
      %1205 = vmatpush1.bf16.msra.mxu0 %v1125
      %1206 = vmatprep.subr.bf16.mxu0 %v1124
      %1207 = vmatpush1.bf16.msra.mxu0 %v1123
      %1208 = vmatprep.subr.bf16.mxu0 0
      %1209 = vmatpush2.bf16.msra.mxu0 0
      %1210 = vmatprep.subr.bf16.mxu0 0
      %1211 = vmatpush2.bf16.msra.mxu0 0
      %1212 = vmatprep.subr.bf16.mxu0 0
      %1213 = vmatpush2.bf16.msra.mxu0 0
      %1214 = vmatprep.subr.bf16.mxu0 0
      %1215 = vmatpush2.bf16.msra.mxu0 0
      %1216 = vmatprep.subr.bf16.mxu0 0
      %1217 = vmatpush2.bf16.msra.mxu0 0
      %1218 = vmatprep.subr.bf16.mxu0 0
      %1219 = vmatpush2.bf16.msra.mxu0 0
      %1220 = vmatprep.subr.bf16.mxu0 0
      %1221 = vmatpush2.bf16.msra.mxu0 0
      %1222 = vmatprep.subr.bf16.mxu0 0
      %1223 = vmatpush2.bf16.msra.mxu0 0
      %1224 = vmatprep.mubr.bf16.mxu0 0
      %1225 = vmatmul.mubr.bf16.gmra.mxu0 %v1181
      %v1226 = vpop.f32.mrf.mxu0
      %v1227 = vadd.f32 %v1142, %v1226
      %v1228 = vpop.f32.mrf.mxu0
      %v1229 = vadd.f32 %v1142, %v1228
      %v1230 = vpop.f32.mrf.mxu0
      %v1231 = vadd.f32 %v1147, %v1230
      %v1232 = vpop.f32.mrf.mxu0
      %v1233 = vadd.f32 %v1147, %v1232
      %1234 = vmatprep.mubr.bf16.mxu0 0
      %1235 = vmatmul.mubr.bf16.gmra.mxu0 %v1184
      %v1236 = vpop.f32.mrf.mxu0
      %v1237 = vadd.f32 %v1152, %v1236
      %v1238 = vpop.f32.mrf.mxu0
      %v1239 = vadd.f32 %v1152, %v1238
      %v1240 = vpop.f32.mrf.mxu0
      %v1241 = vadd.f32 %v1157, %v1240
      %v1242 = vpop.f32.mrf.mxu0
      %v1243 = vadd.f32 %v1157, %v1242
      %1244 = vmatprep.mubr.bf16.mxu0 0
      %1245 = vmatmul.mubr.bf16.gmra.mxu0 %v1187
      %v1246 = vpop.f32.mrf.mxu0
      %v1247 = vadd.f32 %v1162, %v1246
      %v1248 = vpop.f32.mrf.mxu0
      %v1249 = vadd.f32 %v1162, %v1248
      %v1250 = vpop.f32.mrf.mxu0
      %v1251 = vadd.f32 %v1167, %v1250
      %v1252 = vpop.f32.mrf.mxu0
      %v1253 = vadd.f32 %v1167, %v1252
      %1254 = vmatprep.mubr.bf16.mxu0 0
      %1255 = vmatmul.mubr.bf16.gmra.mxu0 %v1190
      %v1256 = vpop.f32.mrf.mxu0
      %v1257 = vadd.f32 %v1172, %v1256
      %v1258 = vpop.f32.mrf.mxu0
      %v1259 = vadd.f32 %v1172, %v1258
      %v1260 = vpop.f32.mrf.mxu0
      %v1261 = vadd.f32 %v1177, %v1260
      %v1262 = vpop.f32.mrf.mxu0
      %v1263 = vadd.f32 %v1177, %v1262
      %1264 = vdwg.mxu0
      %v1265 = vmax.f32 %v1227, 0.0
      %v1266 = vmax.f32 %v1229, 0.0
      %v1267 = vmax.f32 %v1231, 0.0
      %v1268 = vmax.f32 %v1233, 0.0
      %v1269 = vmax.f32 %v1237, 0.0
      %v1270 = vmax.f32 %v1239, 0.0
      %v1271 = vmax.f32 %v1241, 0.0
      %v1272 = vmax.f32 %v1243, 0.0
      %v1273 = vmax.f32 %v1247, 0.0
      %v1274 = vmax.f32 %v1249, 0.0
      %v1275 = vmax.f32 %v1251, 0.0
      %v1276 = vmax.f32 %v1253, 0.0
      %v1277 = vmax.f32 %v1257, 0.0
      %v1278 = vmax.f32 %v1259, 0.0
      %v1279 = vmax.f32 %v1261, 0.0
      %v1280 = vmax.f32 %v1263, 0.0
      %v1281 = vld [vmem:[%s7] sm:$0xff]
      %v1282 = vld [vmem:[%s7 + $0x8] sm:$0xff]
      %v1283 = vld [vmem:[%s7 + $0x10] sm:$0xff]
      %v1284 = vld [vmem:[%s7 + $0x18] sm:$0xff]
      %v1285 = vld [vmem:[%s7 + $0x20] sm:$0xff]
      %v1286 = vld [vmem:[%s7 + $0x28] sm:$0xff]
      %v1287 = vld [vmem:[%s7 + $0x30] sm:$0xff]
      %v1288 = vld [vmem:[%s7 + $0x38] sm:$0xff]
      %v1289 = vpack.c.bf16 %v1282, %v1281
      %v1290 = vpack.c.bf16 %v1284, %v1283
      %v1291 = vpack.c.bf16 %v1286, %v1285
      %v1292 = vpack.c.bf16 %v1288, %v1287
      %v1293 = vpack.c.bf16 %v1267, %v1265
      %v1294 = vpack.c.bf16 %v1268, %v1266
      %v1295 = vpack.c.bf16 %v1271, %v1269
      %v1296 = vpack.c.bf16 %v1272, %v1270
      %v1297 = vpack.c.bf16 %v1275, %v1273
      %v1298 = vpack.c.bf16 %v1276, %v1274
      %v1299 = vpack.c.bf16 %v1279, %v1277
      %v1300 = vpack.c.bf16 %v1280, %v1278
      %v1301 = vld [vmem:[%s8] sm:$0xff]
      %v1302 = vld [vmem:[%s8 + $0x8] sm:$0xff]
      %v1303 = vld [vmem:[%s8 + $0x10] sm:$0xff]
      %v1304 = vld [vmem:[%s8 + $0x18] sm:$0xff]
      %v1305 = vld [vmem:[%s8 + $0x20] sm:$0xff]
      %v1306 = vld [vmem:[%s8 + $0x28] sm:$0xff]
      %v1307 = vld [vmem:[%s8 + $0x30] sm:$0xff]
      %v1308 = vld [vmem:[%s8 + $0x38] sm:$0xff]
      %1310 = vset.pattern.permute.xlu0 0
      %1311 = vperm.xlu0 %1310, %v1301
      %v1312 = vpop.permute.xlu0 %1311
      %1315 = vset.pattern.permute.xlu0 0
      %1316 = vperm.xlu0 %1315, %v1302
      %v1317 = vpop.permute.xlu0 %1316
      %1320 = vset.pattern.permute.xlu0 0
      %1321 = vperm.xlu0 %1320, %v1303
      %v1322 = vpop.permute.xlu0 %1321
      %1325 = vset.pattern.permute.xlu0 0
      %1326 = vperm.xlu0 %1325, %v1304
      %v1327 = vpop.permute.xlu0 %1326
      %1330 = vset.pattern.permute.xlu0 0
      %1331 = vperm.xlu0 %1330, %v1305
      %v1332 = vpop.permute.xlu0 %1331
      %1335 = vset.pattern.permute.xlu0 0
      %1336 = vperm.xlu0 %1335, %v1306
      %v1337 = vpop.permute.xlu0 %1336
      %1340 = vset.pattern.permute.xlu0 0
      %1341 = vperm.xlu0 %1340, %v1307
      %v1342 = vpop.permute.xlu0 %1341
      %1345 = vset.pattern.permute.xlu0 0
      %1346 = vperm.xlu0 %1345, %v1308
      %v1347 = vpop.permute.xlu0 %1346
      %v1350 = vsel %vm1179, %v1289, 0
      %v1353 = vsel %vm1179, %v1290, 0
      %v1356 = vsel %vm1179, %v1291, 0
      %v1359 = vsel %vm1179, %v1292, 0
      %1361 = vmatprep.subr.bf16.mxu0 0
      %1362 = vmatpush1.bf16.msra.mxu0 0
      %1363 = vmatprep.subr.bf16.mxu0 0
      %1364 = vmatpush1.bf16.msra.mxu0 0
      %1365 = vmatprep.subr.bf16.mxu0 0
      %1366 = vmatpush1.bf16.msra.mxu0 0
      %1367 = vmatprep.subr.bf16.mxu0 0
      %1368 = vmatpush1.bf16.msra.mxu0 0
      %1369 = vmatprep.subr.bf16.mxu0 %v1300
      %1370 = vmatpush1.bf16.msra.mxu0 %v1299
      %1371 = vmatprep.subr.bf16.mxu0 %v1298
      %1372 = vmatpush1.bf16.msra.mxu0 %v1297
      %1373 = vmatprep.subr.bf16.mxu0 %v1296
      %1374 = vmatpush1.bf16.msra.mxu0 %v1295
      %1375 = vmatprep.subr.bf16.mxu0 %v1294
      %1376 = vmatpush1.bf16.msra.mxu0 %v1293
      %1377 = vmatprep.subr.bf16.mxu0 0
      %1378 = vmatpush2.bf16.msra.mxu0 0
      %1379 = vmatprep.subr.bf16.mxu0 0
      %1380 = vmatpush2.bf16.msra.mxu0 0
      %1381 = vmatprep.subr.bf16.mxu0 0
      %1382 = vmatpush2.bf16.msra.mxu0 0
      %1383 = vmatprep.subr.bf16.mxu0 0
      %1384 = vmatpush2.bf16.msra.mxu0 0
      %1385 = vmatprep.subr.bf16.mxu0 0
      %1386 = vmatpush2.bf16.msra.mxu0 0
      %1387 = vmatprep.subr.bf16.mxu0 0
      %1388 = vmatpush2.bf16.msra.mxu0 0
      %1389 = vmatprep.subr.bf16.mxu0 0
      %1390 = vmatpush2.bf16.msra.mxu0 0
      %1391 = vmatprep.subr.bf16.mxu0 0
      %1392 = vmatpush2.bf16.msra.mxu0 0
      %1393 = vmatprep.mubr.bf16.mxu0 0
      %1394 = vmatmul.mubr.bf16.gmra.mxu0 %v1350
      %v1395 = vpop.f32.mrf.mxu0
      %v1396 = vadd.f32 %v1312, %v1395
      %v1397 = vpop.f32.mrf.mxu0
      %v1398 = vadd.f32 %v1312, %v1397
      %v1399 = vpop.f32.mrf.mxu0
      %v1400 = vadd.f32 %v1317, %v1399
      %v1401 = vpop.f32.mrf.mxu0
      %v1402 = vadd.f32 %v1317, %v1401
      %1403 = vmatprep.mubr.bf16.mxu0 0
      %1404 = vmatmul.mubr.bf16.gmra.mxu0 %v1353
      %v1405 = vpop.f32.mrf.mxu0
      %v1406 = vadd.f32 %v1322, %v1405
      %v1407 = vpop.f32.mrf.mxu0
      %v1408 = vadd.f32 %v1322, %v1407
      %v1409 = vpop.f32.mrf.mxu0
      %v1410 = vadd.f32 %v1327, %v1409
      %v1411 = vpop.f32.mrf.mxu0
      %v1412 = vadd.f32 %v1327, %v1411
      %1413 = vmatprep.mubr.bf16.mxu0 0
      %1414 = vmatmul.mubr.bf16.gmra.mxu0 %v1356
      %v1415 = vpop.f32.mrf.mxu0
      %v1416 = vadd.f32 %v1332, %v1415
      %v1417 = vpop.f32.mrf.mxu0
      %v1418 = vadd.f32 %v1332, %v1417
      %v1419 = vpop.f32.mrf.mxu0
      %v1420 = vadd.f32 %v1337, %v1419
      %v1421 = vpop.f32.mrf.mxu0
      %v1422 = vadd.f32 %v1337, %v1421
      %1423 = vmatprep.mubr.bf16.mxu0 0
      %1424 = vmatmul.mubr.bf16.gmra.mxu0 %v1359
      %v1425 = vpop.f32.mrf.mxu0
      %v1426 = vadd.f32 %v1342, %v1425
      %v1427 = vpop.f32.mrf.mxu0
      %v1428 = vadd.f32 %v1342, %v1427
      %v1429 = vpop.f32.mrf.mxu0
      %v1430 = vadd.f32 %v1347, %v1429
      %v1431 = vpop.f32.mrf.mxu0
      %v1432 = vadd.f32 %v1347, %v1431
      %1433 = vdwg.mxu0
      %v1434 = vmax.f32 %v1396, 0.0
      %v1435 = vmax.f32 %v1398, 0.0
      %v1436 = vmax.f32 %v1400, 0.0
      %v1437 = vmax.f32 %v1402, 0.0
      %v1438 = vmax.f32 %v1406, 0.0
      %v1439 = vmax.f32 %v1408, 0.0
      %v1440 = vmax.f32 %v1410, 0.0
      %v1441 = vmax.f32 %v1412, 0.0
      %v1442 = vmax.f32 %v1416, 0.0
      %v1443 = vmax.f32 %v1418, 0.0
      %v1444 = vmax.f32 %v1420, 0.0
      %v1445 = vmax.f32 %v1422, 0.0
      %v1446 = vmax.f32 %v1426, 0.0
      %v1447 = vmax.f32 %v1428, 0.0
      %v1448 = vmax.f32 %v1430, 0.0
      %v1449 = vmax.f32 %v1432, 0.0
      %v1450 = vld [vmem:[%s9] sm:$0xff]
      %v1451 = vld [vmem:[%s9 + $0x8] sm:$0xff]
      %v1452 = vld [vmem:[%s9 + $0x10] sm:$0xff]
      %v1453 = vld [vmem:[%s9 + $0x18] sm:$0xff]
      %v1454 = vld [vmem:[%s9 + $0x20] sm:$0xff]
      %v1455 = vld [vmem:[%s9 + $0x28] sm:$0xff]
      %v1456 = vld [vmem:[%s9 + $0x30] sm:$0xff]
      %v1457 = vld [vmem:[%s9 + $0x38] sm:$0xff]
      %v1458 = vpack.c.bf16 %v1451, %v1450
      %v1459 = vpack.c.bf16 %v1453, %v1452
      %v1460 = vpack.c.bf16 %v1455, %v1454
      %v1461 = vpack.c.bf16 %v1457, %v1456
      %v1462 = vpack.c.bf16 %v1436, %v1434
      %v1463 = vpack.c.bf16 %v1437, %v1435
      %v1464 = vpack.c.bf16 %v1440, %v1438
      %v1465 = vpack.c.bf16 %v1441, %v1439
      %v1466 = vpack.c.bf16 %v1444, %v1442
      %v1467 = vpack.c.bf16 %v1445, %v1443
      %v1468 = vpack.c.bf16 %v1448, %v1446
      %v1469 = vpack.c.bf16 %v1449, %v1447
      %v1470 = vld [vmem:[%s10] sm:$0xff]
      %v1471 = vld [vmem:[%s10 + $0x8] sm:$0xff]
      %v1472 = vld [vmem:[%s10 + $0x10] sm:$0xff]
      %v1473 = vld [vmem:[%s10 + $0x18] sm:$0xff]
      %v1474 = vld [vmem:[%s10 + $0x20] sm:$0xff]
      %v1475 = vld [vmem:[%s10 + $0x28] sm:$0xff]
      %v1476 = vld [vmem:[%s10 + $0x30] sm:$0xff]
      %v1477 = vld [vmem:[%s10 + $0x38] sm:$0xff]
      %1479 = vset.pattern.permute.xlu0 0
      %1480 = vperm.xlu0 %1479, %v1470
      %v1481 = vpop.permute.xlu0 %1480
      %1484 = vset.pattern.permute.xlu0 0
      %1485 = vperm.xlu0 %1484, %v1471
      %v1486 = vpop.permute.xlu0 %1485
      %1489 = vset.pattern.permute.xlu0 0
      %1490 = vperm.xlu0 %1489, %v1472
      %v1491 = vpop.permute.xlu0 %1490
      %1494 = vset.pattern.permute.xlu0 0
      %1495 = vperm.xlu0 %1494, %v1473
      %v1496 = vpop.permute.xlu0 %1495
      %1499 = vset.pattern.permute.xlu0 0
      %1500 = vperm.xlu0 %1499, %v1474
      %v1501 = vpop.permute.xlu0 %1500
      %1504 = vset.pattern.permute.xlu0 0
      %1505 = vperm.xlu0 %1504, %v1475
      %v1506 = vpop.permute.xlu0 %1505
      %1509 = vset.pattern.permute.xlu0 0
      %1510 = vperm.xlu0 %1509, %v1476
      %v1511 = vpop.permute.xlu0 %1510
      %1514 = vset.pattern.permute.xlu0 0
      %1515 = vperm.xlu0 %1514, %v1477
      %v1516 = vpop.permute.xlu0 %1515
      %v1519 = vsel %vm1179, %v1458, 0
      %v1522 = vsel %vm1179, %v1459, 0
      %v1525 = vsel %vm1179, %v1460, 0
      %v1528 = vsel %vm1179, %v1461, 0
      %1530 = vmatprep.subr.bf16.mxu0 0
      %1531 = vmatpush1.bf16.msra.mxu0 0
      %1532 = vmatprep.subr.bf16.mxu0 0
      %1533 = vmatpush1.bf16.msra.mxu0 0
      %1534 = vmatprep.subr.bf16.mxu0 0
      %1535 = vmatpush1.bf16.msra.mxu0 0
      %1536 = vmatprep.subr.bf16.mxu0 0
      %1537 = vmatpush1.bf16.msra.mxu0 0
      %1538 = vmatprep.subr.bf16.mxu0 %v1469
      %1539 = vmatpush1.bf16.msra.mxu0 %v1468
      %1540 = vmatprep.subr.bf16.mxu0 %v1467
      %1541 = vmatpush1.bf16.msra.mxu0 %v1466
      %1542 = vmatprep.subr.bf16.mxu0 %v1465
      %1543 = vmatpush1.bf16.msra.mxu0 %v1464
      %1544 = vmatprep.subr.bf16.mxu0 %v1463
      %1545 = vmatpush1.bf16.msra.mxu0 %v1462
      %1546 = vmatprep.subr.bf16.mxu0 0
      %1547 = vmatpush2.bf16.msra.mxu0 0
      %1548 = vmatprep.subr.bf16.mxu0 0
      %1549 = vmatpush2.bf16.msra.mxu0 0
      %1550 = vmatprep.subr.bf16.mxu0 0
      %1551 = vmatpush2.bf16.msra.mxu0 0
      %1552 = vmatprep.subr.bf16.mxu0 0
      %1553 = vmatpush2.bf16.msra.mxu0 0
      %1554 = vmatprep.subr.bf16.mxu0 0
      %1555 = vmatpush2.bf16.msra.mxu0 0
      %1556 = vmatprep.subr.bf16.mxu0 0
      %1557 = vmatpush2.bf16.msra.mxu0 0
      %1558 = vmatprep.subr.bf16.mxu0 0
      %1559 = vmatpush2.bf16.msra.mxu0 0
      %1560 = vmatprep.subr.bf16.mxu0 0
      %1561 = vmatpush2.bf16.msra.mxu0 0
      %1562 = vmatprep.mubr.bf16.mxu0 0
      %1563 = vmatmul.mubr.bf16.gmra.mxu0 %v1519
      %v1564 = vpop.f32.mrf.mxu0
      %v1565 = vadd.f32 %v1481, %v1564
      %v1566 = vpop.f32.mrf.mxu0
      %v1567 = vadd.f32 %v1481, %v1566
      %v1568 = vpop.f32.mrf.mxu0
      %v1569 = vadd.f32 %v1486, %v1568
      %v1570 = vpop.f32.mrf.mxu0
      %v1571 = vadd.f32 %v1486, %v1570
      %1572 = vmatprep.mubr.bf16.mxu0 0
      %1573 = vmatmul.mubr.bf16.gmra.mxu0 %v1522
      %v1574 = vpop.f32.mrf.mxu0
      %v1575 = vadd.f32 %v1491, %v1574
      %v1576 = vpop.f32.mrf.mxu0
      %v1577 = vadd.f32 %v1491, %v1576
      %v1578 = vpop.f32.mrf.mxu0
      %v1579 = vadd.f32 %v1496, %v1578
      %v1580 = vpop.f32.mrf.mxu0
      %v1581 = vadd.f32 %v1496, %v1580
      %1582 = vmatprep.mubr.bf16.mxu0 0
      %1583 = vmatmul.mubr.bf16.gmra.mxu0 %v1525
      %v1584 = vpop.f32.mrf.mxu0
      %v1585 = vadd.f32 %v1501, %v1584
      %v1586 = vpop.f32.mrf.mxu0
      %v1587 = vadd.f32 %v1501, %v1586
      %v1588 = vpop.f32.mrf.mxu0
      %v1589 = vadd.f32 %v1506, %v1588
      %v1590 = vpop.f32.mrf.mxu0
      %v1591 = vadd.f32 %v1506, %v1590
      %1592 = vmatprep.mubr.bf16.mxu0 0
      %1593 = vmatmul.mubr.bf16.gmra.mxu0 %v1528
      %v1594 = vpop.f32.mrf.mxu0
      %v1595 = vadd.f32 %v1511, %v1594
      %v1596 = vpop.f32.mrf.mxu0
      %v1597 = vadd.f32 %v1511, %v1596
      %v1598 = vpop.f32.mrf.mxu0
      %v1599 = vadd.f32 %v1516, %v1598
      %v1600 = vpop.f32.mrf.mxu0
      %v1601 = vadd.f32 %v1516, %v1600
      %1602 = vdwg.mxu0
      %v1603 = vmax.f32 %v1565, 0.0
      %v1604 = vmax.f32 %v1567, 0.0
      %v1605 = vmax.f32 %v1569, 0.0
      %v1606 = vmax.f32 %v1571, 0.0
      %v1607 = vmax.f32 %v1575, 0.0
      %v1608 = vmax.f32 %v1577, 0.0
      %v1609 = vmax.f32 %v1579, 0.0
      %v1610 = vmax.f32 %v1581, 0.0
      %v1611 = vmax.f32 %v1585, 0.0
      %v1612 = vmax.f32 %v1587, 0.0
      %v1613 = vmax.f32 %v1589, 0.0
      %v1614 = vmax.f32 %v1591, 0.0
      %v1615 = vmax.f32 %v1595, 0.0
      %v1616 = vmax.f32 %v1597, 0.0
      %v1617 = vmax.f32 %v1599, 0.0
      %v1618 = vmax.f32 %v1601, 0.0
      %v1619 = vld [vmem:[%s11] sm:$0x7]
      %v1620 = vpack.c.bf16 %v1619, %v1619
      %v1621 = vpack.c.bf16 %v1605, %v1603
      %v1622 = vpack.c.bf16 %v1606, %v1604
      %v1623 = vpack.c.bf16 %v1609, %v1607
      %v1624 = vpack.c.bf16 %v1610, %v1608
      %v1625 = vpack.c.bf16 %v1613, %v1611
      %v1626 = vpack.c.bf16 %v1614, %v1612
      %v1627 = vpack.c.bf16 %v1617, %v1615
      %v1628 = vpack.c.bf16 %v1618, %v1616
      %v1629 = vld [vmem:[%s12] sm:$0x7]
      %1631 = vset.pattern.permute.xlu0 0
      %1632 = vperm.xlu0 %1631, %v1629
      %v1633 = vpop.permute.xlu0 %1632
      %v1636 = vsel %vm1179, %v1620, 0
      %1638 = vmatprep.subr.bf16.mxu0 0
      %1639 = vmatpush1.bf16.msra.mxu0 0
      %1640 = vmatprep.subr.bf16.mxu0 0
      %1641 = vmatpush1.bf16.msra.mxu0 0
      %1642 = vmatprep.subr.bf16.mxu0 0
      %1643 = vmatpush1.bf16.msra.mxu0 0
      %1644 = vmatprep.subr.bf16.mxu0 0
      %1645 = vmatpush1.bf16.msra.mxu0 0
      %1646 = vmatprep.subr.bf16.mxu0 %v1628
      %1647 = vmatpush1.bf16.msra.mxu0 %v1627
      %1648 = vmatprep.subr.bf16.mxu0 %v1626
      %1649 = vmatpush1.bf16.msra.mxu0 %v1625
      %1650 = vmatprep.subr.bf16.mxu0 %v1624
      %1651 = vmatpush1.bf16.msra.mxu0 %v1623
      %1652 = vmatprep.subr.bf16.mxu0 %v1622
      %1653 = vmatpush1.bf16.msra.mxu0 %v1621
      %1654 = vmatprep.subr.bf16.mxu0 0
      %1655 = vmatpush2.bf16.msra.mxu0 0
      %1656 = vmatprep.subr.bf16.mxu0 0
      %1657 = vmatpush2.bf16.msra.mxu0 0
      %1658 = vmatprep.subr.bf16.mxu0 0
      %1659 = vmatpush2.bf16.msra.mxu0 0
      %1660 = vmatprep.subr.bf16.mxu0 0
      %1661 = vmatpush2.bf16.msra.mxu0 0
      %1662 = vmatprep.subr.bf16.mxu0 0
      %1663 = vmatpush2.bf16.msra.mxu0 0
      %1664 = vmatprep.subr.bf16.mxu0 0
      %1665 = vmatpush2.bf16.msra.mxu0 0
      %1666 = vmatprep.subr.bf16.mxu0 0
      %1667 = vmatpush2.bf16.msra.mxu0 0
      %1668 = vmatprep.subr.bf16.mxu0 0
      %1669 = vmatpush2.bf16.msra.mxu0 0
      %1670 = vmatprep.mubr.bf16.mxu0 0
      %1671 = vmatmul.mubr.bf16.gmra.mxu0 %v1636
      %v1672 = vpop.f32.mrf.mxu0
      %v1673 = vadd.f32 %v1633, %v1672
      %v1674 = vpop.f32.mrf.mxu0
      %v1675 = vadd.f32 %v1633, %v1674
      %v1676 = vpop.f32.mrf.mxu0
      %v1677 = vpop.f32.mrf.mxu0
      %1678 = vdwg.mxu0
      %v1679 = vcombine.high %v537, %v537
      %v1681 = vadd.f32 %v1673, %v537
      %v1682 = vadd.f32 %v1675, %v1679
      %v1685 = vcombine.low %v1681, %v1682
      %1687 = vst [vmem:[%s534] sm:$0x77] %v1685
      %s1688 = smul.u32 2, %s28
      %p1689 = scmp.lt.s32.totalorder %s29, 1
      %s1690 = scalar_select %p1689, %s29, 1
      %p1691 = scmp.lt.s32.totalorder %s1688, 1
      %s1692 = scalar_select %p1691, %s1688, 1
      %s1693 = smul.addr %s1690, 2
      %s1694 = sadd.s32 %s1692, %s1693
      %s1695 = smul.addr %s1694, 4
      %s1696 = scalar_lea.vmem %s13, %s1695
      // Predicated region
      $region73: #{gcm_forward.9} parent=71 // pred_check
        %p1697 = pneg %p348
      $region74: #{gcm_forward.9} parent=71 // pred_check_branch
        %1699 = sbr.rel (%p1697) target = $region76
      $region75: #{gcm_forward.9} parent=71 // pred_region
        %s1700 = smul.u32 2, %s28
      $region76: #{gcm_forward.9} parent=71 // pred_fallthru
        _
    $region72: #{gcm_forward.9} parent=5 // pred_fallthru
      _
    %p1701 = scmp.le.s32.totalorder 2, %s19
    // Predicated region
    $region77: #{gcm_forward.9} parent=5 // pred_check
      %p1702 = pneg %p1701
    $region78: #{gcm_forward.9} parent=5 // pred_check_branch
      %1704 = sbr.rel (%p1702) target = $region80
    $region79: #{gcm_forward.9} parent=5 // pred_region
      %s1705 = ssub.s32 %s19, 2
      // Predicated region
      $region81: #{gcm_forward.9} parent=79 // pred_check
        %p1706 = pneg %p354
      $region82: #{gcm_forward.9} parent=79 // pred_check_branch
        %1708 = sbr.rel (%p1706) target = $region84
      $region83: #{gcm_forward.9} parent=79 // pred_region
        %s1709 = smul.u32 2, %s30
        %p1710 = scmp.lt.s32.totalorder %s31, 1
        %s1711 = scalar_select %p1710, %s31, 1
        %p1712 = scmp.lt.s32.totalorder %s1709, 1
        %s1713 = scalar_select %p1712, %s1709, 1
        %s1714 = smul.addr %s1711, 2
        %s1715 = sadd.s32 %s1713, %s1714
        %s1716 = smul.addr %s1715, 4
        %s1717 = scalar_lea.vmem %s13, %s1716
      $region84: #{gcm_forward.9} parent=79 // pred_fallthru
        _
    $region80: #{gcm_forward.9} parent=5 // pred_fallthru
      _
  $region6: #{gcm_forward.9} parent=0 // loop_footer
    %s23 = sadd.s32 1, %s19
  $region7: #{gcm_forward.9} parent=0 // loop_footer_branch
    %18 = sbr.rel target = $region3
  $region8: #{gcm_forward.9} parent=0 // loop_exit
    _

</llo_original>
